<compile_context>
chip_gen: v7x
topology: tpu7x:2x2x1
jax: 0.10.0
libtpu: 0.0.40
codegen_flags: <defaults>
</compile_context>

<pallas_src>
import functools

import jax
import jax.numpy as jnp
from jax import lax
from jax.experimental import pallas as pl
from jax.experimental.pallas import tpu as pltpu

C_OUT = 64               # conv1 output channels (fixed by the module)
FC1_IN = C_OUT * C_OUT   # 4096
FC1_OUT = 1000
FC2_OUT = 100


def conv_gram_kernel(x_ref, wc_ref, bc_ref, g_ref, *, scale):
    # x_ref:  (1, C_in, HW)      f32  -- one sample, spatially flattened
    # wc_ref: (C_OUT, C_in)      f32  -- 1x1 conv weight
    # bc_ref: (C_OUT, 1)         f32  -- conv bias
    # g_ref:  (1, C_OUT, C_OUT)  f32  -- normalized Gram matrix for this sample
    x = x_ref[0]                                                     # (C_in, HW)
    f = jnp.dot(wc_ref[...], x,
                preferred_element_type=jnp.float32) + bc_ref[...]    # (C_OUT, HW)
    g = lax.dot_general(f, f, (((1,), (1,)), ((), ())),
                        preferred_element_type=jnp.float32)          # F @ F^T
    g_ref[0] = g * scale


def fc_kernel(g_ref, w1_ref, b1_ref, w2_ref, b2_ref, w3_ref, b3_ref, o_ref, acc_ref):
    # g_ref:  (B, tk)          slice of the flattened Gram features
    # w1_ref: (FC1_OUT, tk)    fc1 weight slice, PyTorch (out, in) layout
    # b1_ref: (1, FC1_OUT)   w2_ref: (FC2_OUT, FC1_OUT)   b2_ref: (1, FC2_OUT)
    # w3_ref: (1, FC2_OUT)   b3_ref: (1, 1)   o_ref: (B, 1)   acc_ref: (B, FC1_OUT)
    k = pl.program_id(0)

    @pl.when(k == 0)
    def _():
        acc_ref[...] = jnp.zeros_like(acc_ref)

    # Partial fc1: contract the tk axis of both operands (weight kept in (out, in)
    # layout -- no HBM-side transpose needed).
    acc_ref[...] += lax.dot_general(
        g_ref[...], w1_ref[...], (((1,), (1,)), ((), ())),
        preferred_element_type=jnp.float32)

    @pl.when(k == pl.num_programs(0) - 1)
    def _():
        h1 = jnp.maximum(acc_ref[...] + b1_ref[...], 0.0)            # (B, 1000)
        h2 = jnp.maximum(
            lax.dot_general(h1, w2_ref[...], (((1,), (1,)), ((), ())),
                            preferred_element_type=jnp.float32)
            + b2_ref[...], 0.0)                                       # (B, 100)
        # fc3 has a single output unit: do it as a VPU mul + lane reduction.
        o_ref[...] = jnp.sum(h2 * w3_ref[...], axis=1, keepdims=True) + b3_ref[...]


@functools.partial(jax.jit, static_argnames=("tk",))
def gram_discriminator_forward(parts, conv_w, conv_b,
                               fc1_w, fc1_b, fc2_w, fc2_b, fc3_w, fc3_b,
                               *, tk=1024):
    """parts: (B, C_in, H, W).  Weights use PyTorch layouts:
       conv_w (64, C_in, 1, 1), conv_b (64,), fcN_w (out, in), fcN_b (out,)."""
    B, C_in, H, W = parts.shape
    HW = H * W

    x = parts.reshape(B, C_in, HW).astype(jnp.float32)
    wc = conv_w.reshape(C_OUT, C_in).astype(jnp.float32)
    bc = conv_b.reshape(C_OUT, 1).astype(jnp.float32)

    # TODO(synk): `gram()` is not defined in the provided source; using the standard
    # Gatys-style normalization G = F @ F^T / (C * H * W) with C = 64 feature channels.
    scale = 1.0 / float(C_OUT * HW)

    gram = pl.pallas_call(
        functools.partial(conv_gram_kernel, scale=scale),
        out_shape=jax.ShapeDtypeStruct((B, C_OUT, C_OUT), jnp.float32),
        grid_spec=pltpu.PrefetchScalarGridSpec(
            num_scalar_prefetch=0,
            grid=(B,),
            in_specs=[
                pl.BlockSpec((1, C_in, HW), lambda b: (b, 0, 0)),
                pl.BlockSpec((C_OUT, C_in), lambda b: (0, 0)),
                pl.BlockSpec((C_OUT, 1), lambda b: (0, 0)),
            ],
            out_specs=pl.BlockSpec((1, C_OUT, C_OUT), lambda b: (b, 0, 0)),
        ),
        compiler_params=pltpu.CompilerParams(
            dimension_semantics=("parallel",)),
    )(x, wc, bc)

    g_flat = gram.reshape(B, FC1_IN)   # contiguous reshape -> free

    # Weights stay in PyTorch (out, in) layout; only biases get a (1, N) view.
    w1 = fc1_w.astype(jnp.float32)                  # (1000, 4096)
    w2 = fc2_w.astype(jnp.float32)                  # (100, 1000)
    w3 = fc3_w.reshape(1, FC2_OUT).astype(jnp.float32)   # (1, 100)
    b1 = fc1_b.reshape(1, -1).astype(jnp.float32)
    b2 = fc2_b.reshape(1, -1).astype(jnp.float32)
    b3 = fc3_b.reshape(1, 1).astype(jnp.float32)

    assert FC1_IN % tk == 0
    kt = FC1_IN // tk

    out = pl.pallas_call(
        fc_kernel,
        out_shape=jax.ShapeDtypeStruct((B, 1), jnp.float32),
        grid_spec=pltpu.PrefetchScalarGridSpec(
            num_scalar_prefetch=0,
            grid=(kt,),
            in_specs=[
                pl.BlockSpec((B, tk), lambda k: (0, k)),             # gram features
                pl.BlockSpec((FC1_OUT, tk), lambda k: (0, k)),       # fc1 weight slice
                pl.BlockSpec((1, FC1_OUT), lambda k: (0, 0)),        # fc1 bias
                pl.BlockSpec((FC2_OUT, FC1_OUT), lambda k: (0, 0)),  # fc2 weight
                pl.BlockSpec((1, FC2_OUT), lambda k: (0, 0)),        # fc2 bias
                pl.BlockSpec((1, FC2_OUT), lambda k: (0, 0)),        # fc3 weight
                pl.BlockSpec((1, 1), lambda k: (0, 0)),              # fc3 bias
            ],
            out_specs=pl.BlockSpec((B, 1), lambda k: (0, 0)),
            scratch_shapes=[pltpu.VMEM((B, FC1_OUT), jnp.float32)],
        ),
        compiler_params=pltpu.CompilerParams(
            dimension_semantics=("arbitrary",)),
    )(g_flat, w1, b1, w2, b2, w3, b3)

    return out


if __name__ == "__main__":
    key = jax.random.PRNGKey(0)
    ks = jax.random.split(key, 9)

    B, C_in, H, W = 2, 4, 16, 16
    parts = jax.random.normal(ks[0], (B, C_in, H, W), dtype=jnp.float32)

    # Synthetic Gram_Discriminator(channels=4) parameters (not a checkpoint).
    conv_w = jax.random.normal(ks[1], (C_OUT, C_in, 1, 1), dtype=jnp.float32) * 0.5
    conv_b = jax.random.normal(ks[2], (C_OUT,), dtype=jnp.float32) * 0.1
    fc1_w = jax.random.normal(ks[3], (FC1_OUT, FC1_IN), dtype=jnp.float32) * 0.05
    fc1_b = jax.random.normal(ks[4], (FC1_OUT,), dtype=jnp.float32) * 0.1
    fc2_w = jax.random.normal(ks[5], (FC2_OUT, FC1_OUT), dtype=jnp.float32) * 0.05
    fc2_b = jax.random.normal(ks[6], (FC2_OUT,), dtype=jnp.float32) * 0.1
    fc3_w = jax.random.normal(ks[7], (1, FC2_OUT), dtype=jnp.float32) * 0.1
    fc3_b = jax.random.normal(ks[8], (1,), dtype=jnp.float32) * 0.1

    out = gram_discriminator_forward(parts, conv_w, conv_b,
                                     fc1_w, fc1_b, fc2_w, fc2_b, fc3_w, fc3_b)
    out = jax.block_until_ready(out)
    assert out.shape == (B, 1), out.shape

    # Pure-JAX reference with the same semantics (highest-precision matmuls).
    hp = lax.Precision.HIGHEST
    xf = parts.astype(jnp.float32)
    feat = jnp.einsum('oc,bchw->bohw', conv_w.reshape(C_OUT, C_in), xf,
                      precision=hp) + conv_b.reshape(1, C_OUT, 1, 1)
    fm = feat.reshape(B, C_OUT, H * W)
    g_ref = jnp.einsum('bip,bjp->bij', fm, fm, precision=hp) / float(C_OUT * H * W)
    gf = g_ref.reshape(B, FC1_IN)
    h1 = jnp.maximum(jnp.dot(gf, fc1_w.T, precision=hp) + fc1_b, 0.0)
    h2 = jnp.maximum(jnp.dot(h1, fc2_w.T, precision=hp) + fc2_b, 0.0)
    ref = jnp.dot(h2, fc3_w.T, precision=hp) + fc3_b

    assert jnp.allclose(out, ref, atol=2e-3, rtol=2e-3)
    print("KERNEL_OK")
</pallas_src>

<mosaic_0001>
module attributes {stable_mosaic.version = 11 : i64} {
  func.func @conv_gram_kernel(%arg0: i32, %arg1: memref<1x4x256xf32, #tpu.memory_space<vmem>>, %arg2: memref<64x4xf32, #tpu.memory_space<vmem>>, %arg3: memref<64x1xf32, #tpu.memory_space<vmem>>, %arg4: memref<1x64x64xf32, #tpu.memory_space<vmem>>) attributes {dimension_semantics = [#tpu.dimension_semantics<parallel>], iteration_bounds = array<i64: 2>, scalar_prefetch = 0 : i64, scratch_operands = 0 : i64, tpu.core_type = #tpu.core_type<tc>, window_params = [{transform_indices = @transform_0, window_bounds = array<i64: 1, 4, 256>}, {pipeline_mode = #tpu.pipeline_mode<synchronous>, transform_indices = @transform_1, window_bounds = array<i64: 64, 4>}, {pipeline_mode = #tpu.pipeline_mode<synchronous>, transform_indices = @transform_2, window_bounds = array<i64: 64, 1>}, {transform_indices = @transform_3, window_bounds = array<i64: 1, 64, 64>}]} {
    %c0 = arith.constant 0 : index
    %c0_0 = arith.constant 0 : index
    %c0_1 = arith.constant 0 : index
    %0 = vector.load %arg1[%c0, %c0_0, %c0_1] : memref<1x4x256xf32, #tpu.memory_space<vmem>>, vector<1x4x256xf32>
    %1 = vector.shape_cast %0 : vector<1x4x256xf32> to vector<4x256xf32>
    %c0_2 = arith.constant 0 : index
    %c0_3 = arith.constant 0 : index
    %2 = vector.load %arg2[%c0_2, %c0_3] : memref<64x4xf32, #tpu.memory_space<vmem>>, vector<64x4xf32>
    %cst = arith.constant dense<0.000000e+00> : vector<64x256xf32>
    %3 = tpu.matmul %2, %1, %cst {dimension_numbers = #tpu.dot_dimension_numbers<[1], [0], [0], [1], [0, 0, 1, 1], [], []>} : vector<64x4xf32>, vector<4x256xf32>, vector<64x256xf32> -> vector<64x256xf32>
    %c0_4 = arith.constant 0 : index
    %c0_5 = arith.constant 0 : index
    %4 = vector.load %arg3[%c0_4, %c0_5] : memref<64x1xf32, #tpu.memory_space<vmem>>, vector<64x1xf32>
    %5 = vector.broadcast %4 : vector<64x1xf32> to vector<64x256xf32>
    %6 = arith.addf %3, %5 : vector<64x256xf32>
    %cst_6 = arith.constant dense<0.000000e+00> : vector<64x64xf32>
    %7 = tpu.matmul %6, %6, %cst_6 {dimension_numbers = #tpu.dot_dimension_numbers<[1], [1], [0], [0], [0, 0, 1, 0], [], []>} : vector<64x256xf32>, vector<64x256xf32>, vector<64x64xf32> -> vector<64x64xf32>
    %cst_7 = arith.constant 6.10351563E-5 : f32
    %8 = vector.broadcast %cst_7 : f32 to vector<64x64xf32>
    %9 = arith.mulf %7, %8 : vector<64x64xf32>
    %c0_8 = arith.constant 0 : index
    %c0_9 = arith.constant 0 : index
    %c0_10 = arith.constant 0 : index
    %10 = vector.load %arg4[%c0_8, %c0_9, %c0_10] : memref<1x64x64xf32, #tpu.memory_space<vmem>>, vector<1x64x64xf32>
    %11 = vector.shape_cast %10 : vector<1x64x64xf32> to vector<64x64xf32>
    %12 = vector.shape_cast %9 : vector<64x64xf32> to vector<1x64x64xf32>
    tpu.vector_store %arg4[%c0_8, %c0_9, %c0_10], %12 {strides = array<i32>} : memref<1x64x64xf32, #tpu.memory_space<vmem>>, vector<1x64x64xf32>,
    return
  }
  func.func @transform_0(%arg0: i32) -> (i32, i32, i32) {
    %c0_i32 = arith.constant 0 : i32
    %c0_i32_0 = arith.constant 0 : i32
    %c0_i32_1 = arith.constant 0 : i32
    return %arg0, %c0_i32, %c0_i32_0 : i32, i32, i32
  }
  func.func @transform_1(%arg0: i32) -> (i32, i32) {
    %c0_i32 = arith.constant 0 : i32
    %c0_i32_0 = arith.constant 0 : i32
    %c0_i32_1 = arith.constant 0 : i32
    return %c0_i32, %c0_i32_0 : i32, i32
  }
  func.func @transform_2(%arg0: i32) -> (i32, i32) {
    %c0_i32 = arith.constant 0 : i32
    %c0_i32_0 = arith.constant 0 : i32
    %c0_i32_1 = arith.constant 0 : i32
    return %c0_i32, %c0_i32_0 : i32, i32
  }
  func.func @transform_3(%arg0: i32) -> (i32, i32, i32) {
    %c0_i32 = arith.constant 0 : i32
    %c0_i32_0 = arith.constant 0 : i32
    %c0_i32_1 = arith.constant 0 : i32
    return %arg0, %c0_i32, %c0_i32_0 : i32, i32, i32
  }
}

module attributes {stable_mosaic.version = 11 : i64} {
  func.func @fc_kernel(%arg0: i32, %arg1: memref<2x1024xf32, #tpu.memory_space<vmem>>, %arg2: memref<1000x1024xf32, #tpu.memory_space<vmem>>, %arg3: memref<1x1000xf32, #tpu.memory_space<vmem>>, %arg4: memref<100x1000xf32, #tpu.memory_space<vmem>>, %arg5: memref<1x100xf32, #tpu.memory_space<vmem>>, %arg6: memref<1x100xf32, #tpu.memory_space<vmem>>, %arg7: memref<1x1xf32, #tpu.memory_space<vmem>>, %arg8: memref<2x1xf32, #tpu.memory_space<vmem>>, %arg9: memref<2x1000xf32, #tpu.memory_space<vmem>>) attributes {dimension_semantics = [#tpu.dimension_semantics<arbitrary>], iteration_bounds = array<i64: 4>, scalar_prefetch = 0 : i64, scratch_operands = 1 : i64, tpu.core_type = #tpu.core_type<tc>, window_params = [{transform_indices = @transform_0, window_bounds = array<i64: 2, 1024>}, {transform_indices = @transform_1, window_bounds = array<i64: 1000, 1024>}, {pipeline_mode = #tpu.pipeline_mode<synchronous>, transform_indices = @transform_2, window_bounds = array<i64: 1, 1000>}, {pipeline_mode = #tpu.pipeline_mode<synchronous>, transform_indices = @transform_3, window_bounds = array<i64: 100, 1000>}, {pipeline_mode = #tpu.pipeline_mode<synchronous>, transform_indices = @transform_4, window_bounds = array<i64: 1, 100>}, {pipeline_mode = #tpu.pipeline_mode<synchronous>, transform_indices = @transform_5, window_bounds = array<i64: 1, 100>}, {pipeline_mode = #tpu.pipeline_mode<synchronous>, transform_indices = @transform_6, window_bounds = array<i64: 1, 1>}, {pipeline_mode = #tpu.pipeline_mode<synchronous>, transform_indices = @transform_7, window_bounds = array<i64: 2, 1>}]} {
    %c0_i32 = arith.constant 0 : i32
    %0 = arith.cmpi eq, %arg0, %c0_i32 : i32
    %1 = arith.extui %0 : i1 to i32
    %c0_i32_0 = arith.constant 0 : i32
    %2 = arith.cmpi ne, %1, %c0_i32_0 : i32
    scf.if %2 {
      %cst_9 = arith.constant 0.000000e+00 : f32
      %12 = vector.broadcast %cst_9 : f32 to vector<2x1000xf32>
      %c0_10 = arith.constant 0 : index
      %c0_11 = arith.constant 0 : index
      %13 = vector.load %arg9[%c0_10, %c0_11] : memref<2x1000xf32, #tpu.memory_space<vmem>>, vector<2x1000xf32>
      tpu.vector_store %arg9[%c0_10, %c0_11], %12 {strides = array<i32>} : memref<2x1000xf32, #tpu.memory_space<vmem>>, vector<2x1000xf32>,
    } else {
    }
    %c0 = arith.constant 0 : index
    %c0_1 = arith.constant 0 : index
    %3 = vector.load %arg9[%c0, %c0_1] : memref<2x1000xf32, #tpu.memory_space<vmem>>, vector<2x1000xf32>
    %c0_2 = arith.constant 0 : index
    %c0_3 = arith.constant 0 : index
    %4 = vector.load %arg1[%c0_2, %c0_3] : memref<2x1024xf32, #tpu.memory_space<vmem>>, vector<2x1024xf32>
    %c0_4 = arith.constant 0 : index
    %c0_5 = arith.constant 0 : index
    %5 = vector.load %arg2[%c0_4, %c0_5] : memref<1000x1024xf32, #tpu.memory_space<vmem>>, vector<1000x1024xf32>
    %cst = arith.constant dense<0.000000e+00> : vector<2x1000xf32>
    %6 = tpu.matmul %4, %5, %cst {dimension_numbers = #tpu.dot_dimension_numbers<[1], [1], [0], [0], [0, 0, 1, 0], [], []>} : vector<2x1024xf32>, vector<1000x1024xf32>, vector<2x1000xf32> -> vector<2x1000xf32>
    %7 = arith.addf %3, %6 : vector<2x1000xf32>
    %c0_6 = arith.constant 0 : index
    %c0_7 = arith.constant 0 : index
    %8 = vector.load %arg9[%c0_6, %c0_7] : memref<2x1000xf32, #tpu.memory_space<vmem>>, vector<2x1000xf32>
    tpu.vector_store %arg9[%c0_6, %c0_7], %7 {strides = array<i32>} : memref<2x1000xf32, #tpu.memory_space<vmem>>, vector<2x1000xf32>,
    %c3_i32 = arith.constant 3 : i32
    %9 = arith.cmpi eq, %arg0, %c3_i32 : i32
    %10 = arith.extui %9 : i1 to i32
    %c0_i32_8 = arith.constant 0 : i32
    %11 = arith.cmpi ne, %10, %c0_i32_8 : i32
    scf.if %11 {
      %c0_9 = arith.constant 0 : index
      %c0_10 = arith.constant 0 : index
      %12 = vector.load %arg9[%c0_9, %c0_10] : memref<2x1000xf32, #tpu.memory_space<vmem>>, vector<2x1000xf32>
      %c0_11 = arith.constant 0 : index
      %c0_12 = arith.constant 0 : index
      %13 = vector.load %arg3[%c0_11, %c0_12] : memref<1x1000xf32, #tpu.memory_space<vmem>>, vector<1x1000xf32>
      %14 = vector.broadcast %13 : vector<1x1000xf32> to vector<2x1000xf32>
      %15 = arith.addf %12, %14 : vector<2x1000xf32>
      %cst_13 = arith.constant 0.000000e+00 : f32
      %16 = vector.broadcast %cst_13 : f32 to vector<2x1000xf32>
      %17 = arith.maximumf %15, %16 : vector<2x1000xf32>
      %c0_14 = arith.constant 0 : index
      %c0_15 = arith.constant 0 : index
      %18 = vector.load %arg4[%c0_14, %c0_15] : memref<100x1000xf32, #tpu.memory_space<vmem>>, vector<100x1000xf32>
      %cst_16 = arith.constant dense<0.000000e+00> : vector<2x100xf32>
      %19 = tpu.matmul %17, %18, %cst_16 {dimension_numbers = #tpu.dot_dimension_numbers<[1], [1], [0], [0], [0, 0, 1, 0], [], []>} : vector<2x1000xf32>, vector<100x1000xf32>, vector<2x100xf32> -> vector<2x100xf32>
      %c0_17 = arith.constant 0 : index
      %c0_18 = arith.constant 0 : index
      %20 = vector.load %arg5[%c0_17, %c0_18] : memref<1x100xf32, #tpu.memory_space<vmem>>, vector<1x100xf32>
      %21 = vector.broadcast %20 : vector<1x100xf32> to vector<2x100xf32>
      %22 = arith.addf %19, %21 : vector<2x100xf32>
      %cst_19 = arith.constant 0.000000e+00 : f32
      %23 = vector.broadcast %cst_19 : f32 to vector<2x100xf32>
      %24 = arith.maximumf %22, %23 : vector<2x100xf32>
      %c0_20 = arith.constant 0 : index
      %c0_21 = arith.constant 0 : index
      %25 = vector.load %arg6[%c0_20, %c0_21] : memref<1x100xf32, #tpu.memory_space<vmem>>, vector<1x100xf32>
      %26 = vector.broadcast %25 : vector<1x100xf32> to vector<2x100xf32>
      %27 = arith.mulf %24, %26 : vector<2x100xf32>
      %cst_22 = arith.constant dense<0.000000e+00> : vector<2xf32>
      %28 = vector.multi_reduction <add>, %27, %cst_22 [1] : vector<2x100xf32> to vector<2xf32>
      %29 = vector.shape_cast %28 : vector<2xf32> to vector<2x1xf32>
      %c0_23 = arith.constant 0 : index
      %c0_24 = arith.constant 0 : index
      %30 = vector.load %arg7[%c0_23, %c0_24] : memref<1x1xf32, #tpu.memory_space<vmem>>, vector<1x1xf32>
      %31 = vector.broadcast %30 : vector<1x1xf32> to vector<2x1xf32>
      %32 = arith.addf %29, %31 : vector<2x1xf32>
      %c0_25 = arith.constant 0 : index
      %c0_26 = arith.constant 0 : index
      %33 = vector.load %arg8[%c0_25, %c0_26] : memref<2x1xf32, #tpu.memory_space<vmem>>, vector<2x1xf32>
      tpu.vector_store %arg8[%c0_25, %c0_26], %32 {strides = array<i32>} : memref<2x1xf32, #tpu.memory_space<vmem>>, vector<2x1xf32>,
    } else {
    }
    return
  }
  func.func @transform_0(%arg0: i32) -> (i32, i32) {
    %c0_i32 = arith.constant 0 : i32
    %c0_i32_0 = arith.constant 0 : i32
    return %c0_i32, %arg0 : i32, i32
  }
  func.func @transform_1(%arg0: i32) -> (i32, i32) {
    %c0_i32 = arith.constant 0 : i32
    %c0_i32_0 = arith.constant 0 : i32
    return %c0_i32, %arg0 : i32, i32
  }
  func.func @transform_2(%arg0: i32) -> (i32, i32) {
    %c0_i32 = arith.constant 0 : i32
    %c0_i32_0 = arith.constant 0 : i32
    %c0_i32_1 = arith.constant 0 : i32
    return %c0_i32, %c0_i32_0 : i32, i32
  }
  func.func @transform_3(%arg0: i32) -> (i32, i32) {
    %c0_i32 = arith.constant 0 : i32
    %c0_i32_0 = arith.constant 0 : i32
    %c0_i32_1 = arith.constant 0 : i32
    return %c0_i32, %c0_i32_0 : i32, i32
  }
  func.func @transform_4(%arg0: i32) -> (i32, i32) {
    %c0_i32 = arith.constant 0 : i32
    %c0_i32_0 = arith.constant 0 : i32
    %c0_i32_1 = arith.constant 0 : i32
    return %c0_i32, %c0_i32_0 : i32, i32
  }
  func.func @transform_5(%arg0: i32) -> (i32, i32) {
    %c0_i32 = arith.constant 0 : i32
    %c0_i32_0 = arith.constant 0 : i32
    %c0_i32_1 = arith.constant 0 : i32
    return %c0_i32, %c0_i32_0 : i32, i32
  }
  func.func @transform_6(%arg0: i32) -> (i32, i32) {
    %c0_i32 = arith.constant 0 : i32
    %c0_i32_0 = arith.constant 0 : i32
    %c0_i32_1 = arith.constant 0 : i32
    return %c0_i32, %c0_i32_0 : i32, i32
  }
  func.func @transform_7(%arg0: i32) -> (i32, i32) {
    %c0_i32 = arith.constant 0 : i32
    %c0_i32_0 = arith.constant 0 : i32
    %c0_i32_1 = arith.constant 0 : i32
    return %c0_i32, %c0_i32_0 : i32, i32
  }
}

</mosaic_0001>

<llo_original>
// kernel: gram_discriminator_forward.2
$region0: #{gram_discriminator_forward.2}
  #allocation0 [shape = 'u32[]', space=smem, size = 0x4, offset = 0x4, fixed_abs, tag = 'smem constant byte address 0x4 - core index']
  #allocation1 [shape = 'u32[144,128]{1,0:T(1,128)}', space=vmem, size = 0x12000, scoped, tag = 'internal scratch']
  %s0 = inlined_call_operand.vmem [shape: f32[2,4,256], index: 0, kind: input, shape index: {}]
  %s1 = inlined_call_operand.vmem [shape: f32[64,4], index: 1, kind: input, shape index: {}]
  %s2 = inlined_call_operand.vmem [shape: f32[64,1], index: 2, kind: input, shape index: {}]
  %s3 = inlined_call_operand.vmem [shape: f32[2,64,64], index: 3, kind: output, shape index: {}]
  %s4 = sld [smem:[#allocation0]]
  $region45: #{gram_discriminator_forward.2} parent=0
    _
  %s6 = ssub.s32 1, %s4
  %s7 = scalar_select 0, %s6, %s4
  loop: start=0, step=1, limit=4
  $region2: #{gram_discriminator_forward.2} parent=0 // loop_pre_header
    _
  $region3: #{gram_discriminator_forward.2} parent=0 // loop_header
    %s9 = sphi 0, %s13
    %p10 = scmp.ge.s32.totalorder %s9, 4
    %s19 = sphi 0, %s21
    %s22 = sphi 0, %s19
    %s23 = sphi 0, %s22
    %s39 = sphi 0, %s23
    %s43 = sphi 0, %s43
    %s45 = sphi 0, %s43
    %s46 = sphi 0, %s45
    %s60 = sphi 0, %s46
    %s64 = sphi 0, %s64
    %s66 = sphi 0, %s64
    %s67 = sphi 0, %s66
    %s81 = sphi 0, %s67
    %s87 = sphi 0, %s89
    %s90 = sphi 0, %s87
    %s91 = sphi 0, %s90
    %s107 = sphi 0, %s91
  $region4: #{gram_discriminator_forward.2} parent=0 // loop_header_branch
    %12 = sbr.rel (%p10) target = $region8
  $region5: #{gram_discriminator_forward.2} parent=0 // loop_body
    %s14 = ssub.s32 %s9, 1
    %s15 = ssub.s32 %s9, 2
    %s16 = sadd.s32 %s9, 1
    %s17 = ssub.s32 %s9, %s16
    %p18 = scmp.eq.s32.totalorder %s17, 0
    %s20 = sadd.s32 %s19, 1
    %s21 = scalar_select %p18, %s19, %s20
    %p24 = pneg %p18
    %p25 = scmp.eq.s32.totalorder %s9, 1
    %p26 = por %p24, %p25
    %p27 = scmp.ne.s32.totalorder %s19, %s22
    %p28 = scmp.eq.s32.totalorder %s9, 0
    %p29 = por %p27, %p28
    %p30 = scmp.ne.s32.totalorder %s19, %s22
    %p31 = scmp.eq.s32.totalorder %s14, 1
    %p32 = por %p30, %p31
    %p33 = scmp.ne.s32.totalorder %s22, %s23
    %p34 = scmp.eq.s32.totalorder %s14, 0
    %p35 = por %p33, %p34
    %p36 = scmp.ne.s32.totalorder %s22, %s23
    %p37 = scmp.eq.s32.totalorder %s15, 1
    %p38 = por %p36, %p37
    %p40 = scmp.ne.s32.totalorder %s23, %s39
    %p41 = scmp.eq.s32.totalorder %s15, 0
    %p42 = por %p40, %p41
    %s44 = sadd.s32 %s43, 1
    %p47 = scmp.eq.s32.totalorder %s9, 1
    %p48 = scmp.ne.s32.totalorder %s43, %s45
    %p49 = scmp.eq.s32.totalorder %s9, 0
    %p50 = por %p48, %p49
    %p51 = scmp.ne.s32.totalorder %s43, %s45
    %p52 = scmp.eq.s32.totalorder %s14, 1
    %p53 = por %p51, %p52
    %p54 = scmp.ne.s32.totalorder %s45, %s46
    %p55 = scmp.eq.s32.totalorder %s14, 0
    %p56 = por %p54, %p55
    %p57 = scmp.ne.s32.totalorder %s45, %s46
    %p58 = scmp.eq.s32.totalorder %s15, 1
    %p59 = por %p57, %p58
    %p61 = scmp.ne.s32.totalorder %s46, %s60
    %p62 = scmp.eq.s32.totalorder %s15, 0
    %p63 = por %p61, %p62
    %s65 = sadd.s32 %s64, 1
    %p68 = scmp.eq.s32.totalorder %s9, 1
    %p69 = scmp.ne.s32.totalorder %s64, %s66
    %p70 = scmp.eq.s32.totalorder %s9, 0
    %p71 = por %p69, %p70
    %p72 = scmp.ne.s32.totalorder %s64, %s66
    %p73 = scmp.eq.s32.totalorder %s14, 1
    %p74 = por %p72, %p73
    %p75 = scmp.ne.s32.totalorder %s66, %s67
    %p76 = scmp.eq.s32.totalorder %s14, 0
    %p77 = por %p75, %p76
    %p78 = scmp.ne.s32.totalorder %s66, %s67
    %p79 = scmp.eq.s32.totalorder %s15, 1
    %p80 = por %p78, %p79
    %p82 = scmp.ne.s32.totalorder %s67, %s81
    %p83 = scmp.eq.s32.totalorder %s15, 0
    %p84 = por %p82, %p83
    %s85 = ssub.s32 %s9, %s16
    %p86 = scmp.eq.s32.totalorder %s85, 0
    %s88 = sadd.s32 %s87, 1
    %s89 = scalar_select %p86, %s87, %s88
    %p92 = pneg %p86
    %p93 = scmp.eq.s32.totalorder %s9, 1
    %p94 = por %p92, %p93
    %p95 = scmp.ne.s32.totalorder %s87, %s90
    %p96 = scmp.eq.s32.totalorder %s9, 0
    %p97 = por %p95, %p96
    %p98 = scmp.ne.s32.totalorder %s87, %s90
    %p99 = scmp.eq.s32.totalorder %s14, 1
    %p100 = por %p98, %p99
    %p101 = scmp.ne.s32.totalorder %s90, %s91
    %p102 = scmp.eq.s32.totalorder %s14, 0
    %p103 = por %p101, %p102
    %p104 = scmp.ne.s32.totalorder %s90, %s91
    %p105 = scmp.eq.s32.totalorder %s15, 1
    %p106 = por %p104, %p105
    %p108 = scmp.ne.s32.totalorder %s91, %s107
    %p109 = scmp.eq.s32.totalorder %s15, 0
    %p110 = por %p108, %p109
    %p111 = scmp.le.s32.totalorder 1, %s9
    %p112 = scmp.lt.s32.totalorder %s9, 3
    %p113 = pnand %p111, %p112
    %p114 = pneg %p113
    // Predicated region
    $region9: #{gram_discriminator_forward.2} parent=5 // pred_check
      _
    $region10: #{gram_discriminator_forward.2} parent=5 // pred_check_branch
      %116 = sbr.rel (%p113) target = $region12
    $region11: #{gram_discriminator_forward.2} parent=5 // pred_region
      %s117 = ssub.s32 %s9, 1
      // Predicated region
      $region13: #{gram_discriminator_forward.2} parent=11 // pred_check
        %p118 = pneg %p56
      $region14: #{gram_discriminator_forward.2} parent=11 // pred_check_branch
        %120 = sbr.rel (%p118) target = $region16
      $region15: #{gram_discriminator_forward.2} parent=11 // pred_region
        _
      $region16: #{gram_discriminator_forward.2} parent=11 // pred_fallthru
        _
      // Predicated region
      $region17: #{gram_discriminator_forward.2} parent=11 // pred_check
        %p121 = pneg %p77
      $region18: #{gram_discriminator_forward.2} parent=11 // pred_check_branch
        %123 = sbr.rel (%p121) target = $region20
      $region19: #{gram_discriminator_forward.2} parent=11 // pred_region
        _
      $region20: #{gram_discriminator_forward.2} parent=11 // pred_fallthru
        _
    $region12: #{gram_discriminator_forward.2} parent=5 // pred_fallthru
      _
    %p124 = scmp.lt.s32.totalorder %s9, 2
    // Predicated region
    $region21: #{gram_discriminator_forward.2} parent=5 // pred_check
      %p125 = pneg %p124
    $region22: #{gram_discriminator_forward.2} parent=5 // pred_check_branch
      %127 = sbr.rel (%p125) target = $region24
    $region23: #{gram_discriminator_forward.2} parent=5 // pred_region
      // Predicated region
      $region25: #{gram_discriminator_forward.2} parent=23 // pred_check
        %p128 = pneg %p29
      $region26: #{gram_discriminator_forward.2} parent=23 // pred_check_branch
        %130 = sbr.rel (%p128) target = $region28
      $region27: #{gram_discriminator_forward.2} parent=23 // pred_region
        %p131 = scmp.lt.s32.totalorder %s9, 1
        %s132 = scalar_select %p131, %s9, 1
        %s133 = smul.addr %s132, 2
        %s134 = smul.addr %s133, 4
        %s135 = scalar_lea.vmem %s0, %s134
      $region28: #{gram_discriminator_forward.2} parent=23 // pred_fallthru
        _
    $region24: #{gram_discriminator_forward.2} parent=5 // pred_fallthru
      _
    %p136 = scmp.le.s32.totalorder 1, %s9
    %p137 = scmp.lt.s32.totalorder %s9, 3
    %p138 = pnand %p136, %p137
    %p139 = pneg %p138
    // Predicated region
    $region29: #{gram_discriminator_forward.2} parent=5 // pred_check
      _
    $region30: #{gram_discriminator_forward.2} parent=5 // pred_check_branch
      %141 = sbr.rel (%p138) target = $region32
    $region31: #{gram_discriminator_forward.2} parent=5 // pred_region
      %s142 = ssub.s32 %s9, 1
      %p143 = scmp.lt.s32.totalorder %s14, 1
      %s144 = scalar_select %p143, %s14, 1
      %s145 = smul.addr %s144, 2
      %s146 = smul.addr %s145, 4
      %s147 = scalar_lea.vmem %s0, %s146
      %p148 = pneg %p35
      %p149 = pneg %p32
      %p150 = pneg %p56
      %p151 = pneg %p53
      %p152 = pneg %p77
      %p153 = pneg %p74
      %p154 = pneg %p103
      %p155 = pneg %p100
      %p156 = scmp.lt.s32.totalorder %s14, 1
      %s157 = scalar_select %p156, %s14, 1
      %s158 = smul.addr %s157, 8
      %s159 = smul.addr %s158, 8
      %s160 = scalar_lea.vmem %s3, %s159
      %p161 = scmp.lt.s32.totalorder %s14, 1
      %s162 = scalar_select %p161, %s14, 1
      %s163 = smul.addr %s162, 2
      %s164 = smul.addr %s163, 4
      %s165 = scalar_lea.vmem %s0, %s164
      %p166 = scmp.lt.s32.totalorder %s14, 1
      %s167 = scalar_select %p166, %s14, 1
      %s168 = smul.addr %s167, 8
      %s169 = smul.addr %s168, 8
      %s170 = scalar_lea.vmem %s3, %s169
      %v171 = vld [vmem:[%s165] sm:$0xff]
      %v172 = vld [vmem:[%s1] sm:$0xff]
      %v173 = vld [vmem:[%s1 + $0x8] sm:$0xff]
      %v174 = vld [vmem:[%s1 + $0x10] sm:$0xff]
      %v175 = vld [vmem:[%s1 + $0x18] sm:$0xff]
      %v176 = vld [vmem:[%s1 + $0x20] sm:$0xff]
      %v177 = vld [vmem:[%s1 + $0x28] sm:$0xff]
      %v178 = vld [vmem:[%s1 + $0x30] sm:$0xff]
      %v179 = vld [vmem:[%s1 + $0x38] sm:$0xff]
      %v180 = vld [vmem:[%s2] sm:$0xff]
      %v181 = vld [vmem:[%s2 + $0x8] sm:$0xff]
      %v182 = vld [vmem:[%s2 + $0x10] sm:$0xff]
      %v183 = vld [vmem:[%s2 + $0x18] sm:$0xff]
      %v184 = vld [vmem:[%s2 + $0x20] sm:$0xff]
      %v185 = vld [vmem:[%s2 + $0x28] sm:$0xff]
      %v186 = vld [vmem:[%s2 + $0x30] sm:$0xff]
      %v187 = vld [vmem:[%s2 + $0x38] sm:$0xff]
      %189 = vset.pattern.permute.xlu0 0
      %190 = vperm.xlu0 %189, %v180
      %v191 = vpop.permute.xlu0 %190
      %194 = vset.pattern.permute.xlu0 0
      %195 = vperm.xlu0 %194, %v181
      %v196 = vpop.permute.xlu0 %195
      %199 = vset.pattern.permute.xlu0 0
      %200 = vperm.xlu0 %199, %v182
      %v201 = vpop.permute.xlu0 %200
      %204 = vset.pattern.permute.xlu0 0
      %205 = vperm.xlu0 %204, %v183
      %v206 = vpop.permute.xlu0 %205
      %209 = vset.pattern.permute.xlu0 0
      %210 = vperm.xlu0 %209, %v184
      %v211 = vpop.permute.xlu0 %210
      %214 = vset.pattern.permute.xlu0 0
      %215 = vperm.xlu0 %214, %v185
      %v216 = vpop.permute.xlu0 %215
      %219 = vset.pattern.permute.xlu0 0
      %220 = vperm.xlu0 %219, %v186
      %v221 = vpop.permute.xlu0 %220
      %224 = vset.pattern.permute.xlu0 0
      %225 = vperm.xlu0 %224, %v187
      %v226 = vpop.permute.xlu0 %225
      %v229 = vcombine.high %v171, %v171
      %vm230 = vcmask 31744
      %v232 = vsel %vm230, %v172, 0
      %v235 = vsel %vm230, %v173, 0
      %v238 = vsel %vm230, %v174, 0
      %v241 = vsel %vm230, %v175, 0
      %v244 = vsel %vm230, %v176, 0
      %v247 = vsel %vm230, %v177, 0
      %v250 = vsel %vm230, %v178, 0
      %v253 = vsel %vm230, %v179, 0
      %vm255 = vcmask 1043456
      %v256 = vsel %vm255, %v171, 0
      %v258 = vsel %vm255, %v229, 0
      %260 = vmatprep.subr.mxu0 %v258
      %261 = vmatpush1.msra.mxu0 %v256
      %262 = vmatprep.subr.mxu0 0.0
      %263 = vmatpush1.msra.mxu0 0.0
      %264 = vmatprep.subr.mxu0 0.0
      %265 = vmatpush1.msra.mxu0 0.0
      %266 = vmatprep.subr.mxu0 0.0
      %267 = vmatpush1.msra.mxu0 0.0
      %268 = vmatprep.subr.mxu0 0.0
      %269 = vmatpush1.msra.mxu0 0.0
      %270 = vmatprep.subr.mxu0 0.0
      %271 = vmatpush1.msra.mxu0 0.0
      %272 = vmatprep.subr.mxu0 0.0
      %273 = vmatpush1.msra.mxu0 0.0
      %274 = vmatprep.subr.mxu0 0.0
      %275 = vmatpush1.msra.mxu0 0.0
      %276 = vmatprep.subr.mxu0 0.0
      %277 = vmatpush1.msra.mxu0 0.0
      %278 = vmatprep.subr.mxu0 0.0
      %279 = vmatpush1.msra.mxu0 0.0
      %280 = vmatprep.subr.mxu0 0.0
      %281 = vmatpush1.msra.mxu0 0.0
      %282 = vmatprep.subr.mxu0 0.0
      %283 = vmatpush1.msra.mxu0 0.0
      %284 = vmatprep.subr.mxu0 0.0
      %285 = vmatpush1.msra.mxu0 0.0
      %286 = vmatprep.subr.mxu0 0.0
      %287 = vmatpush1.msra.mxu0 0.0
      %288 = vmatprep.subr.mxu0 0.0
      %289 = vmatpush1.msra.mxu0 0.0
      %290 = vmatprep.subr.mxu0 0.0
      %291 = vmatpush1.msra.mxu0 0.0
      %292 = vmatprep.subr.mxu0 0.0
      %293 = vmatpush1.msra.mxu0 0.0
      %294 = vmatprep.subr.mxu0 0.0
      %295 = vmatpush1.msra.mxu0 0.0
      %296 = vmatprep.subr.mxu0 0.0
      %297 = vmatpush1.msra.mxu0 0.0
      %298 = vmatprep.subr.mxu0 0.0
      %299 = vmatpush1.msra.mxu0 0.0
      %300 = vmatprep.subr.mxu0 0.0
      %301 = vmatpush1.msra.mxu0 0.0
      %302 = vmatprep.subr.mxu0 0.0
      %303 = vmatpush1.msra.mxu0 0.0
      %304 = vmatprep.subr.mxu0 0.0
      %305 = vmatpush1.msra.mxu0 0.0
      %306 = vmatprep.subr.mxu0 0.0
      %307 = vmatpush1.msra.mxu0 0.0
      %308 = vmatprep.subr.mxu0 0.0
      %309 = vmatpush1.msra.mxu0 0.0
      %310 = vmatprep.subr.mxu0 0.0
      %311 = vmatpush1.msra.mxu0 0.0
      %312 = vmatprep.subr.mxu0 0.0
      %313 = vmatpush1.msra.mxu0 0.0
      %314 = vmatprep.subr.mxu0 0.0
      %315 = vmatpush1.msra.mxu0 0.0
      %316 = vmatprep.subr.mxu0 0.0
      %317 = vmatpush1.msra.mxu0 0.0
      %318 = vmatprep.subr.mxu0 0.0
      %319 = vmatpush1.msra.mxu0 0.0
      %320 = vmatprep.subr.mxu0 0.0
      %321 = vmatpush1.msra.mxu0 0.0
      %322 = vmatprep.subr.mxu0 0.0
      %323 = vmatpush1.msra.mxu0 0.0
      %324 = vmatprep.mubr.f32.mxu0 0.0
      %325 = vmatmul.mubr.f32.gmra.mrb[0].mxu0 %v232
      %v326 = vpop.f32.mrb[0].mxu0
      %v327 = vadd.f32 %v191, %v326
      %v328 = vpop.f32.mrb[0].mxu0
      %v329 = vadd.f32 %v191, %v328
      %330 = vmatprep.mubr.f32.mxu0 0.0
      %331 = vmatmul.mubr.f32.gmra.mrb[0].mxu0 %v235
      %v332 = vpop.f32.mrb[0].mxu0
      %v333 = vadd.f32 %v196, %v332
      %v334 = vpop.f32.mrb[0].mxu0
      %v335 = vadd.f32 %v196, %v334
      %336 = vmatprep.mubr.f32.mxu0 0.0
      %337 = vmatmul.mubr.f32.gmra.mrb[0].mxu0 %v238
      %v338 = vpop.f32.mrb[0].mxu0
      %v339 = vadd.f32 %v201, %v338
      %v340 = vpop.f32.mrb[0].mxu0
      %v341 = vadd.f32 %v201, %v340
      %342 = vmatprep.mubr.f32.mxu0 0.0
      %343 = vmatmul.mubr.f32.gmra.mrb[0].mxu0 %v241
      %v344 = vpop.f32.mrb[0].mxu0
      %v345 = vadd.f32 %v206, %v344
      %v346 = vpop.f32.mrb[0].mxu0
      %v347 = vadd.f32 %v206, %v346
      %348 = vmatprep.mubr.f32.mxu0 0.0
      %349 = vmatmul.mubr.f32.gmra.mrb[0].mxu0 %v244
      %v350 = vpop.f32.mrb[0].mxu0
      %v351 = vadd.f32 %v211, %v350
      %v352 = vpop.f32.mrb[0].mxu0
      %v353 = vadd.f32 %v211, %v352
      %354 = vmatprep.mubr.f32.mxu0 0.0
      %355 = vmatmul.mubr.f32.gmra.mrb[0].mxu0 %v247
      %v356 = vpop.f32.mrb[0].mxu0
      %v357 = vadd.f32 %v216, %v356
      %v358 = vpop.f32.mrb[0].mxu0
      %v359 = vadd.f32 %v216, %v358
      %360 = vmatprep.mubr.f32.mxu0 0.0
      %361 = vmatmul.mubr.f32.gmra.mrb[0].mxu0 %v250
      %v362 = vpop.f32.mrb[0].mxu0
      %v363 = vadd.f32 %v221, %v362
      %v364 = vpop.f32.mrb[0].mxu0
      %v365 = vadd.f32 %v221, %v364
      %366 = vmatprep.mubr.f32.mxu0 0.0
      %367 = vmatmul.mubr.f32.gmra.mrb[0].mxu0 %v253
      %v368 = vpop.f32.mrb[0].mxu0
      %v369 = vadd.f32 %v226, %v368
      %v370 = vpop.f32.mrb[0].mxu0
      %v371 = vadd.f32 %v226, %v370
      %372 = vdwg.mxu0
      %373 = vmatprep.subr.mxu0 %v329
      %374 = vmatpush1.xpose.msra.mxu0 %v327
      %375 = vmatprep.subr.mxu0 %v335
      %376 = vmatpush1.xpose.msra.mxu0 %v333
      %377 = vmatprep.subr.mxu0 %v341
      %378 = vmatpush1.xpose.msra.mxu0 %v339
      %379 = vmatprep.subr.mxu0 %v347
      %380 = vmatpush1.xpose.msra.mxu0 %v345
      %381 = vmatprep.subr.mxu0 %v353
      %382 = vmatpush1.xpose.msra.mxu0 %v351
      %383 = vmatprep.subr.mxu0 %v359
      %384 = vmatpush1.xpose.msra.mxu0 %v357
      %385 = vmatprep.subr.mxu0 %v365
      %386 = vmatpush1.xpose.msra.mxu0 %v363
      %387 = vmatprep.subr.mxu0 %v371
      %388 = vmatpush1.xpose.msra.mxu0 %v369
      %389 = vmatprep.subr.mxu0 0.0
      %390 = vmatpush1.xpose.msra.mxu0 0.0
      %391 = vmatprep.subr.mxu0 0.0
      %392 = vmatpush1.xpose.msra.mxu0 0.0
      %393 = vmatprep.subr.mxu0 0.0
      %394 = vmatpush1.xpose.msra.mxu0 0.0
      %395 = vmatprep.subr.mxu0 0.0
      %396 = vmatpush1.xpose.msra.mxu0 0.0
      %397 = vmatprep.subr.mxu0 0.0
      %398 = vmatpush1.xpose.msra.mxu0 0.0
      %399 = vmatprep.subr.mxu0 0.0
      %400 = vmatpush1.xpose.msra.mxu0 0.0
      %401 = vmatprep.subr.mxu0 0.0
      %402 = vmatpush1.xpose.msra.mxu0 0.0
      %403 = vmatprep.subr.mxu0 0.0
      %404 = vmatpush1.xpose.msra.mxu0 0.0
      %405 = vmatprep.subr.mxu0 0.0
      %406 = vmatpush1.xpose.msra.mxu0 0.0
      %407 = vmatprep.subr.mxu0 0.0
      %408 = vmatpush1.xpose.msra.mxu0 0.0
      %409 = vmatprep.subr.mxu0 0.0
      %410 = vmatpush1.xpose.msra.mxu0 0.0
      %411 = vmatprep.subr.mxu0 0.0
      %412 = vmatpush1.xpose.msra.mxu0 0.0
      %413 = vmatprep.subr.mxu0 0.0
      %414 = vmatpush1.xpose.msra.mxu0 0.0
      %415 = vmatprep.subr.mxu0 0.0
      %416 = vmatpush1.xpose.msra.mxu0 0.0
      %417 = vmatprep.subr.mxu0 0.0
      %418 = vmatpush1.xpose.msra.mxu0 0.0
      %419 = vmatprep.subr.mxu0 0.0
      %420 = vmatpush1.xpose.msra.mxu0 0.0
      %421 = vmatprep.subr.mxu0 0.0
      %422 = vmatpush1.xpose.msra.mxu0 0.0
      %423 = vmatprep.subr.mxu0 0.0
      %424 = vmatpush1.xpose.msra.mxu0 0.0
      %425 = vmatprep.subr.mxu0 0.0
      %426 = vmatpush1.xpose.msra.mxu0 0.0
      %427 = vmatprep.subr.mxu0 0.0
      %428 = vmatpush1.xpose.msra.mxu0 0.0
      %429 = vmatprep.subr.mxu0 0.0
      %430 = vmatpush1.xpose.msra.mxu0 0.0
      %431 = vmatprep.subr.mxu0 0.0
      %432 = vmatpush1.xpose.msra.mxu0 0.0
      %433 = vmatprep.subr.mxu0 0.0
      %434 = vmatpush1.xpose.msra.mxu0 0.0
      %435 = vmatprep.subr.mxu0 0.0
      %436 = vmatpush1.xpose.msra.mxu0 0.0
      %437 = vmatprep.mubr.f32.mxu0 %v329
      %438 = vmatmul.mubr.f32.gmra.mrb[0].mxu0 %v327
      %v439 = vpop.f32.mrb[0].mxu0
      %v440 = vadd.f32 0.0, %v439
      %v441 = vpop.f32.mrb[0].mxu0
      %442 = vmatprep.mubr.f32.mxu0 %v335
      %443 = vmatmul.mubr.f32.gmra.mrb[0].mxu0 %v333
      %v444 = vpop.f32.mrb[0].mxu0
      %v445 = vadd.f32 0.0, %v444
      %v446 = vpop.f32.mrb[0].mxu0
      %447 = vmatprep.mubr.f32.mxu0 %v341
      %448 = vmatmul.mubr.f32.gmra.mrb[0].mxu0 %v339
      %v449 = vpop.f32.mrb[0].mxu0
      %v450 = vadd.f32 0.0, %v449
      %v451 = vpop.f32.mrb[0].mxu0
      %452 = vmatprep.mubr.f32.mxu0 %v347
      %453 = vmatmul.mubr.f32.gmra.mrb[0].mxu0 %v345
      %v454 = vpop.f32.mrb[0].mxu0
      %v455 = vadd.f32 0.0, %v454
      %v456 = vpop.f32.mrb[0].mxu0
      %457 = vmatprep.mubr.f32.mxu0 %v353
      %458 = vmatmul.mubr.f32.gmra.mrb[0].mxu0 %v351
      %v459 = vpop.f32.mrb[0].mxu0
      %v460 = vadd.f32 0.0, %v459
      %v461 = vpop.f32.mrb[0].mxu0
      %462 = vmatprep.mubr.f32.mxu0 %v359
      %463 = vmatmul.mubr.f32.gmra.mrb[0].mxu0 %v357
      %v464 = vpop.f32.mrb[0].mxu0
      %v465 = vadd.f32 0.0, %v464
      %v466 = vpop.f32.mrb[0].mxu0
      %467 = vmatprep.mubr.f32.mxu0 %v365
      %468 = vmatmul.mubr.f32.gmra.mrb[0].mxu0 %v363
      %v469 = vpop.f32.mrb[0].mxu0
      %v470 = vadd.f32 0.0, %v469
      %v471 = vpop.f32.mrb[0].mxu0
      %472 = vmatprep.mubr.f32.mxu0 %v371
      %473 = vmatmul.mubr.f32.gmra.mrb[0].mxu0 %v369
      %v474 = vpop.f32.mrb[0].mxu0
      %v475 = vadd.f32 0.0, %v474
      %v476 = vpop.f32.mrb[0].mxu0
      %477 = vdwg.mxu0
      %v478 = vmul.f32 %v440, 6.1035156e-05
      %v479 = vmul.f32 %v445, 6.1035156e-05
      %v480 = vmul.f32 %v450, 6.1035156e-05
      %v481 = vmul.f32 %v455, 6.1035156e-05
      %v482 = vmul.f32 %v460, 6.1035156e-05
      %v483 = vmul.f32 %v465, 6.1035156e-05
      %v484 = vmul.f32 %v470, 6.1035156e-05
      %v485 = vmul.f32 %v475, 6.1035156e-05
      %vm486 = vcmask 523264
      %487 = vst.msk [vmem:[%s170] sm:$0xff] %vm486, %v478
      %488 = vst.msk [vmem:[%s170 + $0x8] sm:$0xff] %vm486, %v479
      %489 = vst.msk [vmem:[%s170 + $0x10] sm:$0xff] %vm486, %v480
      %490 = vst.msk [vmem:[%s170 + $0x18] sm:$0xff] %vm486, %v481
      %491 = vst.msk [vmem:[%s170 + $0x20] sm:$0xff] %vm486, %v482
      %492 = vst.msk [vmem:[%s170 + $0x28] sm:$0xff] %vm486, %v483
      %493 = vst.msk [vmem:[%s170 + $0x30] sm:$0xff] %vm486, %v484
      %494 = vst.msk [vmem:[%s170 + $0x38] sm:$0xff] %vm486, %v485
      %p495 = scmp.lt.s32.totalorder %s14, 1
      %s496 = scalar_select %p495, %s14, 1
      %s497 = smul.addr %s496, 8
      %s498 = smul.addr %s497, 8
      %s499 = scalar_lea.vmem %s3, %s498
      // Predicated region
      $region33: #{gram_discriminator_forward.2} parent=31 // pred_check
        %p500 = pneg %p100
      $region34: #{gram_discriminator_forward.2} parent=31 // pred_check_branch
        %502 = sbr.rel (%p500) target = $region36
      $region35: #{gram_discriminator_forward.2} parent=31 // pred_region
        _
      $region36: #{gram_discriminator_forward.2} parent=31 // pred_fallthru
        _
    $region32: #{gram_discriminator_forward.2} parent=5 // pred_fallthru
      _
    %p503 = scmp.le.s32.totalorder 2, %s9
    // Predicated region
    $region37: #{gram_discriminator_forward.2} parent=5 // pred_check
      %p504 = pneg %p503
    $region38: #{gram_discriminator_forward.2} parent=5 // pred_check_branch
      %506 = sbr.rel (%p504) target = $region40
    $region39: #{gram_discriminator_forward.2} parent=5 // pred_region
      %s507 = ssub.s32 %s9, 2
      // Predicated region
      $region41: #{gram_discriminator_forward.2} parent=39 // pred_check
        %p508 = pneg %p106
      $region42: #{gram_discriminator_forward.2} parent=39 // pred_check_branch
        %510 = sbr.rel (%p508) target = $region44
      $region43: #{gram_discriminator_forward.2} parent=39 // pred_region
        %p511 = scmp.lt.s32.totalorder %s15, 1
        %s512 = scalar_select %p511, %s15, 1
        %s513 = smul.addr %s512, 8
        %s514 = smul.addr %s513, 8
        %s515 = scalar_lea.vmem %s3, %s514
      $region44: #{gram_discriminator_forward.2} parent=39 // pred_fallthru
        _
    $region40: #{gram_discriminator_forward.2} parent=5 // pred_fallthru
      _
  $region6: #{gram_discriminator_forward.2} parent=0 // loop_footer
    %s13 = sadd.s32 1, %s9
  $region7: #{gram_discriminator_forward.2} parent=0 // loop_footer_branch
    %8 = sbr.rel target = $region3
  $region8: #{gram_discriminator_forward.2} parent=0 // loop_exit
    _

// kernel: gram_discriminator_forward.3
$region0: #{gram_discriminator_forward.3}
  #allocation0 [shape = 'u32[]', space=smem, size = 0x4, offset = 0x4, fixed_abs, tag = 'smem constant byte address 0x4 - core index']
  #allocation1 [shape = 'u32[144,128]{1,0:T(1,128)}', space=vmem, size = 0x12000, scoped, tag = 'internal scratch']
  #allocation2 [shape = 'f32[2,1000]{1,0:T(2,128)}', space=vmem, size = 0x2000, scoped, tag = 'scratch operand']
  #allocation3 [shape = 'f32[1,1]{1,0:T(1,128)S(1)}', space=vmem, size = 0x200, scoped, tag = 'scoped memory for gram_discriminator_forward.3']
  %s0 = inlined_call_operand.vmem [shape: f32[2,4096], index: 0, kind: input, shape index: {}]
  %s1 = inlined_call_operand.hbm [shape: f32[1000,4096], index: 1, kind: input, shape index: {}]
  %s2 = inlined_call_operand.hbm [shape: f32[1,1000], index: 2, kind: input, shape index: {}]
  %s3 = inlined_call_operand.hbm [shape: f32[100,1000], index: 3, kind: input, shape index: {}]
  %s4 = inlined_call_operand.hbm [shape: f32[1,100], index: 4, kind: input, shape index: {}]
  %s5 = inlined_call_operand.hbm [shape: f32[1,100], index: 5, kind: input, shape index: {}]
  %s6 = inlined_call_operand.<no memory space> [shape: f32[1,1], index: 6, kind: input, shape index: {}]
  %s7 = inlined_call_operand.vmem [shape: f32[2,1], index: 7, kind: output, shape index: {}]
  %s8 = sld [smem:[#allocation0]]
  $region89: #{gram_discriminator_forward.3} parent=0
    _
  %s10 = ssub.s32 1, %s8
  %s11 = scalar_select 0, %s10, %s8
  %v12 = vstv %s6
  %13 = vst [vmem:[#allocation3] sm:$0x1] %v12
  $region1: #{gram_discriminator_forward.3} parent=0
    #allocation4 [shape = 'u8[8192000]{0}', space=vmem, size = 0x7d0000, scoped, tag = 'input window, operand 1']
    #allocation5 [shape = 's32[2]{0}', space=sflag, size = 0x8, scoped, tag = 'scoped memory for gram_discriminator_forward.3']
    #allocation6 [shape = 'u8[4096]{0}', space=vmem, size = 0x1000, scoped, tag = 'input window, operand 2, single buffered']
    #allocation7 [shape = 's32[1]{0}', space=sflag, size = 0x4, scoped, tag = 'scoped memory for gram_discriminator_forward.3']
    #allocation8 [shape = 'u8[425984]{0}', space=vmem, size = 0x68000, scoped, tag = 'input window, operand 3, single buffered']
    #allocation9 [shape = 'u8[512]{0}', space=vmem, size = 0x400, scoped, tag = 'input window, operand 4, single buffered']
    #allocation10 [shape = 's32[1]{0}', space=sflag, size = 0x4, scoped, tag = 'scoped memory for gram_discriminator_forward.3']
    #allocation11 [shape = 'u8[512]{0}', space=vmem, size = 0x400, scoped, tag = 'input window, operand 5, single buffered']
    %14 = vsyncpa [#allocation5], 0
    %s15 = scalar_lea.sflag [#allocation5], 1
    %16 = vsyncpa %s15, 0
    %17 = vsyncpa [#allocation7], 0
    %18 = vsyncpa [#allocation10], 0
    loop: start=0, step=1, limit=6
    $region2: #{gram_discriminator_forward.3} parent=1 // loop_pre_header
      _
    $region3: #{gram_discriminator_forward.3} parent=1 // loop_header
      %s20 = sphi 0, %s24
      %p21 = scmp.ge.s32.totalorder %s20, 6
      %s30 = sphi 0, %s32
      %s33 = sphi 0, %s30
      %s34 = sphi 0, %s33
      %s50 = sphi 0, %s34
      %s56 = sphi 0, %s58
      %s59 = sphi 0, %s56
      %s60 = sphi 0, %s59
      %s76 = sphi 0, %s60
      %s80 = sphi 0, %s80
      %s82 = sphi 0, %s80
      %s83 = sphi 0, %s82
      %s97 = sphi 0, %s83
      %s101 = sphi 0, %s101
      %s103 = sphi 0, %s101
      %s104 = sphi 0, %s103
      %s118 = sphi 0, %s104
      %s122 = sphi 0, %s122
      %s124 = sphi 0, %s122
      %s125 = sphi 0, %s124
      %s139 = sphi 0, %s125
      %s143 = sphi 0, %s143
      %s145 = sphi 0, %s143
      %s146 = sphi 0, %s145
      %s160 = sphi 0, %s146
      %s164 = sphi 0, %s164
      %s166 = sphi 0, %s164
      %s167 = sphi 0, %s166
      %s181 = sphi 0, %s167
      %s185 = sphi 0, %s185
      %s187 = sphi 0, %s185
      %s188 = sphi 0, %s187
      %s202 = sphi 0, %s188
    $region4: #{gram_discriminator_forward.3} parent=1 // loop_header_branch
      %23 = sbr.rel (%p21) target = $region8
    $region5: #{gram_discriminator_forward.3} parent=1 // loop_body
      %s25 = ssub.s32 %s20, 1
      %s26 = ssub.s32 %s20, 2
      %s27 = sadd.s32 %s20, 1
      %s28 = ssub.s32 %s20, %s27
      %p29 = scmp.eq.s32.totalorder %s28, 0
      %s31 = sadd.s32 %s30, 1
      %s32 = scalar_select %p29, %s30, %s31
      %p35 = pneg %p29
      %p36 = scmp.eq.s32.totalorder %s20, 3
      %p37 = por %p35, %p36
      %p38 = scmp.ne.s32.totalorder %s30, %s33
      %p39 = scmp.eq.s32.totalorder %s20, 0
      %p40 = por %p38, %p39
      %p41 = scmp.ne.s32.totalorder %s30, %s33
      %p42 = scmp.eq.s32.totalorder %s25, 3
      %p43 = por %p41, %p42
      %p44 = scmp.ne.s32.totalorder %s33, %s34
      %p45 = scmp.eq.s32.totalorder %s25, 0
      %p46 = por %p44, %p45
      %p47 = scmp.ne.s32.totalorder %s33, %s34
      %p48 = scmp.eq.s32.totalorder %s26, 3
      %p49 = por %p47, %p48
      %p51 = scmp.ne.s32.totalorder %s34, %s50
      %p52 = scmp.eq.s32.totalorder %s26, 0
      %p53 = por %p51, %p52
      %s54 = ssub.s32 %s20, %s27
      %p55 = scmp.eq.s32.totalorder %s54, 0
      %s57 = sadd.s32 %s56, 1
      %s58 = scalar_select %p55, %s56, %s57
      %p61 = pneg %p55
      %p62 = scmp.eq.s32.totalorder %s20, 3
      %p63 = por %p61, %p62
      %p64 = scmp.ne.s32.totalorder %s56, %s59
      %p65 = scmp.eq.s32.totalorder %s20, 0
      %p66 = por %p64, %p65
      %p67 = scmp.ne.s32.totalorder %s56, %s59
      %p68 = scmp.eq.s32.totalorder %s25, 3
      %p69 = por %p67, %p68
      %p70 = scmp.ne.s32.totalorder %s59, %s60
      %p71 = scmp.eq.s32.totalorder %s25, 0
      %p72 = por %p70, %p71
      %p73 = scmp.ne.s32.totalorder %s59, %s60
      %p74 = scmp.eq.s32.totalorder %s26, 3
      %p75 = por %p73, %p74
      %p77 = scmp.ne.s32.totalorder %s60, %s76
      %p78 = scmp.eq.s32.totalorder %s26, 0
      %p79 = por %p77, %p78
      %s81 = sadd.s32 %s80, 1
      %p84 = scmp.eq.s32.totalorder %s20, 3
      %p85 = scmp.ne.s32.totalorder %s80, %s82
      %p86 = scmp.eq.s32.totalorder %s20, 0
      %p87 = por %p85, %p86
      %p88 = scmp.ne.s32.totalorder %s80, %s82
      %p89 = scmp.eq.s32.totalorder %s25, 3
      %p90 = por %p88, %p89
      %p91 = scmp.ne.s32.totalorder %s82, %s83
      %p92 = scmp.eq.s32.totalorder %s25, 0
      %p93 = por %p91, %p92
      %p94 = scmp.ne.s32.totalorder %s82, %s83
      %p95 = scmp.eq.s32.totalorder %s26, 3
      %p96 = por %p94, %p95
      %p98 = scmp.ne.s32.totalorder %s83, %s97
      %p99 = scmp.eq.s32.totalorder %s26, 0
      %p100 = por %p98, %p99
      %s102 = sadd.s32 %s101, 1
      %p105 = scmp.eq.s32.totalorder %s20, 3
      %p106 = scmp.ne.s32.totalorder %s101, %s103
      %p107 = scmp.eq.s32.totalorder %s20, 0
      %p108 = por %p106, %p107
      %p109 = scmp.ne.s32.totalorder %s101, %s103
      %p110 = scmp.eq.s32.totalorder %s25, 3
      %p111 = por %p109, %p110
      %p112 = scmp.ne.s32.totalorder %s103, %s104
      %p113 = scmp.eq.s32.totalorder %s25, 0
      %p114 = por %p112, %p113
      %p115 = scmp.ne.s32.totalorder %s103, %s104
      %p116 = scmp.eq.s32.totalorder %s26, 3
      %p117 = por %p115, %p116
      %p119 = scmp.ne.s32.totalorder %s104, %s118
      %p120 = scmp.eq.s32.totalorder %s26, 0
      %p121 = por %p119, %p120
      %s123 = sadd.s32 %s122, 1
      %p126 = scmp.eq.s32.totalorder %s20, 3
      %p127 = scmp.ne.s32.totalorder %s122, %s124
      %p128 = scmp.eq.s32.totalorder %s20, 0
      %p129 = por %p127, %p128
      %p130 = scmp.ne.s32.totalorder %s122, %s124
      %p131 = scmp.eq.s32.totalorder %s25, 3
      %p132 = por %p130, %p131
      %p133 = scmp.ne.s32.totalorder %s124, %s125
      %p134 = scmp.eq.s32.totalorder %s25, 0
      %p135 = por %p133, %p134
      %p136 = scmp.ne.s32.totalorder %s124, %s125
      %p137 = scmp.eq.s32.totalorder %s26, 3
      %p138 = por %p136, %p137
      %p140 = scmp.ne.s32.totalorder %s125, %s139
      %p141 = scmp.eq.s32.totalorder %s26, 0
      %p142 = por %p140, %p141
      %s144 = sadd.s32 %s143, 1
      %p147 = scmp.eq.s32.totalorder %s20, 3
      %p148 = scmp.ne.s32.totalorder %s143, %s145
      %p149 = scmp.eq.s32.totalorder %s20, 0
      %p150 = por %p148, %p149
      %p151 = scmp.ne.s32.totalorder %s143, %s145
      %p152 = scmp.eq.s32.totalorder %s25, 3
      %p153 = por %p151, %p152
      %p154 = scmp.ne.s32.totalorder %s145, %s146
      %p155 = scmp.eq.s32.totalorder %s25, 0
      %p156 = por %p154, %p155
      %p157 = scmp.ne.s32.totalorder %s145, %s146
      %p158 = scmp.eq.s32.totalorder %s26, 3
      %p159 = por %p157, %p158
      %p161 = scmp.ne.s32.totalorder %s146, %s160
      %p162 = scmp.eq.s32.totalorder %s26, 0
      %p163 = por %p161, %p162
      %s165 = sadd.s32 %s164, 1
      %p168 = scmp.eq.s32.totalorder %s20, 3
      %p169 = scmp.ne.s32.totalorder %s164, %s166
      %p170 = scmp.eq.s32.totalorder %s20, 0
      %p171 = por %p169, %p170
      %p172 = scmp.ne.s32.totalorder %s164, %s166
      %p173 = scmp.eq.s32.totalorder %s25, 3
      %p174 = por %p172, %p173
      %p175 = scmp.ne.s32.totalorder %s166, %s167
      %p176 = scmp.eq.s32.totalorder %s25, 0
      %p177 = por %p175, %p176
      %p178 = scmp.ne.s32.totalorder %s166, %s167
      %p179 = scmp.eq.s32.totalorder %s26, 3
      %p180 = por %p178, %p179
      %p182 = scmp.ne.s32.totalorder %s167, %s181
      %p183 = scmp.eq.s32.totalorder %s26, 0
      %p184 = por %p182, %p183
      %s186 = sadd.s32 %s185, 1
      %p189 = scmp.eq.s32.totalorder %s20, 3
      %p190 = scmp.ne.s32.totalorder %s185, %s187
      %p191 = scmp.eq.s32.totalorder %s20, 0
      %p192 = por %p190, %p191
      %p193 = scmp.ne.s32.totalorder %s185, %s187
      %p194 = scmp.eq.s32.totalorder %s25, 3
      %p195 = por %p193, %p194
      %p196 = scmp.ne.s32.totalorder %s187, %s188
      %p197 = scmp.eq.s32.totalorder %s25, 0
      %p198 = por %p196, %p197
      %p199 = scmp.ne.s32.totalorder %s187, %s188
      %p200 = scmp.eq.s32.totalorder %s26, 3
      %p201 = por %p199, %p200
      %p203 = scmp.ne.s32.totalorder %s188, %s202
      %p204 = scmp.eq.s32.totalorder %s26, 0
      %p205 = por %p203, %p204
      %p206 = scmp.le.s32.totalorder 1, %s20
      %p207 = scmp.lt.s32.totalorder %s20, 5
      %p208 = pnand %p206, %p207
      %p209 = pneg %p208
      // Predicated region
      $region9: #{gram_discriminator_forward.3} parent=5 // pred_check
        _
      $region10: #{gram_discriminator_forward.3} parent=5 // pred_check_branch
        %211 = sbr.rel (%p208) target = $region12
      $region11: #{gram_discriminator_forward.3} parent=5 // pred_region
        %s212 = ssub.s32 %s20, 1
        // Predicated region
        $region13: #{gram_discriminator_forward.3} parent=11 // pred_check
          %p213 = pneg %p93
        $region14: #{gram_discriminator_forward.3} parent=11 // pred_check_branch
          %215 = sbr.rel (%p213) target = $region16
        $region15: #{gram_discriminator_forward.3} parent=11 // pred_region
          %s217 = ssub.s32 128, 128
          %218 = vsyncadd [#allocation7], %s217
          %s220 = sshll.u32 [#allocation6], 4
          %s221 = int_to_ptr.vmem [resolvable:$true] %s220
          %223 = dma.hbm_to_vmem [thread:$0]  %s2, 128, %s221, [#allocation7]
        $region16: #{gram_discriminator_forward.3} parent=11 // pred_fallthru
          _
        // Predicated region
        $region17: #{gram_discriminator_forward.3} parent=11 // pred_check
          %p224 = pneg %p114
        $region18: #{gram_discriminator_forward.3} parent=11 // pred_check_branch
          %226 = sbr.rel (%p224) target = $region20
        $region19: #{gram_discriminator_forward.3} parent=11 // pred_region
          %s228 = ssub.s32 13312, 13312
          %229 = vsyncadd [#allocation7], %s228
          %s230 = sshll.u32 [#allocation8], 4
          %s231 = int_to_ptr.vmem [resolvable:$true] %s230
          %236 = dma.hbm_to_vmem [thread:$0]  %s3, 13312, %s231, [#allocation7], 1024, 1024, 64
        $region20: #{gram_discriminator_forward.3} parent=11 // pred_fallthru
          _
        // Predicated region
        $region21: #{gram_discriminator_forward.3} parent=11 // pred_check
          %p237 = pneg %p135
        $region22: #{gram_discriminator_forward.3} parent=11 // pred_check_branch
          %239 = sbr.rel (%p237) target = $region24
        $region23: #{gram_discriminator_forward.3} parent=11 // pred_region
          %s241 = ssub.s32 16, 16
          %242 = vsyncadd [#allocation10], %s241
          %s244 = sshll.u32 [#allocation9], 4
          %s245 = int_to_ptr.vmem [resolvable:$true] %s244
          %247 = dma.hbm_to_vmem [thread:$0]  %s4, 16, %s245, [#allocation10]
        $region24: #{gram_discriminator_forward.3} parent=11 // pred_fallthru
          _
        // Predicated region
        $region25: #{gram_discriminator_forward.3} parent=11 // pred_check
          %p248 = pneg %p156
        $region26: #{gram_discriminator_forward.3} parent=11 // pred_check_branch
          %250 = sbr.rel (%p248) target = $region28
        $region27: #{gram_discriminator_forward.3} parent=11 // pred_region
          %s252 = ssub.s32 16, 16
          %253 = vsyncadd [#allocation10], %s252
          %s255 = sshll.u32 [#allocation11], 4
          %s256 = int_to_ptr.vmem [resolvable:$true] %s255
          %258 = dma.hbm_to_vmem [thread:$0]  %s5, 16, %s256, [#allocation10]
        $region28: #{gram_discriminator_forward.3} parent=11 // pred_fallthru
          _
        // Predicated region
        $region29: #{gram_discriminator_forward.3} parent=11 // pred_check
          %p259 = pneg %p177
        $region30: #{gram_discriminator_forward.3} parent=11 // pred_check_branch
          %261 = sbr.rel (%p259) target = $region32
        $region31: #{gram_discriminator_forward.3} parent=11 // pred_region
          _
        $region32: #{gram_discriminator_forward.3} parent=11 // pred_fallthru
          _
      $region12: #{gram_discriminator_forward.3} parent=5 // pred_fallthru
        _
      %p262 = scmp.lt.s32.totalorder %s20, 4
      // Predicated region
      $region33: #{gram_discriminator_forward.3} parent=5 // pred_check
        %p263 = pneg %p262
      $region34: #{gram_discriminator_forward.3} parent=5 // pred_check_branch
        %265 = sbr.rel (%p263) target = $region36
      $region35: #{gram_discriminator_forward.3} parent=5 // pred_region
        // Predicated region
        $region37: #{gram_discriminator_forward.3} parent=35 // pred_check
          %p266 = pneg %p40
        $region38: #{gram_discriminator_forward.3} parent=35 // pred_check_branch
          %268 = sbr.rel (%p266) target = $region40
        $region39: #{gram_discriminator_forward.3} parent=35 // pred_region
          %s269 = smul.u32 8, %s20
          %p270 = scmp.lt.s32.totalorder %s269, 31
          %s271 = scalar_select %p270, %s269, 31
          %s272 = smul.addr %s271, 2
          %s273 = scalar_lea.vmem %s0, %s272
          %s274 = smul.u32 8, %s20
        $region40: #{gram_discriminator_forward.3} parent=35 // pred_fallthru
          _
        // Predicated region
        $region41: #{gram_discriminator_forward.3} parent=35 // pred_check
          %p275 = pneg %p66
        $region42: #{gram_discriminator_forward.3} parent=35 // pred_check_branch
          %277 = sbr.rel (%p275) target = $region44
        $region43: #{gram_discriminator_forward.3} parent=35 // pred_region
          %s278 = sand.u32 %s56, 1
          %s279 = scalar_lea.sflag [#allocation5], %s278
          %s280 = sand.u32 %s56, 1
          %s281 = smul.addr %s280, 8000
          %s282 = scalar_lea.vmem [#allocation4], %s281
          %s283 = smul.u32 8, %s20
          %s285 = ssub.s32 128000, 128000
          %286 = vsyncadd %s279, %s285
          %s287 = smul.addr %s283, 128
          %s288 = scalar_lea.hbm %s1, %s287
          %s289 = sshll.u32 %s282, 4
          %s290 = int_to_ptr.vmem [resolvable:$true] %s289
          %295 = dma.hbm_to_vmem [thread:$0]  %s288, 128000, %s290, %s279, 4096, 1024, 64
        $region44: #{gram_discriminator_forward.3} parent=35 // pred_fallthru
          _
      $region36: #{gram_discriminator_forward.3} parent=5 // pred_fallthru
        _
      %p296 = scmp.le.s32.totalorder 1, %s20
      %p297 = scmp.lt.s32.totalorder %s20, 5
      %p298 = pnand %p296, %p297
      %p299 = pneg %p298
      // Predicated region
      $region45: #{gram_discriminator_forward.3} parent=5 // pred_check
        _
      $region46: #{gram_discriminator_forward.3} parent=5 // pred_check_branch
        %301 = sbr.rel (%p298) target = $region48
      $region47: #{gram_discriminator_forward.3} parent=5 // pred_region
        %s302 = ssub.s32 %s20, 1
        %s303 = sand.u32 %s59, 1
        %s304 = scalar_lea.sflag [#allocation5], %s303
        %s305 = sand.u32 %s59, 1
        %s306 = smul.addr %s305, 8000
        %s307 = scalar_lea.vmem [#allocation4], %s306
        // Predicated region
        $region49: #{gram_discriminator_forward.3} parent=47 // pred_check
          %p308 = pneg %p72
        $region50: #{gram_discriminator_forward.3} parent=47 // pred_check_branch
          %310 = sbr.rel (%p308) target = $region52
        $region51: #{gram_discriminator_forward.3} parent=47 // pred_region
          %311 = dma.done %s304, 128000
        $region52: #{gram_discriminator_forward.3} parent=47 // pred_fallthru
          _
        // Predicated region
        $region53: #{gram_discriminator_forward.3} parent=47 // pred_check
          %p312 = pneg %p93
        $region54: #{gram_discriminator_forward.3} parent=47 // pred_check_branch
          %314 = sbr.rel (%p312) target = $region56
        $region55: #{gram_discriminator_forward.3} parent=47 // pred_region
          %315 = dma.done [#allocation7], 128
        $region56: #{gram_discriminator_forward.3} parent=47 // pred_fallthru
          _
        // Predicated region
        $region57: #{gram_discriminator_forward.3} parent=47 // pred_check
          %p316 = pneg %p114
        $region58: #{gram_discriminator_forward.3} parent=47 // pred_check_branch
          %318 = sbr.rel (%p316) target = $region60
        $region59: #{gram_discriminator_forward.3} parent=47 // pred_region
          %319 = dma.done [#allocation7], 13312
        $region60: #{gram_discriminator_forward.3} parent=47 // pred_fallthru
          _
        // Predicated region
        $region61: #{gram_discriminator_forward.3} parent=47 // pred_check
          %p320 = pneg %p135
        $region62: #{gram_discriminator_forward.3} parent=47 // pred_check_branch
          %322 = sbr.rel (%p320) target = $region64
        $region63: #{gram_discriminator_forward.3} parent=47 // pred_region
          %323 = dma.done [#allocation10], 16
        $region64: #{gram_discriminator_forward.3} parent=47 // pred_fallthru
          _
        // Predicated region
        $region65: #{gram_discriminator_forward.3} parent=47 // pred_check
          %p324 = pneg %p156
        $region66: #{gram_discriminator_forward.3} parent=47 // pred_check_branch
          %326 = sbr.rel (%p324) target = $region68
        $region67: #{gram_discriminator_forward.3} parent=47 // pred_region
          %327 = dma.done [#allocation10], 16
        $region68: #{gram_discriminator_forward.3} parent=47 // pred_fallthru
          _
        %s328 = smul.u32 8, %s25
        %p329 = scmp.lt.s32.totalorder %s328, 31
        %s330 = scalar_select %p329, %s328, 31
        %s331 = smul.addr %s330, 2
        %s332 = scalar_lea.vmem %s0, %s331
        %p333 = pneg %p46
        %p334 = pneg %p43
        %s335 = sand.u32 %s59, 1
        %s336 = scalar_lea.sflag [#allocation5], %s335
        %s337 = sand.u32 %s59, 1
        %s338 = smul.addr %s337, 8000
        %s339 = scalar_lea.vmem [#allocation4], %s338
        %p340 = pneg %p72
        %p341 = pneg %p69
        %p342 = pneg %p93
        %p343 = pneg %p90
        %p344 = pneg %p114
        %p345 = pneg %p111
        %p346 = pneg %p135
        %p347 = pneg %p132
        %p348 = pneg %p156
        %p349 = pneg %p153
        %p350 = pneg %p177
        %p351 = pneg %p174
        %p352 = pneg %p198
        %p353 = pneg %p195
        %s354 = smul.u32 8, %s25
        %p355 = scmp.lt.s32.totalorder %s354, 31
        %s356 = scalar_select %p355, %s354, 31
        %s357 = smul.addr %s356, 2
        %s358 = scalar_lea.vmem %s0, %s357
        %s359 = smul.u32 8, %s25
        %s360 = smul.u32 8, %s25
        %p361 = scmp.eq.s32.totalorder %s25, 0
        // Predicated region
        $region69: #{gram_discriminator_forward.3} parent=47 // pred_check
          %p362 = pneg %p361
        $region70: #{gram_discriminator_forward.3} parent=47 // pred_check_branch
          %364 = sbr.rel (%p362) target = $region72
        $region71: #{gram_discriminator_forward.3} parent=47 // pred_region
          %365 = vst [vmem:[#allocation2] sm:$0xff] 0.0
          %vm366 = vcmask 1041408
          %vm367 = vcmask 1043458
          %vm368 = vmor %vm367, %vm366
          %vm369 = vcmask 1045508
          %vm370 = vmor %vm369, %vm368
          %vm371 = vcmask 850950
          %vm372 = vmor %vm371, %vm370
          %373 = vst.msk [vmem:[#allocation2 + $0x8] sm:$0xff] %vm372, 0.0
        $region72: #{gram_discriminator_forward.3} parent=47 // pred_fallthru
          _
        %v374 = vld [vmem:[#allocation2] sm:$0xff]
        %v375 = vld [vmem:[#allocation2 + $0x8] sm:$0xff]
        %v376 = vld [vmem:[%s358] sm:$0xff]
        %v377 = vld [vmem:[%s358 + $0x8] sm:$0xff]
        %v378 = vld [vmem:[%s307] sm:$0xff]
        %v379 = vld [vmem:[%s307 + $0x8] sm:$0xff]
        %v380 = vld [vmem:[%s307 + $0x10] sm:$0xff]
        %v381 = vld [vmem:[%s307 + $0x18] sm:$0xff]
        %v382 = vld [vmem:[%s307 + $0x20] sm:$0xff]
        %v383 = vld [vmem:[%s307 + $0x28] sm:$0xff]
        %v384 = vld [vmem:[%s307 + $0x30] sm:$0xff]
        %v385 = vld [vmem:[%s307 + $0x38] sm:$0xff]
        %v386 = vld [vmem:[%s307 + $0x40] sm:$0xff]
        %v387 = vld [vmem:[%s307 + $0x48] sm:$0xff]
        %v388 = vld [vmem:[%s307 + $0x50] sm:$0xff]
        %v389 = vld [vmem:[%s307 + $0x58] sm:$0xff]
        %v390 = vld [vmem:[%s307 + $0x60] sm:$0xff]
        %v391 = vld [vmem:[%s307 + $0x68] sm:$0xff]
        %v392 = vld [vmem:[%s307 + $0x70] sm:$0xff]
        %v393 = vld [vmem:[%s307 + $0x78] sm:$0xff]
        %v394 = vld [vmem:[%s307 + $0x80] sm:$0xff]
        %v395 = vld [vmem:[%s307 + $0x88] sm:$0xff]
        %v396 = vld [vmem:[%s307 + $0x90] sm:$0xff]
        %v397 = vld [vmem:[%s307 + $0x98] sm:$0xff]
        %v398 = vld [vmem:[%s307 + $0xa0] sm:$0xff]
        %v399 = vld [vmem:[%s307 + $0xa8] sm:$0xff]
        %v400 = vld [vmem:[%s307 + $0xb0] sm:$0xff]
        %v401 = vld [vmem:[%s307 + $0xb8] sm:$0xff]
        %v402 = vld [vmem:[%s307 + $0xc0] sm:$0xff]
        %v403 = vld [vmem:[%s307 + $0xc8] sm:$0xff]
        %v404 = vld [vmem:[%s307 + $0xd0] sm:$0xff]
        %v405 = vld [vmem:[%s307 + $0xd8] sm:$0xff]
        %v406 = vld [vmem:[%s307 + $0xe0] sm:$0xff]
        %v407 = vld [vmem:[%s307 + $0xe8] sm:$0xff]
        %v408 = vld [vmem:[%s307 + $0xf0] sm:$0xff]
        %v409 = vld [vmem:[%s307 + $0xf8] sm:$0xff]
        %v410 = vld [vmem:[%s307 + $0x100] sm:$0xff]
        %v411 = vld [vmem:[%s307 + $0x108] sm:$0xff]
        %v412 = vld [vmem:[%s307 + $0x110] sm:$0xff]
        %v413 = vld [vmem:[%s307 + $0x118] sm:$0xff]
        %v414 = vld [vmem:[%s307 + $0x120] sm:$0xff]
        %v415 = vld [vmem:[%s307 + $0x128] sm:$0xff]
        %v416 = vld [vmem:[%s307 + $0x130] sm:$0xff]
        %v417 = vld [vmem:[%s307 + $0x138] sm:$0xff]
        %v418 = vld [vmem:[%s307 + $0x140] sm:$0xff]
        %v419 = vld [vmem:[%s307 + $0x148] sm:$0xff]
        %v420 = vld [vmem:[%s307 + $0x150] sm:$0xff]
        %v421 = vld [vmem:[%s307 + $0x158] sm:$0xff]
        %v422 = vld [vmem:[%s307 + $0x160] sm:$0xff]
        %v423 = vld [vmem:[%s307 + $0x168] sm:$0xff]
        %v424 = vld [vmem:[%s307 + $0x170] sm:$0xff]
        %v425 = vld [vmem:[%s307 + $0x178] sm:$0xff]
        %v426 = vld [vmem:[%s307 + $0x180] sm:$0xff]
        %v427 = vld [vmem:[%s307 + $0x188] sm:$0xff]
        %v428 = vld [vmem:[%s307 + $0x190] sm:$0xff]
        %v429 = vld [vmem:[%s307 + $0x198] sm:$0xff]
        %v430 = vld [vmem:[%s307 + $0x1a0] sm:$0xff]
        %v431 = vld [vmem:[%s307 + $0x1a8] sm:$0xff]
        %v432 = vld [vmem:[%s307 + $0x1b0] sm:$0xff]
        %v433 = vld [vmem:[%s307 + $0x1b8] sm:$0xff]
        %v434 = vld [vmem:[%s307 + $0x1c0] sm:$0xff]
        %v435 = vld [vmem:[%s307 + $0x1c8] sm:$0xff]
        %v436 = vld [vmem:[%s307 + $0x1d0] sm:$0xff]
        %v437 = vld [vmem:[%s307 + $0x1d8] sm:$0xff]
        %v438 = vld [vmem:[%s307 + $0x1e0] sm:$0xff]
        %v439 = vld [vmem:[%s307 + $0x1e8] sm:$0xff]
        %v440 = vld [vmem:[%s307 + $0x1f0] sm:$0xff]
        %v441 = vld [vmem:[%s307 + $0x1f8] sm:$0xff]
        %v442 = vld [vmem:[%s307 + $0x200] sm:$0xff]
        %v443 = vld [vmem:[%s307 + $0x208] sm:$0xff]
        %v444 = vld [vmem:[%s307 + $0x210] sm:$0xff]
        %v445 = vld [vmem:[%s307 + $0x218] sm:$0xff]
        %v446 = vld [vmem:[%s307 + $0x220] sm:$0xff]
        %v447 = vld [vmem:[%s307 + $0x228] sm:$0xff]
        %v448 = vld [vmem:[%s307 + $0x230] sm:$0xff]
        %v449 = vld [vmem:[%s307 + $0x238] sm:$0xff]
        %v450 = vld [vmem:[%s307 + $0x240] sm:$0xff]
        %v451 = vld [vmem:[%s307 + $0x248] sm:$0xff]
        %v452 = vld [vmem:[%s307 + $0x250] sm:$0xff]
        %v453 = vld [vmem:[%s307 + $0x258] sm:$0xff]
        %v454 = vld [vmem:[%s307 + $0x260] sm:$0xff]
        %v455 = vld [vmem:[%s307 + $0x268] sm:$0xff]
        %v456 = vld [vmem:[%s307 + $0x270] sm:$0xff]
        %v457 = vld [vmem:[%s307 + $0x278] sm:$0xff]
        %v458 = vld [vmem:[%s307 + $0x280] sm:$0xff]
        %v459 = vld [vmem:[%s307 + $0x288] sm:$0xff]
        %v460 = vld [vmem:[%s307 + $0x290] sm:$0xff]
        %v461 = vld [vmem:[%s307 + $0x298] sm:$0xff]
        %v462 = vld [vmem:[%s307 + $0x2a0] sm:$0xff]
        %v463 = vld [vmem:[%s307 + $0x2a8] sm:$0xff]
        %v464 = vld [vmem:[%s307 + $0x2b0] sm:$0xff]
        %v465 = vld [vmem:[%s307 + $0x2b8] sm:$0xff]
        %v466 = vld [vmem:[%s307 + $0x2c0] sm:$0xff]
        %v467 = vld [vmem:[%s307 + $0x2c8] sm:$0xff]
        %v468 = vld [vmem:[%s307 + $0x2d0] sm:$0xff]
        %v469 = vld [vmem:[%s307 + $0x2d8] sm:$0xff]
        %v470 = vld [vmem:[%s307 + $0x2e0] sm:$0xff]
        %v471 = vld [vmem:[%s307 + $0x2e8] sm:$0xff]
        %v472 = vld [vmem:[%s307 + $0x2f0] sm:$0xff]
        %v473 = vld [vmem:[%s307 + $0x2f8] sm:$0xff]
        %v474 = vld [vmem:[%s307 + $0x300] sm:$0xff]
        %v475 = vld [vmem:[%s307 + $0x308] sm:$0xff]
        %v476 = vld [vmem:[%s307 + $0x310] sm:$0xff]
        %v477 = vld [vmem:[%s307 + $0x318] sm:$0xff]
        %v478 = vld [vmem:[%s307 + $0x320] sm:$0xff]
        %v479 = vld [vmem:[%s307 + $0x328] sm:$0xff]
        %v480 = vld [vmem:[%s307 + $0x330] sm:$0xff]
        %v481 = vld [vmem:[%s307 + $0x338] sm:$0xff]
        %v482 = vld [vmem:[%s307 + $0x340] sm:$0xff]
        %v483 = vld [vmem:[%s307 + $0x348] sm:$0xff]
        %v484 = vld [vmem:[%s307 + $0x350] sm:$0xff]
        %v485 = vld [vmem:[%s307 + $0x358] sm:$0xff]
        %v486 = vld [vmem:[%s307 + $0x360] sm:$0xff]
        %v487 = vld [vmem:[%s307 + $0x368] sm:$0xff]
        %v488 = vld [vmem:[%s307 + $0x370] sm:$0xff]
        %v489 = vld [vmem:[%s307 + $0x378] sm:$0xff]
        %v490 = vld [vmem:[%s307 + $0x380] sm:$0xff]
        %v491 = vld [vmem:[%s307 + $0x388] sm:$0xff]
        %v492 = vld [vmem:[%s307 + $0x390] sm:$0xff]
        %v493 = vld [vmem:[%s307 + $0x398] sm:$0xff]
        %v494 = vld [vmem:[%s307 + $0x3a0] sm:$0xff]
        %v495 = vld [vmem:[%s307 + $0x3a8] sm:$0xff]
        %v496 = vld [vmem:[%s307 + $0x3b0] sm:$0xff]
        %v497 = vld [vmem:[%s307 + $0x3b8] sm:$0xff]
        %v498 = vld [vmem:[%s307 + $0x3c0] sm:$0xff]
        %v499 = vld [vmem:[%s307 + $0x3c8] sm:$0xff]
        %v500 = vld [vmem:[%s307 + $0x3d0] sm:$0xff]
        %v501 = vld [vmem:[%s307 + $0x3d8] sm:$0xff]
        %v502 = vld [vmem:[%s307 + $0x3e0] sm:$0xff]
        %v503 = vld [vmem:[%s307 + $0x3e8] sm:$0xff]
        %v504 = vld [vmem:[%s307 + $0x3f0] sm:$0xff]
        %v505 = vld [vmem:[%s307 + $0x3f8] sm:$0xff]
        %v506 = vld [vmem:[%s307 + $0x400] sm:$0xff]
        %v507 = vld [vmem:[%s307 + $0x408] sm:$0xff]
        %v508 = vld [vmem:[%s307 + $0x410] sm:$0xff]
        %v509 = vld [vmem:[%s307 + $0x418] sm:$0xff]
        %v510 = vld [vmem:[%s307 + $0x420] sm:$0xff]
        %v511 = vld [vmem:[%s307 + $0x428] sm:$0xff]
        %v512 = vld [vmem:[%s307 + $0x430] sm:$0xff]
        %v513 = vld [vmem:[%s307 + $0x438] sm:$0xff]
        %v514 = vld [vmem:[%s307 + $0x440] sm:$0xff]
        %v515 = vld [vmem:[%s307 + $0x448] sm:$0xff]
        %v516 = vld [vmem:[%s307 + $0x450] sm:$0xff]
        %v517 = vld [vmem:[%s307 + $0x458] sm:$0xff]
        %v518 = vld [vmem:[%s307 + $0x460] sm:$0xff]
        %v519 = vld [vmem:[%s307 + $0x468] sm:$0xff]
        %v520 = vld [vmem:[%s307 + $0x470] sm:$0xff]
        %v521 = vld [vmem:[%s307 + $0x478] sm:$0xff]
        %v522 = vld [vmem:[%s307 + $0x480] sm:$0xff]
        %v523 = vld [vmem:[%s307 + $0x488] sm:$0xff]
        %v524 = vld [vmem:[%s307 + $0x490] sm:$0xff]
        %v525 = vld [vmem:[%s307 + $0x498] sm:$0xff]
        %v526 = vld [vmem:[%s307 + $0x4a0] sm:$0xff]
        %v527 = vld [vmem:[%s307 + $0x4a8] sm:$0xff]
        %v528 = vld [vmem:[%s307 + $0x4b0] sm:$0xff]
        %v529 = vld [vmem:[%s307 + $0x4b8] sm:$0xff]
        %v530 = vld [vmem:[%s307 + $0x4c0] sm:$0xff]
        %v531 = vld [vmem:[%s307 + $0x4c8] sm:$0xff]
        %v532 = vld [vmem:[%s307 + $0x4d0] sm:$0xff]
        %v533 = vld [vmem:[%s307 + $0x4d8] sm:$0xff]
        %v534 = vld [vmem:[%s307 + $0x4e0] sm:$0xff]
        %v535 = vld [vmem:[%s307 + $0x4e8] sm:$0xff]
        %v536 = vld [vmem:[%s307 + $0x4f0] sm:$0xff]
        %v537 = vld [vmem:[%s307 + $0x4f8] sm:$0xff]
        %v538 = vld [vmem:[%s307 + $0x500] sm:$0xff]
        %v539 = vld [vmem:[%s307 + $0x508] sm:$0xff]
        %v540 = vld [vmem:[%s307 + $0x510] sm:$0xff]
        %v541 = vld [vmem:[%s307 + $0x518] sm:$0xff]
        %v542 = vld [vmem:[%s307 + $0x520] sm:$0xff]
        %v543 = vld [vmem:[%s307 + $0x528] sm:$0xff]
        %v544 = vld [vmem:[%s307 + $0x530] sm:$0xff]
        %v545 = vld [vmem:[%s307 + $0x538] sm:$0xff]
        %v546 = vld [vmem:[%s307 + $0x540] sm:$0xff]
        %v547 = vld [vmem:[%s307 + $0x548] sm:$0xff]
        %v548 = vld [vmem:[%s307 + $0x550] sm:$0xff]
        %v549 = vld [vmem:[%s307 + $0x558] sm:$0xff]
        %v550 = vld [vmem:[%s307 + $0x560] sm:$0xff]
        %v551 = vld [vmem:[%s307 + $0x568] sm:$0xff]
        %v552 = vld [vmem:[%s307 + $0x570] sm:$0xff]
        %v553 = vld [vmem:[%s307 + $0x578] sm:$0xff]
        %v554 = vld [vmem:[%s307 + $0x580] sm:$0xff]
        %v555 = vld [vmem:[%s307 + $0x588] sm:$0xff]
        %v556 = vld [vmem:[%s307 + $0x590] sm:$0xff]
        %v557 = vld [vmem:[%s307 + $0x598] sm:$0xff]
        %v558 = vld [vmem:[%s307 + $0x5a0] sm:$0xff]
        %v559 = vld [vmem:[%s307 + $0x5a8] sm:$0xff]
        %v560 = vld [vmem:[%s307 + $0x5b0] sm:$0xff]
        %v561 = vld [vmem:[%s307 + $0x5b8] sm:$0xff]
        %v562 = vld [vmem:[%s307 + $0x5c0] sm:$0xff]
        %v563 = vld [vmem:[%s307 + $0x5c8] sm:$0xff]
        %v564 = vld [vmem:[%s307 + $0x5d0] sm:$0xff]
        %v565 = vld [vmem:[%s307 + $0x5d8] sm:$0xff]
        %v566 = vld [vmem:[%s307 + $0x5e0] sm:$0xff]
        %v567 = vld [vmem:[%s307 + $0x5e8] sm:$0xff]
        %v568 = vld [vmem:[%s307 + $0x5f0] sm:$0xff]
        %v569 = vld [vmem:[%s307 + $0x5f8] sm:$0xff]
        %v570 = vld [vmem:[%s307 + $0x600] sm:$0xff]
        %v571 = vld [vmem:[%s307 + $0x608] sm:$0xff]
        %v572 = vld [vmem:[%s307 + $0x610] sm:$0xff]
        %v573 = vld [vmem:[%s307 + $0x618] sm:$0xff]
        %v574 = vld [vmem:[%s307 + $0x620] sm:$0xff]
        %v575 = vld [vmem:[%s307 + $0x628] sm:$0xff]
        %v576 = vld [vmem:[%s307 + $0x630] sm:$0xff]
        %v577 = vld [vmem:[%s307 + $0x638] sm:$0xff]
        %v578 = vld [vmem:[%s307 + $0x640] sm:$0xff]
        %v579 = vld [vmem:[%s307 + $0x648] sm:$0xff]
        %v580 = vld [vmem:[%s307 + $0x650] sm:$0xff]
        %v581 = vld [vmem:[%s307 + $0x658] sm:$0xff]
        %v582 = vld [vmem:[%s307 + $0x660] sm:$0xff]
        %v583 = vld [vmem:[%s307 + $0x668] sm:$0xff]
        %v584 = vld [vmem:[%s307 + $0x670] sm:$0xff]
        %v585 = vld [vmem:[%s307 + $0x678] sm:$0xff]
        %v586 = vld [vmem:[%s307 + $0x680] sm:$0xff]
        %v587 = vld [vmem:[%s307 + $0x688] sm:$0xff]
        %v588 = vld [vmem:[%s307 + $0x690] sm:$0xff]
        %v589 = vld [vmem:[%s307 + $0x698] sm:$0xff]
        %v590 = vld [vmem:[%s307 + $0x6a0] sm:$0xff]
        %v591 = vld [vmem:[%s307 + $0x6a8] sm:$0xff]
        %v592 = vld [vmem:[%s307 + $0x6b0] sm:$0xff]
        %v593 = vld [vmem:[%s307 + $0x6b8] sm:$0xff]
        %v594 = vld [vmem:[%s307 + $0x6c0] sm:$0xff]
        %v595 = vld [vmem:[%s307 + $0x6c8] sm:$0xff]
        %v596 = vld [vmem:[%s307 + $0x6d0] sm:$0xff]
        %v597 = vld [vmem:[%s307 + $0x6d8] sm:$0xff]
        %v598 = vld [vmem:[%s307 + $0x6e0] sm:$0xff]
        %v599 = vld [vmem:[%s307 + $0x6e8] sm:$0xff]
        %v600 = vld [vmem:[%s307 + $0x6f0] sm:$0xff]
        %v601 = vld [vmem:[%s307 + $0x6f8] sm:$0xff]
        %v602 = vld [vmem:[%s307 + $0x700] sm:$0xff]
        %v603 = vld [vmem:[%s307 + $0x708] sm:$0xff]
        %v604 = vld [vmem:[%s307 + $0x710] sm:$0xff]
        %v605 = vld [vmem:[%s307 + $0x718] sm:$0xff]
        %v606 = vld [vmem:[%s307 + $0x720] sm:$0xff]
        %v607 = vld [vmem:[%s307 + $0x728] sm:$0xff]
        %v608 = vld [vmem:[%s307 + $0x730] sm:$0xff]
        %v609 = vld [vmem:[%s307 + $0x738] sm:$0xff]
        %v610 = vld [vmem:[%s307 + $0x740] sm:$0xff]
        %v611 = vld [vmem:[%s307 + $0x748] sm:$0xff]
        %v612 = vld [vmem:[%s307 + $0x750] sm:$0xff]
        %v613 = vld [vmem:[%s307 + $0x758] sm:$0xff]
        %v614 = vld [vmem:[%s307 + $0x760] sm:$0xff]
        %v615 = vld [vmem:[%s307 + $0x768] sm:$0xff]
        %v616 = vld [vmem:[%s307 + $0x770] sm:$0xff]
        %v617 = vld [vmem:[%s307 + $0x778] sm:$0xff]
        %v618 = vld [vmem:[%s307 + $0x780] sm:$0xff]
        %v619 = vld [vmem:[%s307 + $0x788] sm:$0xff]
        %v620 = vld [vmem:[%s307 + $0x790] sm:$0xff]
        %v621 = vld [vmem:[%s307 + $0x798] sm:$0xff]
        %v622 = vld [vmem:[%s307 + $0x7a0] sm:$0xff]
        %v623 = vld [vmem:[%s307 + $0x7a8] sm:$0xff]
        %v624 = vld [vmem:[%s307 + $0x7b0] sm:$0xff]
        %v625 = vld [vmem:[%s307 + $0x7b8] sm:$0xff]
        %v626 = vld [vmem:[%s307 + $0x7c0] sm:$0xff]
        %v627 = vld [vmem:[%s307 + $0x7c8] sm:$0xff]
        %v628 = vld [vmem:[%s307 + $0x7d0] sm:$0xff]
        %v629 = vld [vmem:[%s307 + $0x7d8] sm:$0xff]
        %v630 = vld [vmem:[%s307 + $0x7e0] sm:$0xff]
        %v631 = vld [vmem:[%s307 + $0x7e8] sm:$0xff]
        %v632 = vld [vmem:[%s307 + $0x7f0] sm:$0xff]
        %v633 = vld [vmem:[%s307 + $0x7f8] sm:$0xff]
        %v634 = vld [vmem:[%s307 + $0x800] sm:$0xff]
        %v635 = vld [vmem:[%s307 + $0x808] sm:$0xff]
        %v636 = vld [vmem:[%s307 + $0x810] sm:$0xff]
        %v637 = vld [vmem:[%s307 + $0x818] sm:$0xff]
        %v638 = vld [vmem:[%s307 + $0x820] sm:$0xff]
        %v639 = vld [vmem:[%s307 + $0x828] sm:$0xff]
        %v640 = vld [vmem:[%s307 + $0x830] sm:$0xff]
        %v641 = vld [vmem:[%s307 + $0x838] sm:$0xff]
        %v642 = vld [vmem:[%s307 + $0x840] sm:$0xff]
        %v643 = vld [vmem:[%s307 + $0x848] sm:$0xff]
        %v644 = vld [vmem:[%s307 + $0x850] sm:$0xff]
        %v645 = vld [vmem:[%s307 + $0x858] sm:$0xff]
        %v646 = vld [vmem:[%s307 + $0x860] sm:$0xff]
        %v647 = vld [vmem:[%s307 + $0x868] sm:$0xff]
        %v648 = vld [vmem:[%s307 + $0x870] sm:$0xff]
        %v649 = vld [vmem:[%s307 + $0x878] sm:$0xff]
        %v650 = vld [vmem:[%s307 + $0x880] sm:$0xff]
        %v651 = vld [vmem:[%s307 + $0x888] sm:$0xff]
        %v652 = vld [vmem:[%s307 + $0x890] sm:$0xff]
        %v653 = vld [vmem:[%s307 + $0x898] sm:$0xff]
        %v654 = vld [vmem:[%s307 + $0x8a0] sm:$0xff]
        %v655 = vld [vmem:[%s307 + $0x8a8] sm:$0xff]
        %v656 = vld [vmem:[%s307 + $0x8b0] sm:$0xff]
        %v657 = vld [vmem:[%s307 + $0x8b8] sm:$0xff]
        %v658 = vld [vmem:[%s307 + $0x8c0] sm:$0xff]
        %v659 = vld [vmem:[%s307 + $0x8c8] sm:$0xff]
        %v660 = vld [vmem:[%s307 + $0x8d0] sm:$0xff]
        %v661 = vld [vmem:[%s307 + $0x8d8] sm:$0xff]
        %v662 = vld [vmem:[%s307 + $0x8e0] sm:$0xff]
        %v663 = vld [vmem:[%s307 + $0x8e8] sm:$0xff]
        %v664 = vld [vmem:[%s307 + $0x8f0] sm:$0xff]
        %v665 = vld [vmem:[%s307 + $0x8f8] sm:$0xff]
        %v666 = vld [vmem:[%s307 + $0x900] sm:$0xff]
        %v667 = vld [vmem:[%s307 + $0x908] sm:$0xff]
        %v668 = vld [vmem:[%s307 + $0x910] sm:$0xff]
        %v669 = vld [vmem:[%s307 + $0x918] sm:$0xff]
        %v670 = vld [vmem:[%s307 + $0x920] sm:$0xff]
        %v671 = vld [vmem:[%s307 + $0x928] sm:$0xff]
        %v672 = vld [vmem:[%s307 + $0x930] sm:$0xff]
        %v673 = vld [vmem:[%s307 + $0x938] sm:$0xff]
        %v674 = vld [vmem:[%s307 + $0x940] sm:$0xff]
        %v675 = vld [vmem:[%s307 + $0x948] sm:$0xff]
        %v676 = vld [vmem:[%s307 + $0x950] sm:$0xff]
        %v677 = vld [vmem:[%s307 + $0x958] sm:$0xff]
        %v678 = vld [vmem:[%s307 + $0x960] sm:$0xff]
        %v679 = vld [vmem:[%s307 + $0x968] sm:$0xff]
        %v680 = vld [vmem:[%s307 + $0x970] sm:$0xff]
        %v681 = vld [vmem:[%s307 + $0x978] sm:$0xff]
        %v682 = vld [vmem:[%s307 + $0x980] sm:$0xff]
        %v683 = vld [vmem:[%s307 + $0x988] sm:$0xff]
        %v684 = vld [vmem:[%s307 + $0x990] sm:$0xff]
        %v685 = vld [vmem:[%s307 + $0x998] sm:$0xff]
        %v686 = vld [vmem:[%s307 + $0x9a0] sm:$0xff]
        %v687 = vld [vmem:[%s307 + $0x9a8] sm:$0xff]
        %v688 = vld [vmem:[%s307 + $0x9b0] sm:$0xff]
        %v689 = vld [vmem:[%s307 + $0x9b8] sm:$0xff]
        %v690 = vld [vmem:[%s307 + $0x9c0] sm:$0xff]
        %v691 = vld [vmem:[%s307 + $0x9c8] sm:$0xff]
        %v692 = vld [vmem:[%s307 + $0x9d0] sm:$0xff]
        %v693 = vld [vmem:[%s307 + $0x9d8] sm:$0xff]
        %v694 = vld [vmem:[%s307 + $0x9e0] sm:$0xff]
        %v695 = vld [vmem:[%s307 + $0x9e8] sm:$0xff]
        %v696 = vld [vmem:[%s307 + $0x9f0] sm:$0xff]
        %v697 = vld [vmem:[%s307 + $0x9f8] sm:$0xff]
        %v698 = vld [vmem:[%s307 + $0xa00] sm:$0xff]
        %v699 = vld [vmem:[%s307 + $0xa08] sm:$0xff]
        %v700 = vld [vmem:[%s307 + $0xa10] sm:$0xff]
        %v701 = vld [vmem:[%s307 + $0xa18] sm:$0xff]
        %v702 = vld [vmem:[%s307 + $0xa20] sm:$0xff]
        %v703 = vld [vmem:[%s307 + $0xa28] sm:$0xff]
        %v704 = vld [vmem:[%s307 + $0xa30] sm:$0xff]
        %v705 = vld [vmem:[%s307 + $0xa38] sm:$0xff]
        %v706 = vld [vmem:[%s307 + $0xa40] sm:$0xff]
        %v707 = vld [vmem:[%s307 + $0xa48] sm:$0xff]
        %v708 = vld [vmem:[%s307 + $0xa50] sm:$0xff]
        %v709 = vld [vmem:[%s307 + $0xa58] sm:$0xff]
        %v710 = vld [vmem:[%s307 + $0xa60] sm:$0xff]
        %v711 = vld [vmem:[%s307 + $0xa68] sm:$0xff]
        %v712 = vld [vmem:[%s307 + $0xa70] sm:$0xff]
        %v713 = vld [vmem:[%s307 + $0xa78] sm:$0xff]
        %v714 = vld [vmem:[%s307 + $0xa80] sm:$0xff]
        %v715 = vld [vmem:[%s307 + $0xa88] sm:$0xff]
        %v716 = vld [vmem:[%s307 + $0xa90] sm:$0xff]
        %v717 = vld [vmem:[%s307 + $0xa98] sm:$0xff]
        %v718 = vld [vmem:[%s307 + $0xaa0] sm:$0xff]
        %v719 = vld [vmem:[%s307 + $0xaa8] sm:$0xff]
        %v720 = vld [vmem:[%s307 + $0xab0] sm:$0xff]
        %v721 = vld [vmem:[%s307 + $0xab8] sm:$0xff]
        %v722 = vld [vmem:[%s307 + $0xac0] sm:$0xff]
        %v723 = vld [vmem:[%s307 + $0xac8] sm:$0xff]
        %v724 = vld [vmem:[%s307 + $0xad0] sm:$0xff]
        %v725 = vld [vmem:[%s307 + $0xad8] sm:$0xff]
        %v726 = vld [vmem:[%s307 + $0xae0] sm:$0xff]
        %v727 = vld [vmem:[%s307 + $0xae8] sm:$0xff]
        %v728 = vld [vmem:[%s307 + $0xaf0] sm:$0xff]
        %v729 = vld [vmem:[%s307 + $0xaf8] sm:$0xff]
        %v730 = vld [vmem:[%s307 + $0xb00] sm:$0xff]
        %v731 = vld [vmem:[%s307 + $0xb08] sm:$0xff]
        %v732 = vld [vmem:[%s307 + $0xb10] sm:$0xff]
        %v733 = vld [vmem:[%s307 + $0xb18] sm:$0xff]
        %v734 = vld [vmem:[%s307 + $0xb20] sm:$0xff]
        %v735 = vld [vmem:[%s307 + $0xb28] sm:$0xff]
        %v736 = vld [vmem:[%s307 + $0xb30] sm:$0xff]
        %v737 = vld [vmem:[%s307 + $0xb38] sm:$0xff]
        %v738 = vld [vmem:[%s307 + $0xb40] sm:$0xff]
        %v739 = vld [vmem:[%s307 + $0xb48] sm:$0xff]
        %v740 = vld [vmem:[%s307 + $0xb50] sm:$0xff]
        %v741 = vld [vmem:[%s307 + $0xb58] sm:$0xff]
        %v742 = vld [vmem:[%s307 + $0xb60] sm:$0xff]
        %v743 = vld [vmem:[%s307 + $0xb68] sm:$0xff]
        %v744 = vld [vmem:[%s307 + $0xb70] sm:$0xff]
        %v745 = vld [vmem:[%s307 + $0xb78] sm:$0xff]
        %v746 = vld [vmem:[%s307 + $0xb80] sm:$0xff]
        %v747 = vld [vmem:[%s307 + $0xb88] sm:$0xff]
        %v748 = vld [vmem:[%s307 + $0xb90] sm:$0xff]
        %v749 = vld [vmem:[%s307 + $0xb98] sm:$0xff]
        %v750 = vld [vmem:[%s307 + $0xba0] sm:$0xff]
        %v751 = vld [vmem:[%s307 + $0xba8] sm:$0xff]
        %v752 = vld [vmem:[%s307 + $0xbb0] sm:$0xff]
        %v753 = vld [vmem:[%s307 + $0xbb8] sm:$0xff]
        %v754 = vld [vmem:[%s307 + $0xbc0] sm:$0xff]
        %v755 = vld [vmem:[%s307 + $0xbc8] sm:$0xff]
        %v756 = vld [vmem:[%s307 + $0xbd0] sm:$0xff]
        %v757 = vld [vmem:[%s307 + $0xbd8] sm:$0xff]
        %v758 = vld [vmem:[%s307 + $0xbe0] sm:$0xff]
        %v759 = vld [vmem:[%s307 + $0xbe8] sm:$0xff]
        %v760 = vld [vmem:[%s307 + $0xbf0] sm:$0xff]
        %v761 = vld [vmem:[%s307 + $0xbf8] sm:$0xff]
        %v762 = vld [vmem:[%s307 + $0xc00] sm:$0xff]
        %v763 = vld [vmem:[%s307 + $0xc08] sm:$0xff]
        %v764 = vld [vmem:[%s307 + $0xc10] sm:$0xff]
        %v765 = vld [vmem:[%s307 + $0xc18] sm:$0xff]
        %v766 = vld [vmem:[%s307 + $0xc20] sm:$0xff]
        %v767 = vld [vmem:[%s307 + $0xc28] sm:$0xff]
        %v768 = vld [vmem:[%s307 + $0xc30] sm:$0xff]
        %v769 = vld [vmem:[%s307 + $0xc38] sm:$0xff]
        %v770 = vld [vmem:[%s307 + $0xc40] sm:$0xff]
        %v771 = vld [vmem:[%s307 + $0xc48] sm:$0xff]
        %v772 = vld [vmem:[%s307 + $0xc50] sm:$0xff]
        %v773 = vld [vmem:[%s307 + $0xc58] sm:$0xff]
        %v774 = vld [vmem:[%s307 + $0xc60] sm:$0xff]
        %v775 = vld [vmem:[%s307 + $0xc68] sm:$0xff]
        %v776 = vld [vmem:[%s307 + $0xc70] sm:$0xff]
        %v777 = vld [vmem:[%s307 + $0xc78] sm:$0xff]
        %v778 = vld [vmem:[%s307 + $0xc80] sm:$0xff]
        %v779 = vld [vmem:[%s307 + $0xc88] sm:$0xff]
        %v780 = vld [vmem:[%s307 + $0xc90] sm:$0xff]
        %v781 = vld [vmem:[%s307 + $0xc98] sm:$0xff]
        %v782 = vld [vmem:[%s307 + $0xca0] sm:$0xff]
        %v783 = vld [vmem:[%s307 + $0xca8] sm:$0xff]
        %v784 = vld [vmem:[%s307 + $0xcb0] sm:$0xff]
        %v785 = vld [vmem:[%s307 + $0xcb8] sm:$0xff]
        %v786 = vld [vmem:[%s307 + $0xcc0] sm:$0xff]
        %v787 = vld [vmem:[%s307 + $0xcc8] sm:$0xff]
        %v788 = vld [vmem:[%s307 + $0xcd0] sm:$0xff]
        %v789 = vld [vmem:[%s307 + $0xcd8] sm:$0xff]
        %v790 = vld [vmem:[%s307 + $0xce0] sm:$0xff]
        %v791 = vld [vmem:[%s307 + $0xce8] sm:$0xff]
        %v792 = vld [vmem:[%s307 + $0xcf0] sm:$0xff]
        %v793 = vld [vmem:[%s307 + $0xcf8] sm:$0xff]
        %v794 = vld [vmem:[%s307 + $0xd00] sm:$0xff]
        %v795 = vld [vmem:[%s307 + $0xd08] sm:$0xff]
        %v796 = vld [vmem:[%s307 + $0xd10] sm:$0xff]
        %v797 = vld [vmem:[%s307 + $0xd18] sm:$0xff]
        %v798 = vld [vmem:[%s307 + $0xd20] sm:$0xff]
        %v799 = vld [vmem:[%s307 + $0xd28] sm:$0xff]
        %v800 = vld [vmem:[%s307 + $0xd30] sm:$0xff]
        %v801 = vld [vmem:[%s307 + $0xd38] sm:$0xff]
        %v802 = vld [vmem:[%s307 + $0xd40] sm:$0xff]
        %v803 = vld [vmem:[%s307 + $0xd48] sm:$0xff]
        %v804 = vld [vmem:[%s307 + $0xd50] sm:$0xff]
        %v805 = vld [vmem:[%s307 + $0xd58] sm:$0xff]
        %v806 = vld [vmem:[%s307 + $0xd60] sm:$0xff]
        %v807 = vld [vmem:[%s307 + $0xd68] sm:$0xff]
        %v808 = vld [vmem:[%s307 + $0xd70] sm:$0xff]
        %v809 = vld [vmem:[%s307 + $0xd78] sm:$0xff]
        %v810 = vld [vmem:[%s307 + $0xd80] sm:$0xff]
        %v811 = vld [vmem:[%s307 + $0xd88] sm:$0xff]
        %v812 = vld [vmem:[%s307 + $0xd90] sm:$0xff]
        %v813 = vld [vmem:[%s307 + $0xd98] sm:$0xff]
        %v814 = vld [vmem:[%s307 + $0xda0] sm:$0xff]
        %v815 = vld [vmem:[%s307 + $0xda8] sm:$0xff]
        %v816 = vld [vmem:[%s307 + $0xdb0] sm:$0xff]
        %v817 = vld [vmem:[%s307 + $0xdb8] sm:$0xff]
        %v818 = vld [vmem:[%s307 + $0xdc0] sm:$0xff]
        %v819 = vld [vmem:[%s307 + $0xdc8] sm:$0xff]
        %v820 = vld [vmem:[%s307 + $0xdd0] sm:$0xff]
        %v821 = vld [vmem:[%s307 + $0xdd8] sm:$0xff]
        %v822 = vld [vmem:[%s307 + $0xde0] sm:$0xff]
        %v823 = vld [vmem:[%s307 + $0xde8] sm:$0xff]
        %v824 = vld [vmem:[%s307 + $0xdf0] sm:$0xff]
        %v825 = vld [vmem:[%s307 + $0xdf8] sm:$0xff]
        %v826 = vld [vmem:[%s307 + $0xe00] sm:$0xff]
        %v827 = vld [vmem:[%s307 + $0xe08] sm:$0xff]
        %v828 = vld [vmem:[%s307 + $0xe10] sm:$0xff]
        %v829 = vld [vmem:[%s307 + $0xe18] sm:$0xff]
        %v830 = vld [vmem:[%s307 + $0xe20] sm:$0xff]
        %v831 = vld [vmem:[%s307 + $0xe28] sm:$0xff]
        %v832 = vld [vmem:[%s307 + $0xe30] sm:$0xff]
        %v833 = vld [vmem:[%s307 + $0xe38] sm:$0xff]
        %v834 = vld [vmem:[%s307 + $0xe40] sm:$0xff]
        %v835 = vld [vmem:[%s307 + $0xe48] sm:$0xff]
        %v836 = vld [vmem:[%s307 + $0xe50] sm:$0xff]
        %v837 = vld [vmem:[%s307 + $0xe58] sm:$0xff]
        %v838 = vld [vmem:[%s307 + $0xe60] sm:$0xff]
        %v839 = vld [vmem:[%s307 + $0xe68] sm:$0xff]
        %v840 = vld [vmem:[%s307 + $0xe70] sm:$0xff]
        %v841 = vld [vmem:[%s307 + $0xe78] sm:$0xff]
        %v842 = vld [vmem:[%s307 + $0xe80] sm:$0xff]
        %v843 = vld [vmem:[%s307 + $0xe88] sm:$0xff]
        %v844 = vld [vmem:[%s307 + $0xe90] sm:$0xff]
        %v845 = vld [vmem:[%s307 + $0xe98] sm:$0xff]
        %v846 = vld [vmem:[%s307 + $0xea0] sm:$0xff]
        %v847 = vld [vmem:[%s307 + $0xea8] sm:$0xff]
        %v848 = vld [vmem:[%s307 + $0xeb0] sm:$0xff]
        %v849 = vld [vmem:[%s307 + $0xeb8] sm:$0xff]
        %v850 = vld [vmem:[%s307 + $0xec0] sm:$0xff]
        %v851 = vld [vmem:[%s307 + $0xec8] sm:$0xff]
        %v852 = vld [vmem:[%s307 + $0xed0] sm:$0xff]
        %v853 = vld [vmem:[%s307 + $0xed8] sm:$0xff]
        %v854 = vld [vmem:[%s307 + $0xee0] sm:$0xff]
        %v855 = vld [vmem:[%s307 + $0xee8] sm:$0xff]
        %v856 = vld [vmem:[%s307 + $0xef0] sm:$0xff]
        %v857 = vld [vmem:[%s307 + $0xef8] sm:$0xff]
        %v858 = vld [vmem:[%s307 + $0xf00] sm:$0xff]
        %v859 = vld [vmem:[%s307 + $0xf08] sm:$0xff]
        %v860 = vld [vmem:[%s307 + $0xf10] sm:$0xff]
        %v861 = vld [vmem:[%s307 + $0xf18] sm:$0xff]
        %v862 = vld [vmem:[%s307 + $0xf20] sm:$0xff]
        %v863 = vld [vmem:[%s307 + $0xf28] sm:$0xff]
        %v864 = vld [vmem:[%s307 + $0xf30] sm:$0xff]
        %v865 = vld [vmem:[%s307 + $0xf38] sm:$0xff]
        %v866 = vld [vmem:[%s307 + $0xf40] sm:$0xff]
        %v867 = vld [vmem:[%s307 + $0xf48] sm:$0xff]
        %v868 = vld [vmem:[%s307 + $0xf50] sm:$0xff]
        %v869 = vld [vmem:[%s307 + $0xf58] sm:$0xff]
        %v870 = vld [vmem:[%s307 + $0xf60] sm:$0xff]
        %v871 = vld [vmem:[%s307 + $0xf68] sm:$0xff]
        %v872 = vld [vmem:[%s307 + $0xf70] sm:$0xff]
        %v873 = vld [vmem:[%s307 + $0xf78] sm:$0xff]
        %v874 = vld [vmem:[%s307 + $0xf80] sm:$0xff]
        %v875 = vld [vmem:[%s307 + $0xf88] sm:$0xff]
        %v876 = vld [vmem:[%s307 + $0xf90] sm:$0xff]
        %v877 = vld [vmem:[%s307 + $0xf98] sm:$0xff]
        %v878 = vld [vmem:[%s307 + $0xfa0] sm:$0xff]
        %v879 = vld [vmem:[%s307 + $0xfa8] sm:$0xff]
        %v880 = vld [vmem:[%s307 + $0xfb0] sm:$0xff]
        %v881 = vld [vmem:[%s307 + $0xfb8] sm:$0xff]
        %v882 = vld [vmem:[%s307 + $0xfc0] sm:$0xff]
        %v883 = vld [vmem:[%s307 + $0xfc8] sm:$0xff]
        %v884 = vld [vmem:[%s307 + $0xfd0] sm:$0xff]
        %v885 = vld [vmem:[%s307 + $0xfd8] sm:$0xff]
        %v886 = vld [vmem:[%s307 + $0xfe0] sm:$0xff]
        %v887 = vld [vmem:[%s307 + $0xfe8] sm:$0xff]
        %v888 = vld [vmem:[%s307 + $0xff0] sm:$0xff]
        %v889 = vld [vmem:[%s307 + $0xff8] sm:$0xff]
        %v890 = vld [vmem:[%s307 + $0x1000] sm:$0xff]
        %v891 = vld [vmem:[%s307 + $0x1008] sm:$0xff]
        %v892 = vld [vmem:[%s307 + $0x1010] sm:$0xff]
        %v893 = vld [vmem:[%s307 + $0x1018] sm:$0xff]
        %v894 = vld [vmem:[%s307 + $0x1020] sm:$0xff]
        %v895 = vld [vmem:[%s307 + $0x1028] sm:$0xff]
        %v896 = vld [vmem:[%s307 + $0x1030] sm:$0xff]
        %v897 = vld [vmem:[%s307 + $0x1038] sm:$0xff]
        %v898 = vld [vmem:[%s307 + $0x1040] sm:$0xff]
        %v899 = vld [vmem:[%s307 + $0x1048] sm:$0xff]
        %v900 = vld [vmem:[%s307 + $0x1050] sm:$0xff]
        %v901 = vld [vmem:[%s307 + $0x1058] sm:$0xff]
        %v902 = vld [vmem:[%s307 + $0x1060] sm:$0xff]
        %v903 = vld [vmem:[%s307 + $0x1068] sm:$0xff]
        %v904 = vld [vmem:[%s307 + $0x1070] sm:$0xff]
        %v905 = vld [vmem:[%s307 + $0x1078] sm:$0xff]
        %v906 = vld [vmem:[%s307 + $0x1080] sm:$0xff]
        %v907 = vld [vmem:[%s307 + $0x1088] sm:$0xff]
        %v908 = vld [vmem:[%s307 + $0x1090] sm:$0xff]
        %v909 = vld [vmem:[%s307 + $0x1098] sm:$0xff]
        %v910 = vld [vmem:[%s307 + $0x10a0] sm:$0xff]
        %v911 = vld [vmem:[%s307 + $0x10a8] sm:$0xff]
        %v912 = vld [vmem:[%s307 + $0x10b0] sm:$0xff]
        %v913 = vld [vmem:[%s307 + $0x10b8] sm:$0xff]
        %v914 = vld [vmem:[%s307 + $0x10c0] sm:$0xff]
        %v915 = vld [vmem:[%s307 + $0x10c8] sm:$0xff]
        %v916 = vld [vmem:[%s307 + $0x10d0] sm:$0xff]
        %v917 = vld [vmem:[%s307 + $0x10d8] sm:$0xff]
        %v918 = vld [vmem:[%s307 + $0x10e0] sm:$0xff]
        %v919 = vld [vmem:[%s307 + $0x10e8] sm:$0xff]
        %v920 = vld [vmem:[%s307 + $0x10f0] sm:$0xff]
        %v921 = vld [vmem:[%s307 + $0x10f8] sm:$0xff]
        %v922 = vld [vmem:[%s307 + $0x1100] sm:$0xff]
        %v923 = vld [vmem:[%s307 + $0x1108] sm:$0xff]
        %v924 = vld [vmem:[%s307 + $0x1110] sm:$0xff]
        %v925 = vld [vmem:[%s307 + $0x1118] sm:$0xff]
        %v926 = vld [vmem:[%s307 + $0x1120] sm:$0xff]
        %v927 = vld [vmem:[%s307 + $0x1128] sm:$0xff]
        %v928 = vld [vmem:[%s307 + $0x1130] sm:$0xff]
        %v929 = vld [vmem:[%s307 + $0x1138] sm:$0xff]
        %v930 = vld [vmem:[%s307 + $0x1140] sm:$0xff]
        %v931 = vld [vmem:[%s307 + $0x1148] sm:$0xff]
        %v932 = vld [vmem:[%s307 + $0x1150] sm:$0xff]
        %v933 = vld [vmem:[%s307 + $0x1158] sm:$0xff]
        %v934 = vld [vmem:[%s307 + $0x1160] sm:$0xff]
        %v935 = vld [vmem:[%s307 + $0x1168] sm:$0xff]
        %v936 = vld [vmem:[%s307 + $0x1170] sm:$0xff]
        %v937 = vld [vmem:[%s307 + $0x1178] sm:$0xff]
        %v938 = vld [vmem:[%s307 + $0x1180] sm:$0xff]
        %v939 = vld [vmem:[%s307 + $0x1188] sm:$0xff]
        %v940 = vld [vmem:[%s307 + $0x1190] sm:$0xff]
        %v941 = vld [vmem:[%s307 + $0x1198] sm:$0xff]
        %v942 = vld [vmem:[%s307 + $0x11a0] sm:$0xff]
        %v943 = vld [vmem:[%s307 + $0x11a8] sm:$0xff]
        %v944 = vld [vmem:[%s307 + $0x11b0] sm:$0xff]
        %v945 = vld [vmem:[%s307 + $0x11b8] sm:$0xff]
        %v946 = vld [vmem:[%s307 + $0x11c0] sm:$0xff]
        %v947 = vld [vmem:[%s307 + $0x11c8] sm:$0xff]
        %v948 = vld [vmem:[%s307 + $0x11d0] sm:$0xff]
        %v949 = vld [vmem:[%s307 + $0x11d8] sm:$0xff]
        %v950 = vld [vmem:[%s307 + $0x11e0] sm:$0xff]
        %v951 = vld [vmem:[%s307 + $0x11e8] sm:$0xff]
        %v952 = vld [vmem:[%s307 + $0x11f0] sm:$0xff]
        %v953 = vld [vmem:[%s307 + $0x11f8] sm:$0xff]
        %v954 = vld [vmem:[%s307 + $0x1200] sm:$0xff]
        %v955 = vld [vmem:[%s307 + $0x1208] sm:$0xff]
        %v956 = vld [vmem:[%s307 + $0x1210] sm:$0xff]
        %v957 = vld [vmem:[%s307 + $0x1218] sm:$0xff]
        %v958 = vld [vmem:[%s307 + $0x1220] sm:$0xff]
        %v959 = vld [vmem:[%s307 + $0x1228] sm:$0xff]
        %v960 = vld [vmem:[%s307 + $0x1230] sm:$0xff]
        %v961 = vld [vmem:[%s307 + $0x1238] sm:$0xff]
        %v962 = vld [vmem:[%s307 + $0x1240] sm:$0xff]
        %v963 = vld [vmem:[%s307 + $0x1248] sm:$0xff]
        %v964 = vld [vmem:[%s307 + $0x1250] sm:$0xff]
        %v965 = vld [vmem:[%s307 + $0x1258] sm:$0xff]
        %v966 = vld [vmem:[%s307 + $0x1260] sm:$0xff]
        %v967 = vld [vmem:[%s307 + $0x1268] sm:$0xff]
        %v968 = vld [vmem:[%s307 + $0x1270] sm:$0xff]
        %v969 = vld [vmem:[%s307 + $0x1278] sm:$0xff]
        %v970 = vld [vmem:[%s307 + $0x1280] sm:$0xff]
        %v971 = vld [vmem:[%s307 + $0x1288] sm:$0xff]
        %v972 = vld [vmem:[%s307 + $0x1290] sm:$0xff]
        %v973 = vld [vmem:[%s307 + $0x1298] sm:$0xff]
        %v974 = vld [vmem:[%s307 + $0x12a0] sm:$0xff]
        %v975 = vld [vmem:[%s307 + $0x12a8] sm:$0xff]
        %v976 = vld [vmem:[%s307 + $0x12b0] sm:$0xff]
        %v977 = vld [vmem:[%s307 + $0x12b8] sm:$0xff]
        %v978 = vld [vmem:[%s307 + $0x12c0] sm:$0xff]
        %v979 = vld [vmem:[%s307 + $0x12c8] sm:$0xff]
        %v980 = vld [vmem:[%s307 + $0x12d0] sm:$0xff]
        %v981 = vld [vmem:[%s307 + $0x12d8] sm:$0xff]
        %v982 = vld [vmem:[%s307 + $0x12e0] sm:$0xff]
        %v983 = vld [vmem:[%s307 + $0x12e8] sm:$0xff]
        %v984 = vld [vmem:[%s307 + $0x12f0] sm:$0xff]
        %v985 = vld [vmem:[%s307 + $0x12f8] sm:$0xff]
        %v986 = vld [vmem:[%s307 + $0x1300] sm:$0xff]
        %v987 = vld [vmem:[%s307 + $0x1308] sm:$0xff]
        %v988 = vld [vmem:[%s307 + $0x1310] sm:$0xff]
        %v989 = vld [vmem:[%s307 + $0x1318] sm:$0xff]
        %v990 = vld [vmem:[%s307 + $0x1320] sm:$0xff]
        %v991 = vld [vmem:[%s307 + $0x1328] sm:$0xff]
        %v992 = vld [vmem:[%s307 + $0x1330] sm:$0xff]
        %v993 = vld [vmem:[%s307 + $0x1338] sm:$0xff]
        %v994 = vld [vmem:[%s307 + $0x1340] sm:$0xff]
        %v995 = vld [vmem:[%s307 + $0x1348] sm:$0xff]
        %v996 = vld [vmem:[%s307 + $0x1350] sm:$0xff]
        %v997 = vld [vmem:[%s307 + $0x1358] sm:$0xff]
        %v998 = vld [vmem:[%s307 + $0x1360] sm:$0xff]
        %v999 = vld [vmem:[%s307 + $0x1368] sm:$0xff]
        %v1000 = vld [vmem:[%s307 + $0x1370] sm:$0xff]
        %v1001 = vld [vmem:[%s307 + $0x1378] sm:$0xff]
        %v1002 = vld [vmem:[%s307 + $0x1380] sm:$0xff]
        %v1003 = vld [vmem:[%s307 + $0x1388] sm:$0xff]
        %v1004 = vld [vmem:[%s307 + $0x1390] sm:$0xff]
        %v1005 = vld [vmem:[%s307 + $0x1398] sm:$0xff]
        %v1006 = vld [vmem:[%s307 + $0x13a0] sm:$0xff]
        %v1007 = vld [vmem:[%s307 + $0x13a8] sm:$0xff]
        %v1008 = vld [vmem:[%s307 + $0x13b0] sm:$0xff]
        %v1009 = vld [vmem:[%s307 + $0x13b8] sm:$0xff]
        %v1010 = vld [vmem:[%s307 + $0x13c0] sm:$0xff]
        %v1011 = vld [vmem:[%s307 + $0x13c8] sm:$0xff]
        %v1012 = vld [vmem:[%s307 + $0x13d0] sm:$0xff]
        %v1013 = vld [vmem:[%s307 + $0x13d8] sm:$0xff]
        %v1014 = vld [vmem:[%s307 + $0x13e0] sm:$0xff]
        %v1015 = vld [vmem:[%s307 + $0x13e8] sm:$0xff]
        %v1016 = vld [vmem:[%s307 + $0x13f0] sm:$0xff]
        %v1017 = vld [vmem:[%s307 + $0x13f8] sm:$0xff]
        %v1018 = vld [vmem:[%s307 + $0x1400] sm:$0xff]
        %v1019 = vld [vmem:[%s307 + $0x1408] sm:$0xff]
        %v1020 = vld [vmem:[%s307 + $0x1410] sm:$0xff]
        %v1021 = vld [vmem:[%s307 + $0x1418] sm:$0xff]
        %v1022 = vld [vmem:[%s307 + $0x1420] sm:$0xff]
        %v1023 = vld [vmem:[%s307 + $0x1428] sm:$0xff]
        %v1024 = vld [vmem:[%s307 + $0x1430] sm:$0xff]
        %v1025 = vld [vmem:[%s307 + $0x1438] sm:$0xff]
        %v1026 = vld [vmem:[%s307 + $0x1440] sm:$0xff]
        %v1027 = vld [vmem:[%s307 + $0x1448] sm:$0xff]
        %v1028 = vld [vmem:[%s307 + $0x1450] sm:$0xff]
        %v1029 = vld [vmem:[%s307 + $0x1458] sm:$0xff]
        %v1030 = vld [vmem:[%s307 + $0x1460] sm:$0xff]
        %v1031 = vld [vmem:[%s307 + $0x1468] sm:$0xff]
        %v1032 = vld [vmem:[%s307 + $0x1470] sm:$0xff]
        %v1033 = vld [vmem:[%s307 + $0x1478] sm:$0xff]
        %v1034 = vld [vmem:[%s307 + $0x1480] sm:$0xff]
        %v1035 = vld [vmem:[%s307 + $0x1488] sm:$0xff]
        %v1036 = vld [vmem:[%s307 + $0x1490] sm:$0xff]
        %v1037 = vld [vmem:[%s307 + $0x1498] sm:$0xff]
        %v1038 = vld [vmem:[%s307 + $0x14a0] sm:$0xff]
        %v1039 = vld [vmem:[%s307 + $0x14a8] sm:$0xff]
        %v1040 = vld [vmem:[%s307 + $0x14b0] sm:$0xff]
        %v1041 = vld [vmem:[%s307 + $0x14b8] sm:$0xff]
        %v1042 = vld [vmem:[%s307 + $0x14c0] sm:$0xff]
        %v1043 = vld [vmem:[%s307 + $0x14c8] sm:$0xff]
        %v1044 = vld [vmem:[%s307 + $0x14d0] sm:$0xff]
        %v1045 = vld [vmem:[%s307 + $0x14d8] sm:$0xff]
        %v1046 = vld [vmem:[%s307 + $0x14e0] sm:$0xff]
        %v1047 = vld [vmem:[%s307 + $0x14e8] sm:$0xff]
        %v1048 = vld [vmem:[%s307 + $0x14f0] sm:$0xff]
        %v1049 = vld [vmem:[%s307 + $0x14f8] sm:$0xff]
        %v1050 = vld [vmem:[%s307 + $0x1500] sm:$0xff]
        %v1051 = vld [vmem:[%s307 + $0x1508] sm:$0xff]
        %v1052 = vld [vmem:[%s307 + $0x1510] sm:$0xff]
        %v1053 = vld [vmem:[%s307 + $0x1518] sm:$0xff]
        %v1054 = vld [vmem:[%s307 + $0x1520] sm:$0xff]
        %v1055 = vld [vmem:[%s307 + $0x1528] sm:$0xff]
        %v1056 = vld [vmem:[%s307 + $0x1530] sm:$0xff]
        %v1057 = vld [vmem:[%s307 + $0x1538] sm:$0xff]
        %v1058 = vld [vmem:[%s307 + $0x1540] sm:$0xff]
        %v1059 = vld [vmem:[%s307 + $0x1548] sm:$0xff]
        %v1060 = vld [vmem:[%s307 + $0x1550] sm:$0xff]
        %v1061 = vld [vmem:[%s307 + $0x1558] sm:$0xff]
        %v1062 = vld [vmem:[%s307 + $0x1560] sm:$0xff]
        %v1063 = vld [vmem:[%s307 + $0x1568] sm:$0xff]
        %v1064 = vld [vmem:[%s307 + $0x1570] sm:$0xff]
        %v1065 = vld [vmem:[%s307 + $0x1578] sm:$0xff]
        %v1066 = vld [vmem:[%s307 + $0x1580] sm:$0xff]
        %v1067 = vld [vmem:[%s307 + $0x1588] sm:$0xff]
        %v1068 = vld [vmem:[%s307 + $0x1590] sm:$0xff]
        %v1069 = vld [vmem:[%s307 + $0x1598] sm:$0xff]
        %v1070 = vld [vmem:[%s307 + $0x15a0] sm:$0xff]
        %v1071 = vld [vmem:[%s307 + $0x15a8] sm:$0xff]
        %v1072 = vld [vmem:[%s307 + $0x15b0] sm:$0xff]
        %v1073 = vld [vmem:[%s307 + $0x15b8] sm:$0xff]
        %v1074 = vld [vmem:[%s307 + $0x15c0] sm:$0xff]
        %v1075 = vld [vmem:[%s307 + $0x15c8] sm:$0xff]
        %v1076 = vld [vmem:[%s307 + $0x15d0] sm:$0xff]
        %v1077 = vld [vmem:[%s307 + $0x15d8] sm:$0xff]
        %v1078 = vld [vmem:[%s307 + $0x15e0] sm:$0xff]
        %v1079 = vld [vmem:[%s307 + $0x15e8] sm:$0xff]
        %v1080 = vld [vmem:[%s307 + $0x15f0] sm:$0xff]
        %v1081 = vld [vmem:[%s307 + $0x15f8] sm:$0xff]
        %v1082 = vld [vmem:[%s307 + $0x1600] sm:$0xff]
        %v1083 = vld [vmem:[%s307 + $0x1608] sm:$0xff]
        %v1084 = vld [vmem:[%s307 + $0x1610] sm:$0xff]
        %v1085 = vld [vmem:[%s307 + $0x1618] sm:$0xff]
        %v1086 = vld [vmem:[%s307 + $0x1620] sm:$0xff]
        %v1087 = vld [vmem:[%s307 + $0x1628] sm:$0xff]
        %v1088 = vld [vmem:[%s307 + $0x1630] sm:$0xff]
        %v1089 = vld [vmem:[%s307 + $0x1638] sm:$0xff]
        %v1090 = vld [vmem:[%s307 + $0x1640] sm:$0xff]
        %v1091 = vld [vmem:[%s307 + $0x1648] sm:$0xff]
        %v1092 = vld [vmem:[%s307 + $0x1650] sm:$0xff]
        %v1093 = vld [vmem:[%s307 + $0x1658] sm:$0xff]
        %v1094 = vld [vmem:[%s307 + $0x1660] sm:$0xff]
        %v1095 = vld [vmem:[%s307 + $0x1668] sm:$0xff]
        %v1096 = vld [vmem:[%s307 + $0x1670] sm:$0xff]
        %v1097 = vld [vmem:[%s307 + $0x1678] sm:$0xff]
        %v1098 = vld [vmem:[%s307 + $0x1680] sm:$0xff]
        %v1099 = vld [vmem:[%s307 + $0x1688] sm:$0xff]
        %v1100 = vld [vmem:[%s307 + $0x1690] sm:$0xff]
        %v1101 = vld [vmem:[%s307 + $0x1698] sm:$0xff]
        %v1102 = vld [vmem:[%s307 + $0x16a0] sm:$0xff]
        %v1103 = vld [vmem:[%s307 + $0x16a8] sm:$0xff]
        %v1104 = vld [vmem:[%s307 + $0x16b0] sm:$0xff]
        %v1105 = vld [vmem:[%s307 + $0x16b8] sm:$0xff]
        %v1106 = vld [vmem:[%s307 + $0x16c0] sm:$0xff]
        %v1107 = vld [vmem:[%s307 + $0x16c8] sm:$0xff]
        %v1108 = vld [vmem:[%s307 + $0x16d0] sm:$0xff]
        %v1109 = vld [vmem:[%s307 + $0x16d8] sm:$0xff]
        %v1110 = vld [vmem:[%s307 + $0x16e0] sm:$0xff]
        %v1111 = vld [vmem:[%s307 + $0x16e8] sm:$0xff]
        %v1112 = vld [vmem:[%s307 + $0x16f0] sm:$0xff]
        %v1113 = vld [vmem:[%s307 + $0x16f8] sm:$0xff]
        %v1114 = vld [vmem:[%s307 + $0x1700] sm:$0xff]
        %v1115 = vld [vmem:[%s307 + $0x1708] sm:$0xff]
        %v1116 = vld [vmem:[%s307 + $0x1710] sm:$0xff]
        %v1117 = vld [vmem:[%s307 + $0x1718] sm:$0xff]
        %v1118 = vld [vmem:[%s307 + $0x1720] sm:$0xff]
        %v1119 = vld [vmem:[%s307 + $0x1728] sm:$0xff]
        %v1120 = vld [vmem:[%s307 + $0x1730] sm:$0xff]
        %v1121 = vld [vmem:[%s307 + $0x1738] sm:$0xff]
        %v1122 = vld [vmem:[%s307 + $0x1740] sm:$0xff]
        %v1123 = vld [vmem:[%s307 + $0x1748] sm:$0xff]
        %v1124 = vld [vmem:[%s307 + $0x1750] sm:$0xff]
        %v1125 = vld [vmem:[%s307 + $0x1758] sm:$0xff]
        %v1126 = vld [vmem:[%s307 + $0x1760] sm:$0xff]
        %v1127 = vld [vmem:[%s307 + $0x1768] sm:$0xff]
        %v1128 = vld [vmem:[%s307 + $0x1770] sm:$0xff]
        %v1129 = vld [vmem:[%s307 + $0x1778] sm:$0xff]
        %v1130 = vld [vmem:[%s307 + $0x1780] sm:$0xff]
        %v1131 = vld [vmem:[%s307 + $0x1788] sm:$0xff]
        %v1132 = vld [vmem:[%s307 + $0x1790] sm:$0xff]
        %v1133 = vld [vmem:[%s307 + $0x1798] sm:$0xff]
        %v1134 = vld [vmem:[%s307 + $0x17a0] sm:$0xff]
        %v1135 = vld [vmem:[%s307 + $0x17a8] sm:$0xff]
        %v1136 = vld [vmem:[%s307 + $0x17b0] sm:$0xff]
        %v1137 = vld [vmem:[%s307 + $0x17b8] sm:$0xff]
        %v1138 = vld [vmem:[%s307 + $0x17c0] sm:$0xff]
        %v1139 = vld [vmem:[%s307 + $0x17c8] sm:$0xff]
        %v1140 = vld [vmem:[%s307 + $0x17d0] sm:$0xff]
        %v1141 = vld [vmem:[%s307 + $0x17d8] sm:$0xff]
        %v1142 = vld [vmem:[%s307 + $0x17e0] sm:$0xff]
        %v1143 = vld [vmem:[%s307 + $0x17e8] sm:$0xff]
        %v1144 = vld [vmem:[%s307 + $0x17f0] sm:$0xff]
        %v1145 = vld [vmem:[%s307 + $0x17f8] sm:$0xff]
        %v1146 = vld [vmem:[%s307 + $0x1800] sm:$0xff]
        %v1147 = vld [vmem:[%s307 + $0x1808] sm:$0xff]
        %v1148 = vld [vmem:[%s307 + $0x1810] sm:$0xff]
        %v1149 = vld [vmem:[%s307 + $0x1818] sm:$0xff]
        %v1150 = vld [vmem:[%s307 + $0x1820] sm:$0xff]
        %v1151 = vld [vmem:[%s307 + $0x1828] sm:$0xff]
        %v1152 = vld [vmem:[%s307 + $0x1830] sm:$0xff]
        %v1153 = vld [vmem:[%s307 + $0x1838] sm:$0xff]
        %v1154 = vld [vmem:[%s307 + $0x1840] sm:$0xff]
        %v1155 = vld [vmem:[%s307 + $0x1848] sm:$0xff]
        %v1156 = vld [vmem:[%s307 + $0x1850] sm:$0xff]
        %v1157 = vld [vmem:[%s307 + $0x1858] sm:$0xff]
        %v1158 = vld [vmem:[%s307 + $0x1860] sm:$0xff]
        %v1159 = vld [vmem:[%s307 + $0x1868] sm:$0xff]
        %v1160 = vld [vmem:[%s307 + $0x1870] sm:$0xff]
        %v1161 = vld [vmem:[%s307 + $0x1878] sm:$0xff]
        %v1162 = vld [vmem:[%s307 + $0x1880] sm:$0xff]
        %v1163 = vld [vmem:[%s307 + $0x1888] sm:$0xff]
        %v1164 = vld [vmem:[%s307 + $0x1890] sm:$0xff]
        %v1165 = vld [vmem:[%s307 + $0x1898] sm:$0xff]
        %v1166 = vld [vmem:[%s307 + $0x18a0] sm:$0xff]
        %v1167 = vld [vmem:[%s307 + $0x18a8] sm:$0xff]
        %v1168 = vld [vmem:[%s307 + $0x18b0] sm:$0xff]
        %v1169 = vld [vmem:[%s307 + $0x18b8] sm:$0xff]
        %v1170 = vld [vmem:[%s307 + $0x18c0] sm:$0xff]
        %v1171 = vld [vmem:[%s307 + $0x18c8] sm:$0xff]
        %v1172 = vld [vmem:[%s307 + $0x18d0] sm:$0xff]
        %v1173 = vld [vmem:[%s307 + $0x18d8] sm:$0xff]
        %v1174 = vld [vmem:[%s307 + $0x18e0] sm:$0xff]
        %v1175 = vld [vmem:[%s307 + $0x18e8] sm:$0xff]
        %v1176 = vld [vmem:[%s307 + $0x18f0] sm:$0xff]
        %v1177 = vld [vmem:[%s307 + $0x18f8] sm:$0xff]
        %v1178 = vld [vmem:[%s307 + $0x1900] sm:$0xff]
        %v1179 = vld [vmem:[%s307 + $0x1908] sm:$0xff]
        %v1180 = vld [vmem:[%s307 + $0x1910] sm:$0xff]
        %v1181 = vld [vmem:[%s307 + $0x1918] sm:$0xff]
        %v1182 = vld [vmem:[%s307 + $0x1920] sm:$0xff]
        %v1183 = vld [vmem:[%s307 + $0x1928] sm:$0xff]
        %v1184 = vld [vmem:[%s307 + $0x1930] sm:$0xff]
        %v1185 = vld [vmem:[%s307 + $0x1938] sm:$0xff]
        %v1186 = vld [vmem:[%s307 + $0x1940] sm:$0xff]
        %v1187 = vld [vmem:[%s307 + $0x1948] sm:$0xff]
        %v1188 = vld [vmem:[%s307 + $0x1950] sm:$0xff]
        %v1189 = vld [vmem:[%s307 + $0x1958] sm:$0xff]
        %v1190 = vld [vmem:[%s307 + $0x1960] sm:$0xff]
        %v1191 = vld [vmem:[%s307 + $0x1968] sm:$0xff]
        %v1192 = vld [vmem:[%s307 + $0x1970] sm:$0xff]
        %v1193 = vld [vmem:[%s307 + $0x1978] sm:$0xff]
        %v1194 = vld [vmem:[%s307 + $0x1980] sm:$0xff]
        %v1195 = vld [vmem:[%s307 + $0x1988] sm:$0xff]
        %v1196 = vld [vmem:[%s307 + $0x1990] sm:$0xff]
        %v1197 = vld [vmem:[%s307 + $0x1998] sm:$0xff]
        %v1198 = vld [vmem:[%s307 + $0x19a0] sm:$0xff]
        %v1199 = vld [vmem:[%s307 + $0x19a8] sm:$0xff]
        %v1200 = vld [vmem:[%s307 + $0x19b0] sm:$0xff]
        %v1201 = vld [vmem:[%s307 + $0x19b8] sm:$0xff]
        %v1202 = vld [vmem:[%s307 + $0x19c0] sm:$0xff]
        %v1203 = vld [vmem:[%s307 + $0x19c8] sm:$0xff]
        %v1204 = vld [vmem:[%s307 + $0x19d0] sm:$0xff]
        %v1205 = vld [vmem:[%s307 + $0x19d8] sm:$0xff]
        %v1206 = vld [vmem:[%s307 + $0x19e0] sm:$0xff]
        %v1207 = vld [vmem:[%s307 + $0x19e8] sm:$0xff]
        %v1208 = vld [vmem:[%s307 + $0x19f0] sm:$0xff]
        %v1209 = vld [vmem:[%s307 + $0x19f8] sm:$0xff]
        %v1210 = vld [vmem:[%s307 + $0x1a00] sm:$0xff]
        %v1211 = vld [vmem:[%s307 + $0x1a08] sm:$0xff]
        %v1212 = vld [vmem:[%s307 + $0x1a10] sm:$0xff]
        %v1213 = vld [vmem:[%s307 + $0x1a18] sm:$0xff]
        %v1214 = vld [vmem:[%s307 + $0x1a20] sm:$0xff]
        %v1215 = vld [vmem:[%s307 + $0x1a28] sm:$0xff]
        %v1216 = vld [vmem:[%s307 + $0x1a30] sm:$0xff]
        %v1217 = vld [vmem:[%s307 + $0x1a38] sm:$0xff]
        %v1218 = vld [vmem:[%s307 + $0x1a40] sm:$0xff]
        %v1219 = vld [vmem:[%s307 + $0x1a48] sm:$0xff]
        %v1220 = vld [vmem:[%s307 + $0x1a50] sm:$0xff]
        %v1221 = vld [vmem:[%s307 + $0x1a58] sm:$0xff]
        %v1222 = vld [vmem:[%s307 + $0x1a60] sm:$0xff]
        %v1223 = vld [vmem:[%s307 + $0x1a68] sm:$0xff]
        %v1224 = vld [vmem:[%s307 + $0x1a70] sm:$0xff]
        %v1225 = vld [vmem:[%s307 + $0x1a78] sm:$0xff]
        %v1226 = vld [vmem:[%s307 + $0x1a80] sm:$0xff]
        %v1227 = vld [vmem:[%s307 + $0x1a88] sm:$0xff]
        %v1228 = vld [vmem:[%s307 + $0x1a90] sm:$0xff]
        %v1229 = vld [vmem:[%s307 + $0x1a98] sm:$0xff]
        %v1230 = vld [vmem:[%s307 + $0x1aa0] sm:$0xff]
        %v1231 = vld [vmem:[%s307 + $0x1aa8] sm:$0xff]
        %v1232 = vld [vmem:[%s307 + $0x1ab0] sm:$0xff]
        %v1233 = vld [vmem:[%s307 + $0x1ab8] sm:$0xff]
        %v1234 = vld [vmem:[%s307 + $0x1ac0] sm:$0xff]
        %v1235 = vld [vmem:[%s307 + $0x1ac8] sm:$0xff]
        %v1236 = vld [vmem:[%s307 + $0x1ad0] sm:$0xff]
        %v1237 = vld [vmem:[%s307 + $0x1ad8] sm:$0xff]
        %v1238 = vld [vmem:[%s307 + $0x1ae0] sm:$0xff]
        %v1239 = vld [vmem:[%s307 + $0x1ae8] sm:$0xff]
        %v1240 = vld [vmem:[%s307 + $0x1af0] sm:$0xff]
        %v1241 = vld [vmem:[%s307 + $0x1af8] sm:$0xff]
        %v1242 = vld [vmem:[%s307 + $0x1b00] sm:$0xff]
        %v1243 = vld [vmem:[%s307 + $0x1b08] sm:$0xff]
        %v1244 = vld [vmem:[%s307 + $0x1b10] sm:$0xff]
        %v1245 = vld [vmem:[%s307 + $0x1b18] sm:$0xff]
        %v1246 = vld [vmem:[%s307 + $0x1b20] sm:$0xff]
        %v1247 = vld [vmem:[%s307 + $0x1b28] sm:$0xff]
        %v1248 = vld [vmem:[%s307 + $0x1b30] sm:$0xff]
        %v1249 = vld [vmem:[%s307 + $0x1b38] sm:$0xff]
        %v1250 = vld [vmem:[%s307 + $0x1b40] sm:$0xff]
        %v1251 = vld [vmem:[%s307 + $0x1b48] sm:$0xff]
        %v1252 = vld [vmem:[%s307 + $0x1b50] sm:$0xff]
        %v1253 = vld [vmem:[%s307 + $0x1b58] sm:$0xff]
        %v1254 = vld [vmem:[%s307 + $0x1b60] sm:$0xff]
        %v1255 = vld [vmem:[%s307 + $0x1b68] sm:$0xff]
        %v1256 = vld [vmem:[%s307 + $0x1b70] sm:$0xff]
        %v1257 = vld [vmem:[%s307 + $0x1b78] sm:$0xff]
        %v1258 = vld [vmem:[%s307 + $0x1b80] sm:$0xff]
        %v1259 = vld [vmem:[%s307 + $0x1b88] sm:$0xff]
        %v1260 = vld [vmem:[%s307 + $0x1b90] sm:$0xff]
        %v1261 = vld [vmem:[%s307 + $0x1b98] sm:$0xff]
        %v1262 = vld [vmem:[%s307 + $0x1ba0] sm:$0xff]
        %v1263 = vld [vmem:[%s307 + $0x1ba8] sm:$0xff]
        %v1264 = vld [vmem:[%s307 + $0x1bb0] sm:$0xff]
        %v1265 = vld [vmem:[%s307 + $0x1bb8] sm:$0xff]
        %v1266 = vld [vmem:[%s307 + $0x1bc0] sm:$0xff]
        %v1267 = vld [vmem:[%s307 + $0x1bc8] sm:$0xff]
        %v1268 = vld [vmem:[%s307 + $0x1bd0] sm:$0xff]
        %v1269 = vld [vmem:[%s307 + $0x1bd8] sm:$0xff]
        %v1270 = vld [vmem:[%s307 + $0x1be0] sm:$0xff]
        %v1271 = vld [vmem:[%s307 + $0x1be8] sm:$0xff]
        %v1272 = vld [vmem:[%s307 + $0x1bf0] sm:$0xff]
        %v1273 = vld [vmem:[%s307 + $0x1bf8] sm:$0xff]
        %v1274 = vld [vmem:[%s307 + $0x1c00] sm:$0xff]
        %v1275 = vld [vmem:[%s307 + $0x1c08] sm:$0xff]
        %v1276 = vld [vmem:[%s307 + $0x1c10] sm:$0xff]
        %v1277 = vld [vmem:[%s307 + $0x1c18] sm:$0xff]
        %v1278 = vld [vmem:[%s307 + $0x1c20] sm:$0xff]
        %v1279 = vld [vmem:[%s307 + $0x1c28] sm:$0xff]
        %v1280 = vld [vmem:[%s307 + $0x1c30] sm:$0xff]
        %v1281 = vld [vmem:[%s307 + $0x1c38] sm:$0xff]
        %v1282 = vld [vmem:[%s307 + $0x1c40] sm:$0xff]
        %v1283 = vld [vmem:[%s307 + $0x1c48] sm:$0xff]
        %v1284 = vld [vmem:[%s307 + $0x1c50] sm:$0xff]
        %v1285 = vld [vmem:[%s307 + $0x1c58] sm:$0xff]
        %v1286 = vld [vmem:[%s307 + $0x1c60] sm:$0xff]
        %v1287 = vld [vmem:[%s307 + $0x1c68] sm:$0xff]
        %v1288 = vld [vmem:[%s307 + $0x1c70] sm:$0xff]
        %v1289 = vld [vmem:[%s307 + $0x1c78] sm:$0xff]
        %v1290 = vld [vmem:[%s307 + $0x1c80] sm:$0xff]
        %v1291 = vld [vmem:[%s307 + $0x1c88] sm:$0xff]
        %v1292 = vld [vmem:[%s307 + $0x1c90] sm:$0xff]
        %v1293 = vld [vmem:[%s307 + $0x1c98] sm:$0xff]
        %v1294 = vld [vmem:[%s307 + $0x1ca0] sm:$0xff]
        %v1295 = vld [vmem:[%s307 + $0x1ca8] sm:$0xff]
        %v1296 = vld [vmem:[%s307 + $0x1cb0] sm:$0xff]
        %v1297 = vld [vmem:[%s307 + $0x1cb8] sm:$0xff]
        %v1298 = vld [vmem:[%s307 + $0x1cc0] sm:$0xff]
        %v1299 = vld [vmem:[%s307 + $0x1cc8] sm:$0xff]
        %v1300 = vld [vmem:[%s307 + $0x1cd0] sm:$0xff]
        %v1301 = vld [vmem:[%s307 + $0x1cd8] sm:$0xff]
        %v1302 = vld [vmem:[%s307 + $0x1ce0] sm:$0xff]
        %v1303 = vld [vmem:[%s307 + $0x1ce8] sm:$0xff]
        %v1304 = vld [vmem:[%s307 + $0x1cf0] sm:$0xff]
        %v1305 = vld [vmem:[%s307 + $0x1cf8] sm:$0xff]
        %v1306 = vld [vmem:[%s307 + $0x1d00] sm:$0xff]
        %v1307 = vld [vmem:[%s307 + $0x1d08] sm:$0xff]
        %v1308 = vld [vmem:[%s307 + $0x1d10] sm:$0xff]
        %v1309 = vld [vmem:[%s307 + $0x1d18] sm:$0xff]
        %v1310 = vld [vmem:[%s307 + $0x1d20] sm:$0xff]
        %v1311 = vld [vmem:[%s307 + $0x1d28] sm:$0xff]
        %v1312 = vld [vmem:[%s307 + $0x1d30] sm:$0xff]
        %v1313 = vld [vmem:[%s307 + $0x1d38] sm:$0xff]
        %v1314 = vld [vmem:[%s307 + $0x1d40] sm:$0xff]
        %v1315 = vld [vmem:[%s307 + $0x1d48] sm:$0xff]
        %v1316 = vld [vmem:[%s307 + $0x1d50] sm:$0xff]
        %v1317 = vld [vmem:[%s307 + $0x1d58] sm:$0xff]
        %v1318 = vld [vmem:[%s307 + $0x1d60] sm:$0xff]
        %v1319 = vld [vmem:[%s307 + $0x1d68] sm:$0xff]
        %v1320 = vld [vmem:[%s307 + $0x1d70] sm:$0xff]
        %v1321 = vld [vmem:[%s307 + $0x1d78] sm:$0xff]
        %v1322 = vld [vmem:[%s307 + $0x1d80] sm:$0xff]
        %v1323 = vld [vmem:[%s307 + $0x1d88] sm:$0xff]
        %v1324 = vld [vmem:[%s307 + $0x1d90] sm:$0xff]
        %v1325 = vld [vmem:[%s307 + $0x1d98] sm:$0xff]
        %v1326 = vld [vmem:[%s307 + $0x1da0] sm:$0xff]
        %v1327 = vld [vmem:[%s307 + $0x1da8] sm:$0xff]
        %v1328 = vld [vmem:[%s307 + $0x1db0] sm:$0xff]
        %v1329 = vld [vmem:[%s307 + $0x1db8] sm:$0xff]
        %v1330 = vld [vmem:[%s307 + $0x1dc0] sm:$0xff]
        %v1331 = vld [vmem:[%s307 + $0x1dc8] sm:$0xff]
        %v1332 = vld [vmem:[%s307 + $0x1dd0] sm:$0xff]
        %v1333 = vld [vmem:[%s307 + $0x1dd8] sm:$0xff]
        %v1334 = vld [vmem:[%s307 + $0x1de0] sm:$0xff]
        %v1335 = vld [vmem:[%s307 + $0x1de8] sm:$0xff]
        %v1336 = vld [vmem:[%s307 + $0x1df0] sm:$0xff]
        %v1337 = vld [vmem:[%s307 + $0x1df8] sm:$0xff]
        %v1338 = vld [vmem:[%s307 + $0x1e00] sm:$0xff]
        %v1339 = vld [vmem:[%s307 + $0x1e08] sm:$0xff]
        %v1340 = vld [vmem:[%s307 + $0x1e10] sm:$0xff]
        %v1341 = vld [vmem:[%s307 + $0x1e18] sm:$0xff]
        %v1342 = vld [vmem:[%s307 + $0x1e20] sm:$0xff]
        %v1343 = vld [vmem:[%s307 + $0x1e28] sm:$0xff]
        %v1344 = vld [vmem:[%s307 + $0x1e30] sm:$0xff]
        %v1345 = vld [vmem:[%s307 + $0x1e38] sm:$0xff]
        %v1346 = vld [vmem:[%s307 + $0x1e40] sm:$0xff]
        %v1347 = vld [vmem:[%s307 + $0x1e48] sm:$0xff]
        %v1348 = vld [vmem:[%s307 + $0x1e50] sm:$0xff]
        %v1349 = vld [vmem:[%s307 + $0x1e58] sm:$0xff]
        %v1350 = vld [vmem:[%s307 + $0x1e60] sm:$0xff]
        %v1351 = vld [vmem:[%s307 + $0x1e68] sm:$0xff]
        %v1352 = vld [vmem:[%s307 + $0x1e70] sm:$0xff]
        %v1353 = vld [vmem:[%s307 + $0x1e78] sm:$0xff]
        %v1354 = vld [vmem:[%s307 + $0x1e80] sm:$0xff]
        %v1355 = vld [vmem:[%s307 + $0x1e88] sm:$0xff]
        %v1356 = vld [vmem:[%s307 + $0x1e90] sm:$0xff]
        %v1357 = vld [vmem:[%s307 + $0x1e98] sm:$0xff]
        %v1358 = vld [vmem:[%s307 + $0x1ea0] sm:$0xff]
        %v1359 = vld [vmem:[%s307 + $0x1ea8] sm:$0xff]
        %v1360 = vld [vmem:[%s307 + $0x1eb0] sm:$0xff]
        %v1361 = vld [vmem:[%s307 + $0x1eb8] sm:$0xff]
        %v1362 = vld [vmem:[%s307 + $0x1ec0] sm:$0xff]
        %v1363 = vld [vmem:[%s307 + $0x1ec8] sm:$0xff]
        %v1364 = vld [vmem:[%s307 + $0x1ed0] sm:$0xff]
        %v1365 = vld [vmem:[%s307 + $0x1ed8] sm:$0xff]
        %v1366 = vld [vmem:[%s307 + $0x1ee0] sm:$0xff]
        %v1367 = vld [vmem:[%s307 + $0x1ee8] sm:$0xff]
        %v1368 = vld [vmem:[%s307 + $0x1ef0] sm:$0xff]
        %v1369 = vld [vmem:[%s307 + $0x1ef8] sm:$0xff]
        %v1370 = vld [vmem:[%s307 + $0x1f00] sm:$0xff]
        %v1371 = vld [vmem:[%s307 + $0x1f08] sm:$0xff]
        %v1372 = vld [vmem:[%s307 + $0x1f10] sm:$0xff]
        %v1373 = vld [vmem:[%s307 + $0x1f18] sm:$0xff]
        %v1374 = vld [vmem:[%s307 + $0x1f20] sm:$0xff]
        %v1375 = vld [vmem:[%s307 + $0x1f28] sm:$0xff]
        %v1376 = vld [vmem:[%s307 + $0x1f30] sm:$0xff]
        %v1377 = vld [vmem:[%s307 + $0x1f38] sm:$0xff]
        %v1380 = vcombine.high %v376, %v376
        %v1382 = vunpack.c.l.s4 1983009808
        %v1383 = vunpack.c.0.s8 %v1382
        %v1384 = vlaneseq
        %v1385 = vshrl.u32 %v1384, 7
        %v1386 = vsub.s32 %v1383, %v1385
        %v1387 = vrot.slane %v376, %v1386
        %v1389 = vunpack.c.l.s4 1983009808
        %v1390 = vunpack.c.0.s8 %v1389
        %v1391 = vlaneseq
        %v1392 = vshrl.u32 %v1391, 7
        %v1393 = vsub.s32 %v1390, %v1392
        %v1394 = vrot.slane %v1380, %v1393
        %v1395 = vcombine.high %v1387, %v1387
        %v1396 = vcombine.high %v1394, %v1394
        %v1397 = vcombine.high %v377, %v377
        %v1399 = vunpack.c.l.s4 1983009808
        %v1400 = vunpack.c.0.s8 %v1399
        %v1401 = vlaneseq
        %v1402 = vshrl.u32 %v1401, 7
        %v1403 = vsub.s32 %v1400, %v1402
        %v1404 = vrot.slane %v377, %v1403
        %v1406 = vunpack.c.l.s4 1983009808
        %v1407 = vunpack.c.0.s8 %v1406
        %v1408 = vlaneseq
        %v1409 = vshrl.u32 %v1408, 7
        %v1410 = vsub.s32 %v1407, %v1409
        %v1411 = vrot.slane %v1397, %v1410
        %v1412 = vcombine.high %v1404, %v1404
        %v1413 = vcombine.high %v1411, %v1411
        %1422 = vmatprep.subr.mxu0 %v379
        %1423 = vmatpush1.xpose.msra.mxu0 %v378
        %1424 = vmatprep.subr.mxu0 %v387
        %1425 = vmatpush1.xpose.msra.mxu0 %v386
        %1426 = vmatprep.subr.mxu0 %v395
        %1427 = vmatpush1.xpose.msra.mxu0 %v394
        %1428 = vmatprep.subr.mxu0 %v403
        %1429 = vmatpush1.xpose.msra.mxu0 %v402
        %1430 = vmatprep.subr.mxu0 %v411
        %1431 = vmatpush1.xpose.msra.mxu0 %v410
        %1432 = vmatprep.subr.mxu0 %v419
        %1433 = vmatpush1.xpose.msra.mxu0 %v418
        %1434 = vmatprep.subr.mxu0 %v427
        %1435 = vmatpush1.xpose.msra.mxu0 %v426
        %1436 = vmatprep.subr.mxu0 %v435
        %1437 = vmatpush1.xpose.msra.mxu0 %v434
        %1438 = vmatprep.subr.mxu0 %v443
        %1439 = vmatpush1.xpose.msra.mxu0 %v442
        %1440 = vmatprep.subr.mxu0 %v451
        %1441 = vmatpush1.xpose.msra.mxu0 %v450
        %1442 = vmatprep.subr.mxu0 %v459
        %1443 = vmatpush1.xpose.msra.mxu0 %v458
        %1444 = vmatprep.subr.mxu0 %v467
        %1445 = vmatpush1.xpose.msra.mxu0 %v466
        %1446 = vmatprep.subr.mxu0 %v475
        %1447 = vmatpush1.xpose.msra.mxu0 %v474
        %1448 = vmatprep.subr.mxu0 %v483
        %1449 = vmatpush1.xpose.msra.mxu0 %v482
        %1450 = vmatprep.subr.mxu0 %v491
        %1451 = vmatpush1.xpose.msra.mxu0 %v490
        %1452 = vmatprep.subr.mxu0 %v499
        %1453 = vmatpush1.xpose.msra.mxu0 %v498
        %1454 = vmatprep.subr.mxu0 %v507
        %1455 = vmatpush1.xpose.msra.mxu0 %v506
        %1456 = vmatprep.subr.mxu0 %v515
        %1457 = vmatpush1.xpose.msra.mxu0 %v514
        %1458 = vmatprep.subr.mxu0 %v523
        %1459 = vmatpush1.xpose.msra.mxu0 %v522
        %1460 = vmatprep.subr.mxu0 %v531
        %1461 = vmatpush1.xpose.msra.mxu0 %v530
        %1462 = vmatprep.subr.mxu0 %v539
        %1463 = vmatpush1.xpose.msra.mxu0 %v538
        %1464 = vmatprep.subr.mxu0 %v547
        %1465 = vmatpush1.xpose.msra.mxu0 %v546
        %1466 = vmatprep.subr.mxu0 %v555
        %1467 = vmatpush1.xpose.msra.mxu0 %v554
        %1468 = vmatprep.subr.mxu0 %v563
        %1469 = vmatpush1.xpose.msra.mxu0 %v562
        %1470 = vmatprep.subr.mxu0 %v571
        %1471 = vmatpush1.xpose.msra.mxu0 %v570
        %1472 = vmatprep.subr.mxu0 %v579
        %1473 = vmatpush1.xpose.msra.mxu0 %v578
        %1474 = vmatprep.subr.mxu0 %v587
        %1475 = vmatpush1.xpose.msra.mxu0 %v586
        %1476 = vmatprep.subr.mxu0 %v595
        %1477 = vmatpush1.xpose.msra.mxu0 %v594
        %1478 = vmatprep.subr.mxu0 %v603
        %1479 = vmatpush1.xpose.msra.mxu0 %v602
        %1480 = vmatprep.subr.mxu0 %v611
        %1481 = vmatpush1.xpose.msra.mxu0 %v610
        %1482 = vmatprep.subr.mxu0 %v619
        %1483 = vmatpush1.xpose.msra.mxu0 %v618
        %1484 = vmatprep.subr.mxu0 %v627
        %1485 = vmatpush1.xpose.msra.mxu0 %v626
        %1486 = vmatprep.mubr.f32.mxu0 %v1395
        %1487 = vmatmul.mubr.f32.gmra.mrb[0].mxu0 %v1387
        %v1488 = vpop.f32.mrb[0].mxu0
        %v1489 = vadd.f32 0.0, %v1488
        %v1490 = vpop.f32.mrb[0].mxu0
        %v1491 = vadd.f32 0.0, %v1490
        %1492 = vdwg.mxu0
        %1493 = vmatprep.subr.mxu0 %v381
        %1494 = vmatpush1.xpose.msra.mxu0 %v380
        %1495 = vmatprep.subr.mxu0 %v389
        %1496 = vmatpush1.xpose.msra.mxu0 %v388
        %1497 = vmatprep.subr.mxu0 %v397
        %1498 = vmatpush1.xpose.msra.mxu0 %v396
        %1499 = vmatprep.subr.mxu0 %v405
        %1500 = vmatpush1.xpose.msra.mxu0 %v404
        %1501 = vmatprep.subr.mxu0 %v413
        %1502 = vmatpush1.xpose.msra.mxu0 %v412
        %1503 = vmatprep.subr.mxu0 %v421
        %1504 = vmatpush1.xpose.msra.mxu0 %v420
        %1505 = vmatprep.subr.mxu0 %v429
        %1506 = vmatpush1.xpose.msra.mxu0 %v428
        %1507 = vmatprep.subr.mxu0 %v437
        %1508 = vmatpush1.xpose.msra.mxu0 %v436
        %1509 = vmatprep.subr.mxu0 %v445
        %1510 = vmatpush1.xpose.msra.mxu0 %v444
        %1511 = vmatprep.subr.mxu0 %v453
        %1512 = vmatpush1.xpose.msra.mxu0 %v452
        %1513 = vmatprep.subr.mxu0 %v461
        %1514 = vmatpush1.xpose.msra.mxu0 %v460
        %1515 = vmatprep.subr.mxu0 %v469
        %1516 = vmatpush1.xpose.msra.mxu0 %v468
        %1517 = vmatprep.subr.mxu0 %v477
        %1518 = vmatpush1.xpose.msra.mxu0 %v476
        %1519 = vmatprep.subr.mxu0 %v485
        %1520 = vmatpush1.xpose.msra.mxu0 %v484
        %1521 = vmatprep.subr.mxu0 %v493
        %1522 = vmatpush1.xpose.msra.mxu0 %v492
        %1523 = vmatprep.subr.mxu0 %v501
        %1524 = vmatpush1.xpose.msra.mxu0 %v500
        %1525 = vmatprep.subr.mxu0 %v509
        %1526 = vmatpush1.xpose.msra.mxu0 %v508
        %1527 = vmatprep.subr.mxu0 %v517
        %1528 = vmatpush1.xpose.msra.mxu0 %v516
        %1529 = vmatprep.subr.mxu0 %v525
        %1530 = vmatpush1.xpose.msra.mxu0 %v524
        %1531 = vmatprep.subr.mxu0 %v533
        %1532 = vmatpush1.xpose.msra.mxu0 %v532
        %1533 = vmatprep.subr.mxu0 %v541
        %1534 = vmatpush1.xpose.msra.mxu0 %v540
        %1535 = vmatprep.subr.mxu0 %v549
        %1536 = vmatpush1.xpose.msra.mxu0 %v548
        %1537 = vmatprep.subr.mxu0 %v557
        %1538 = vmatpush1.xpose.msra.mxu0 %v556
        %1539 = vmatprep.subr.mxu0 %v565
        %1540 = vmatpush1.xpose.msra.mxu0 %v564
        %1541 = vmatprep.subr.mxu0 %v573
        %1542 = vmatpush1.xpose.msra.mxu0 %v572
        %1543 = vmatprep.subr.mxu0 %v581
        %1544 = vmatpush1.xpose.msra.mxu0 %v580
        %1545 = vmatprep.subr.mxu0 %v589
        %1546 = vmatpush1.xpose.msra.mxu0 %v588
        %1547 = vmatprep.subr.mxu0 %v597
        %1548 = vmatpush1.xpose.msra.mxu0 %v596
        %1549 = vmatprep.subr.mxu0 %v605
        %1550 = vmatpush1.xpose.msra.mxu0 %v604
        %1551 = vmatprep.subr.mxu0 %v613
        %1552 = vmatpush1.xpose.msra.mxu0 %v612
        %1553 = vmatprep.subr.mxu0 %v621
        %1554 = vmatpush1.xpose.msra.mxu0 %v620
        %1555 = vmatprep.subr.mxu0 %v629
        %1556 = vmatpush1.xpose.msra.mxu0 %v628
        %1557 = vmatprep.mubr.f32.mxu0 %v1396
        %1558 = vmatmul.mubr.f32.gmra.mrb[0].mxu0 %v1394
        %v1559 = vpop.f32.mrb[0].mxu0
        %v1560 = vadd.f32 %v1489, %v1559
        %v1561 = vpop.f32.mrb[0].mxu0
        %v1562 = vadd.f32 %v1491, %v1561
        %1563 = vdwg.mxu0
        %1564 = vmatprep.subr.mxu0 %v383
        %1565 = vmatpush1.xpose.msra.mxu0 %v382
        %1566 = vmatprep.subr.mxu0 %v391
        %1567 = vmatpush1.xpose.msra.mxu0 %v390
        %1568 = vmatprep.subr.mxu0 %v399
        %1569 = vmatpush1.xpose.msra.mxu0 %v398
        %1570 = vmatprep.subr.mxu0 %v407
        %1571 = vmatpush1.xpose.msra.mxu0 %v406
        %1572 = vmatprep.subr.mxu0 %v415
        %1573 = vmatpush1.xpose.msra.mxu0 %v414
        %1574 = vmatprep.subr.mxu0 %v423
        %1575 = vmatpush1.xpose.msra.mxu0 %v422
        %1576 = vmatprep.subr.mxu0 %v431
        %1577 = vmatpush1.xpose.msra.mxu0 %v430
        %1578 = vmatprep.subr.mxu0 %v439
        %1579 = vmatpush1.xpose.msra.mxu0 %v438
        %1580 = vmatprep.subr.mxu0 %v447
        %1581 = vmatpush1.xpose.msra.mxu0 %v446
        %1582 = vmatprep.subr.mxu0 %v455
        %1583 = vmatpush1.xpose.msra.mxu0 %v454
        %1584 = vmatprep.subr.mxu0 %v463
        %1585 = vmatpush1.xpose.msra.mxu0 %v462
        %1586 = vmatprep.subr.mxu0 %v471
        %1587 = vmatpush1.xpose.msra.mxu0 %v470
        %1588 = vmatprep.subr.mxu0 %v479
        %1589 = vmatpush1.xpose.msra.mxu0 %v478
        %1590 = vmatprep.subr.mxu0 %v487
        %1591 = vmatpush1.xpose.msra.mxu0 %v486
        %1592 = vmatprep.subr.mxu0 %v495
        %1593 = vmatpush1.xpose.msra.mxu0 %v494
        %1594 = vmatprep.subr.mxu0 %v503
        %1595 = vmatpush1.xpose.msra.mxu0 %v502
        %1596 = vmatprep.subr.mxu0 %v511
        %1597 = vmatpush1.xpose.msra.mxu0 %v510
        %1598 = vmatprep.subr.mxu0 %v519
        %1599 = vmatpush1.xpose.msra.mxu0 %v518
        %1600 = vmatprep.subr.mxu0 %v527
        %1601 = vmatpush1.xpose.msra.mxu0 %v526
        %1602 = vmatprep.subr.mxu0 %v535
        %1603 = vmatpush1.xpose.msra.mxu0 %v534
        %1604 = vmatprep.subr.mxu0 %v543
        %1605 = vmatpush1.xpose.msra.mxu0 %v542
        %1606 = vmatprep.subr.mxu0 %v551
        %1607 = vmatpush1.xpose.msra.mxu0 %v550
        %1608 = vmatprep.subr.mxu0 %v559
        %1609 = vmatpush1.xpose.msra.mxu0 %v558
        %1610 = vmatprep.subr.mxu0 %v567
        %1611 = vmatpush1.xpose.msra.mxu0 %v566
        %1612 = vmatprep.subr.mxu0 %v575
        %1613 = vmatpush1.xpose.msra.mxu0 %v574
        %1614 = vmatprep.subr.mxu0 %v583
        %1615 = vmatpush1.xpose.msra.mxu0 %v582
        %1616 = vmatprep.subr.mxu0 %v591
        %1617 = vmatpush1.xpose.msra.mxu0 %v590
        %1618 = vmatprep.subr.mxu0 %v599
        %1619 = vmatpush1.xpose.msra.mxu0 %v598
        %1620 = vmatprep.subr.mxu0 %v607
        %1621 = vmatpush1.xpose.msra.mxu0 %v606
        %1622 = vmatprep.subr.mxu0 %v615
        %1623 = vmatpush1.xpose.msra.mxu0 %v614
        %1624 = vmatprep.subr.mxu0 %v623
        %1625 = vmatpush1.xpose.msra.mxu0 %v622
        %1626 = vmatprep.subr.mxu0 %v631
        %1627 = vmatpush1.xpose.msra.mxu0 %v630
        %1628 = vmatprep.mubr.f32.mxu0 %v1412
        %1629 = vmatmul.mubr.f32.gmra.mrb[0].mxu0 %v1404
        %v1630 = vpop.f32.mrb[0].mxu0
        %v1631 = vadd.f32 %v1560, %v1630
        %v1632 = vpop.f32.mrb[0].mxu0
        %v1633 = vadd.f32 %v1562, %v1632
        %1634 = vdwg.mxu0
        %1635 = vmatprep.subr.mxu0 %v385
        %1636 = vmatpush1.xpose.msra.mxu0 %v384
        %1637 = vmatprep.subr.mxu0 %v393
        %1638 = vmatpush1.xpose.msra.mxu0 %v392
        %1639 = vmatprep.subr.mxu0 %v401
        %1640 = vmatpush1.xpose.msra.mxu0 %v400
        %1641 = vmatprep.subr.mxu0 %v409
        %1642 = vmatpush1.xpose.msra.mxu0 %v408
        %1643 = vmatprep.subr.mxu0 %v417
        %1644 = vmatpush1.xpose.msra.mxu0 %v416
        %1645 = vmatprep.subr.mxu0 %v425
        %1646 = vmatpush1.xpose.msra.mxu0 %v424
        %1647 = vmatprep.subr.mxu0 %v433
        %1648 = vmatpush1.xpose.msra.mxu0 %v432
        %1649 = vmatprep.subr.mxu0 %v441
        %1650 = vmatpush1.xpose.msra.mxu0 %v440
        %1651 = vmatprep.subr.mxu0 %v449
        %1652 = vmatpush1.xpose.msra.mxu0 %v448
        %1653 = vmatprep.subr.mxu0 %v457
        %1654 = vmatpush1.xpose.msra.mxu0 %v456
        %1655 = vmatprep.subr.mxu0 %v465
        %1656 = vmatpush1.xpose.msra.mxu0 %v464
        %1657 = vmatprep.subr.mxu0 %v473
        %1658 = vmatpush1.xpose.msra.mxu0 %v472
        %1659 = vmatprep.subr.mxu0 %v481
        %1660 = vmatpush1.xpose.msra.mxu0 %v480
        %1661 = vmatprep.subr.mxu0 %v489
        %1662 = vmatpush1.xpose.msra.mxu0 %v488
        %1663 = vmatprep.subr.mxu0 %v497
        %1664 = vmatpush1.xpose.msra.mxu0 %v496
        %1665 = vmatprep.subr.mxu0 %v505
        %1666 = vmatpush1.xpose.msra.mxu0 %v504
        %1667 = vmatprep.subr.mxu0 %v513
        %1668 = vmatpush1.xpose.msra.mxu0 %v512
        %1669 = vmatprep.subr.mxu0 %v521
        %1670 = vmatpush1.xpose.msra.mxu0 %v520
        %1671 = vmatprep.subr.mxu0 %v529
        %1672 = vmatpush1.xpose.msra.mxu0 %v528
        %1673 = vmatprep.subr.mxu0 %v537
        %1674 = vmatpush1.xpose.msra.mxu0 %v536
        %1675 = vmatprep.subr.mxu0 %v545
        %1676 = vmatpush1.xpose.msra.mxu0 %v544
        %1677 = vmatprep.subr.mxu0 %v553
        %1678 = vmatpush1.xpose.msra.mxu0 %v552
        %1679 = vmatprep.subr.mxu0 %v561
        %1680 = vmatpush1.xpose.msra.mxu0 %v560
        %1681 = vmatprep.subr.mxu0 %v569
        %1682 = vmatpush1.xpose.msra.mxu0 %v568
        %1683 = vmatprep.subr.mxu0 %v577
        %1684 = vmatpush1.xpose.msra.mxu0 %v576
        %1685 = vmatprep.subr.mxu0 %v585
        %1686 = vmatpush1.xpose.msra.mxu0 %v584
        %1687 = vmatprep.subr.mxu0 %v593
        %1688 = vmatpush1.xpose.msra.mxu0 %v592
        %1689 = vmatprep.subr.mxu0 %v601
        %1690 = vmatpush1.xpose.msra.mxu0 %v600
        %1691 = vmatprep.subr.mxu0 %v609
        %1692 = vmatpush1.xpose.msra.mxu0 %v608
        %1693 = vmatprep.subr.mxu0 %v617
        %1694 = vmatpush1.xpose.msra.mxu0 %v616
        %1695 = vmatprep.subr.mxu0 %v625
        %1696 = vmatpush1.xpose.msra.mxu0 %v624
        %1697 = vmatprep.subr.mxu0 %v633
        %1698 = vmatpush1.xpose.msra.mxu0 %v632
        %1699 = vmatprep.mubr.f32.mxu0 %v1413
        %1700 = vmatmul.mubr.f32.gmra.mrb[0].mxu0 %v1411
        %v1701 = vpop.f32.mrb[0].mxu0
        %v1702 = vadd.f32 %v1631, %v1701
        %v1703 = vpop.f32.mrb[0].mxu0
        %v1704 = vadd.f32 %v1633, %v1703
        %1705 = vdwg.mxu0
        %1706 = vmatprep.subr.mxu0 %v635
        %1707 = vmatpush1.xpose.msra.mxu0 %v634
        %1708 = vmatprep.subr.mxu0 %v643
        %1709 = vmatpush1.xpose.msra.mxu0 %v642
        %1710 = vmatprep.subr.mxu0 %v651
        %1711 = vmatpush1.xpose.msra.mxu0 %v650
        %1712 = vmatprep.subr.mxu0 %v659
        %1713 = vmatpush1.xpose.msra.mxu0 %v658
        %1714 = vmatprep.subr.mxu0 %v667
        %1715 = vmatpush1.xpose.msra.mxu0 %v666
        %1716 = vmatprep.subr.mxu0 %v675
        %1717 = vmatpush1.xpose.msra.mxu0 %v674
        %1718 = vmatprep.subr.mxu0 %v683
        %1719 = vmatpush1.xpose.msra.mxu0 %v682
        %1720 = vmatprep.subr.mxu0 %v691
        %1721 = vmatpush1.xpose.msra.mxu0 %v690
        %1722 = vmatprep.subr.mxu0 %v699
        %1723 = vmatpush1.xpose.msra.mxu0 %v698
        %1724 = vmatprep.subr.mxu0 %v707
        %1725 = vmatpush1.xpose.msra.mxu0 %v706
        %1726 = vmatprep.subr.mxu0 %v715
        %1727 = vmatpush1.xpose.msra.mxu0 %v714
        %1728 = vmatprep.subr.mxu0 %v723
        %1729 = vmatpush1.xpose.msra.mxu0 %v722
        %1730 = vmatprep.subr.mxu0 %v731
        %1731 = vmatpush1.xpose.msra.mxu0 %v730
        %1732 = vmatprep.subr.mxu0 %v739
        %1733 = vmatpush1.xpose.msra.mxu0 %v738
        %1734 = vmatprep.subr.mxu0 %v747
        %1735 = vmatpush1.xpose.msra.mxu0 %v746
        %1736 = vmatprep.subr.mxu0 %v755
        %1737 = vmatpush1.xpose.msra.mxu0 %v754
        %1738 = vmatprep.subr.mxu0 %v763
        %1739 = vmatpush1.xpose.msra.mxu0 %v762
        %1740 = vmatprep.subr.mxu0 %v771
        %1741 = vmatpush1.xpose.msra.mxu0 %v770
        %1742 = vmatprep.subr.mxu0 %v779
        %1743 = vmatpush1.xpose.msra.mxu0 %v778
        %1744 = vmatprep.subr.mxu0 %v787
        %1745 = vmatpush1.xpose.msra.mxu0 %v786
        %1746 = vmatprep.subr.mxu0 %v795
        %1747 = vmatpush1.xpose.msra.mxu0 %v794
        %1748 = vmatprep.subr.mxu0 %v803
        %1749 = vmatpush1.xpose.msra.mxu0 %v802
        %1750 = vmatprep.subr.mxu0 %v811
        %1751 = vmatpush1.xpose.msra.mxu0 %v810
        %1752 = vmatprep.subr.mxu0 %v819
        %1753 = vmatpush1.xpose.msra.mxu0 %v818
        %1754 = vmatprep.subr.mxu0 %v827
        %1755 = vmatpush1.xpose.msra.mxu0 %v826
        %1756 = vmatprep.subr.mxu0 %v835
        %1757 = vmatpush1.xpose.msra.mxu0 %v834
        %1758 = vmatprep.subr.mxu0 %v843
        %1759 = vmatpush1.xpose.msra.mxu0 %v842
        %1760 = vmatprep.subr.mxu0 %v851
        %1761 = vmatpush1.xpose.msra.mxu0 %v850
        %1762 = vmatprep.subr.mxu0 %v859
        %1763 = vmatpush1.xpose.msra.mxu0 %v858
        %1764 = vmatprep.subr.mxu0 %v867
        %1765 = vmatpush1.xpose.msra.mxu0 %v866
        %1766 = vmatprep.subr.mxu0 %v875
        %1767 = vmatpush1.xpose.msra.mxu0 %v874
        %1768 = vmatprep.subr.mxu0 %v883
        %1769 = vmatpush1.xpose.msra.mxu0 %v882
        %1770 = vmatprep.mubr.f32.mxu0 %v1395
        %1771 = vmatmul.mubr.f32.gmra.mrb[0].mxu0 %v1387
        %v1772 = vpop.f32.mrb[0].mxu0
        %v1773 = vadd.f32 0.0, %v1772
        %v1774 = vpop.f32.mrb[0].mxu0
        %v1775 = vadd.f32 0.0, %v1774
        %1776 = vdwg.mxu0
        %1777 = vmatprep.subr.mxu0 %v637
        %1778 = vmatpush1.xpose.msra.mxu0 %v636
        %1779 = vmatprep.subr.mxu0 %v645
        %1780 = vmatpush1.xpose.msra.mxu0 %v644
        %1781 = vmatprep.subr.mxu0 %v653
        %1782 = vmatpush1.xpose.msra.mxu0 %v652
        %1783 = vmatprep.subr.mxu0 %v661
        %1784 = vmatpush1.xpose.msra.mxu0 %v660
        %1785 = vmatprep.subr.mxu0 %v669
        %1786 = vmatpush1.xpose.msra.mxu0 %v668
        %1787 = vmatprep.subr.mxu0 %v677
        %1788 = vmatpush1.xpose.msra.mxu0 %v676
        %1789 = vmatprep.subr.mxu0 %v685
        %1790 = vmatpush1.xpose.msra.mxu0 %v684
        %1791 = vmatprep.subr.mxu0 %v693
        %1792 = vmatpush1.xpose.msra.mxu0 %v692
        %1793 = vmatprep.subr.mxu0 %v701
        %1794 = vmatpush1.xpose.msra.mxu0 %v700
        %1795 = vmatprep.subr.mxu0 %v709
        %1796 = vmatpush1.xpose.msra.mxu0 %v708
        %1797 = vmatprep.subr.mxu0 %v717
        %1798 = vmatpush1.xpose.msra.mxu0 %v716
        %1799 = vmatprep.subr.mxu0 %v725
        %1800 = vmatpush1.xpose.msra.mxu0 %v724
        %1801 = vmatprep.subr.mxu0 %v733
        %1802 = vmatpush1.xpose.msra.mxu0 %v732
        %1803 = vmatprep.subr.mxu0 %v741
        %1804 = vmatpush1.xpose.msra.mxu0 %v740
        %1805 = vmatprep.subr.mxu0 %v749
        %1806 = vmatpush1.xpose.msra.mxu0 %v748
        %1807 = vmatprep.subr.mxu0 %v757
        %1808 = vmatpush1.xpose.msra.mxu0 %v756
        %1809 = vmatprep.subr.mxu0 %v765
        %1810 = vmatpush1.xpose.msra.mxu0 %v764
        %1811 = vmatprep.subr.mxu0 %v773
        %1812 = vmatpush1.xpose.msra.mxu0 %v772
        %1813 = vmatprep.subr.mxu0 %v781
        %1814 = vmatpush1.xpose.msra.mxu0 %v780
        %1815 = vmatprep.subr.mxu0 %v789
        %1816 = vmatpush1.xpose.msra.mxu0 %v788
        %1817 = vmatprep.subr.mxu0 %v797
        %1818 = vmatpush1.xpose.msra.mxu0 %v796
        %1819 = vmatprep.subr.mxu0 %v805
        %1820 = vmatpush1.xpose.msra.mxu0 %v804
        %1821 = vmatprep.subr.mxu0 %v813
        %1822 = vmatpush1.xpose.msra.mxu0 %v812
        %1823 = vmatprep.subr.mxu0 %v821
        %1824 = vmatpush1.xpose.msra.mxu0 %v820
        %1825 = vmatprep.subr.mxu0 %v829
        %1826 = vmatpush1.xpose.msra.mxu0 %v828
        %1827 = vmatprep.subr.mxu0 %v837
        %1828 = vmatpush1.xpose.msra.mxu0 %v836
        %1829 = vmatprep.subr.mxu0 %v845
        %1830 = vmatpush1.xpose.msra.mxu0 %v844
        %1831 = vmatprep.subr.mxu0 %v853
        %1832 = vmatpush1.xpose.msra.mxu0 %v852
        %1833 = vmatprep.subr.mxu0 %v861
        %1834 = vmatpush1.xpose.msra.mxu0 %v860
        %1835 = vmatprep.subr.mxu0 %v869
        %1836 = vmatpush1.xpose.msra.mxu0 %v868
        %1837 = vmatprep.subr.mxu0 %v877
        %1838 = vmatpush1.xpose.msra.mxu0 %v876
        %1839 = vmatprep.subr.mxu0 %v885
        %1840 = vmatpush1.xpose.msra.mxu0 %v884
        %1841 = vmatprep.mubr.f32.mxu0 %v1396
        %1842 = vmatmul.mubr.f32.gmra.mrb[0].mxu0 %v1394
        %v1843 = vpop.f32.mrb[0].mxu0
        %v1844 = vadd.f32 %v1773, %v1843
        %v1845 = vpop.f32.mrb[0].mxu0
        %v1846 = vadd.f32 %v1775, %v1845
        %1847 = vdwg.mxu0
        %1848 = vmatprep.subr.mxu0 %v639
        %1849 = vmatpush1.xpose.msra.mxu0 %v638
        %1850 = vmatprep.subr.mxu0 %v647
        %1851 = vmatpush1.xpose.msra.mxu0 %v646
        %1852 = vmatprep.subr.mxu0 %v655
        %1853 = vmatpush1.xpose.msra.mxu0 %v654
        %1854 = vmatprep.subr.mxu0 %v663
        %1855 = vmatpush1.xpose.msra.mxu0 %v662
        %1856 = vmatprep.subr.mxu0 %v671
        %1857 = vmatpush1.xpose.msra.mxu0 %v670
        %1858 = vmatprep.subr.mxu0 %v679
        %1859 = vmatpush1.xpose.msra.mxu0 %v678
        %1860 = vmatprep.subr.mxu0 %v687
        %1861 = vmatpush1.xpose.msra.mxu0 %v686
        %1862 = vmatprep.subr.mxu0 %v695
        %1863 = vmatpush1.xpose.msra.mxu0 %v694
        %1864 = vmatprep.subr.mxu0 %v703
        %1865 = vmatpush1.xpose.msra.mxu0 %v702
        %1866 = vmatprep.subr.mxu0 %v711
        %1867 = vmatpush1.xpose.msra.mxu0 %v710
        %1868 = vmatprep.subr.mxu0 %v719
        %1869 = vmatpush1.xpose.msra.mxu0 %v718
        %1870 = vmatprep.subr.mxu0 %v727
        %1871 = vmatpush1.xpose.msra.mxu0 %v726
        %1872 = vmatprep.subr.mxu0 %v735
        %1873 = vmatpush1.xpose.msra.mxu0 %v734
        %1874 = vmatprep.subr.mxu0 %v743
        %1875 = vmatpush1.xpose.msra.mxu0 %v742
        %1876 = vmatprep.subr.mxu0 %v751
        %1877 = vmatpush1.xpose.msra.mxu0 %v750
        %1878 = vmatprep.subr.mxu0 %v759
        %1879 = vmatpush1.xpose.msra.mxu0 %v758
        %1880 = vmatprep.subr.mxu0 %v767
        %1881 = vmatpush1.xpose.msra.mxu0 %v766
        %1882 = vmatprep.subr.mxu0 %v775
        %1883 = vmatpush1.xpose.msra.mxu0 %v774
        %1884 = vmatprep.subr.mxu0 %v783
        %1885 = vmatpush1.xpose.msra.mxu0 %v782
        %1886 = vmatprep.subr.mxu0 %v791
        %1887 = vmatpush1.xpose.msra.mxu0 %v790
        %1888 = vmatprep.subr.mxu0 %v799
        %1889 = vmatpush1.xpose.msra.mxu0 %v798
        %1890 = vmatprep.subr.mxu0 %v807
        %1891 = vmatpush1.xpose.msra.mxu0 %v806
        %1892 = vmatprep.subr.mxu0 %v815
        %1893 = vmatpush1.xpose.msra.mxu0 %v814
        %1894 = vmatprep.subr.mxu0 %v823
        %1895 = vmatpush1.xpose.msra.mxu0 %v822
        %1896 = vmatprep.subr.mxu0 %v831
        %1897 = vmatpush1.xpose.msra.mxu0 %v830
        %1898 = vmatprep.subr.mxu0 %v839
        %1899 = vmatpush1.xpose.msra.mxu0 %v838
        %1900 = vmatprep.subr.mxu0 %v847
        %1901 = vmatpush1.xpose.msra.mxu0 %v846
        %1902 = vmatprep.subr.mxu0 %v855
        %1903 = vmatpush1.xpose.msra.mxu0 %v854
        %1904 = vmatprep.subr.mxu0 %v863
        %1905 = vmatpush1.xpose.msra.mxu0 %v862
        %1906 = vmatprep.subr.mxu0 %v871
        %1907 = vmatpush1.xpose.msra.mxu0 %v870
        %1908 = vmatprep.subr.mxu0 %v879
        %1909 = vmatpush1.xpose.msra.mxu0 %v878
        %1910 = vmatprep.subr.mxu0 %v887
        %1911 = vmatpush1.xpose.msra.mxu0 %v886
        %1912 = vmatprep.mubr.f32.mxu0 %v1412
        %1913 = vmatmul.mubr.f32.gmra.mrb[0].mxu0 %v1404
        %v1914 = vpop.f32.mrb[0].mxu0
        %v1915 = vadd.f32 %v1844, %v1914
        %v1916 = vpop.f32.mrb[0].mxu0
        %v1917 = vadd.f32 %v1846, %v1916
        %1918 = vdwg.mxu0
        %1919 = vmatprep.subr.mxu0 %v641
        %1920 = vmatpush1.xpose.msra.mxu0 %v640
        %1921 = vmatprep.subr.mxu0 %v649
        %1922 = vmatpush1.xpose.msra.mxu0 %v648
        %1923 = vmatprep.subr.mxu0 %v657
        %1924 = vmatpush1.xpose.msra.mxu0 %v656
        %1925 = vmatprep.subr.mxu0 %v665
        %1926 = vmatpush1.xpose.msra.mxu0 %v664
        %1927 = vmatprep.subr.mxu0 %v673
        %1928 = vmatpush1.xpose.msra.mxu0 %v672
        %1929 = vmatprep.subr.mxu0 %v681
        %1930 = vmatpush1.xpose.msra.mxu0 %v680
        %1931 = vmatprep.subr.mxu0 %v689
        %1932 = vmatpush1.xpose.msra.mxu0 %v688
        %1933 = vmatprep.subr.mxu0 %v697
        %1934 = vmatpush1.xpose.msra.mxu0 %v696
        %1935 = vmatprep.subr.mxu0 %v705
        %1936 = vmatpush1.xpose.msra.mxu0 %v704
        %1937 = vmatprep.subr.mxu0 %v713
        %1938 = vmatpush1.xpose.msra.mxu0 %v712
        %1939 = vmatprep.subr.mxu0 %v721
        %1940 = vmatpush1.xpose.msra.mxu0 %v720
        %1941 = vmatprep.subr.mxu0 %v729
        %1942 = vmatpush1.xpose.msra.mxu0 %v728
        %1943 = vmatprep.subr.mxu0 %v737
        %1944 = vmatpush1.xpose.msra.mxu0 %v736
        %1945 = vmatprep.subr.mxu0 %v745
        %1946 = vmatpush1.xpose.msra.mxu0 %v744
        %1947 = vmatprep.subr.mxu0 %v753
        %1948 = vmatpush1.xpose.msra.mxu0 %v752
        %1949 = vmatprep.subr.mxu0 %v761
        %1950 = vmatpush1.xpose.msra.mxu0 %v760
        %1951 = vmatprep.subr.mxu0 %v769
        %1952 = vmatpush1.xpose.msra.mxu0 %v768
        %1953 = vmatprep.subr.mxu0 %v777
        %1954 = vmatpush1.xpose.msra.mxu0 %v776
        %1955 = vmatprep.subr.mxu0 %v785
        %1956 = vmatpush1.xpose.msra.mxu0 %v784
        %1957 = vmatprep.subr.mxu0 %v793
        %1958 = vmatpush1.xpose.msra.mxu0 %v792
        %1959 = vmatprep.subr.mxu0 %v801
        %1960 = vmatpush1.xpose.msra.mxu0 %v800
        %1961 = vmatprep.subr.mxu0 %v809
        %1962 = vmatpush1.xpose.msra.mxu0 %v808
        %1963 = vmatprep.subr.mxu0 %v817
        %1964 = vmatpush1.xpose.msra.mxu0 %v816
        %1965 = vmatprep.subr.mxu0 %v825
        %1966 = vmatpush1.xpose.msra.mxu0 %v824
        %1967 = vmatprep.subr.mxu0 %v833
        %1968 = vmatpush1.xpose.msra.mxu0 %v832
        %1969 = vmatprep.subr.mxu0 %v841
        %1970 = vmatpush1.xpose.msra.mxu0 %v840
        %1971 = vmatprep.subr.mxu0 %v849
        %1972 = vmatpush1.xpose.msra.mxu0 %v848
        %1973 = vmatprep.subr.mxu0 %v857
        %1974 = vmatpush1.xpose.msra.mxu0 %v856
        %1975 = vmatprep.subr.mxu0 %v865
        %1976 = vmatpush1.xpose.msra.mxu0 %v864
        %1977 = vmatprep.subr.mxu0 %v873
        %1978 = vmatpush1.xpose.msra.mxu0 %v872
        %1979 = vmatprep.subr.mxu0 %v881
        %1980 = vmatpush1.xpose.msra.mxu0 %v880
        %1981 = vmatprep.subr.mxu0 %v889
        %1982 = vmatpush1.xpose.msra.mxu0 %v888
        %1983 = vmatprep.mubr.f32.mxu0 %v1413
        %1984 = vmatmul.mubr.f32.gmra.mrb[0].mxu0 %v1411
        %v1985 = vpop.f32.mrb[0].mxu0
        %v1986 = vadd.f32 %v1915, %v1985
        %v1987 = vpop.f32.mrb[0].mxu0
        %v1988 = vadd.f32 %v1917, %v1987
        %1989 = vdwg.mxu0
        %1990 = vmatprep.subr.mxu0 %v891
        %1991 = vmatpush1.xpose.msra.mxu0 %v890
        %1992 = vmatprep.subr.mxu0 %v899
        %1993 = vmatpush1.xpose.msra.mxu0 %v898
        %1994 = vmatprep.subr.mxu0 %v907
        %1995 = vmatpush1.xpose.msra.mxu0 %v906
        %1996 = vmatprep.subr.mxu0 %v915
        %1997 = vmatpush1.xpose.msra.mxu0 %v914
        %1998 = vmatprep.subr.mxu0 %v923
        %1999 = vmatpush1.xpose.msra.mxu0 %v922
        %2000 = vmatprep.subr.mxu0 %v931
        %2001 = vmatpush1.xpose.msra.mxu0 %v930
        %2002 = vmatprep.subr.mxu0 %v939
        %2003 = vmatpush1.xpose.msra.mxu0 %v938
        %2004 = vmatprep.subr.mxu0 %v947
        %2005 = vmatpush1.xpose.msra.mxu0 %v946
        %2006 = vmatprep.subr.mxu0 %v955
        %2007 = vmatpush1.xpose.msra.mxu0 %v954
        %2008 = vmatprep.subr.mxu0 %v963
        %2009 = vmatpush1.xpose.msra.mxu0 %v962
        %2010 = vmatprep.subr.mxu0 %v971
        %2011 = vmatpush1.xpose.msra.mxu0 %v970
        %2012 = vmatprep.subr.mxu0 %v979
        %2013 = vmatpush1.xpose.msra.mxu0 %v978
        %2014 = vmatprep.subr.mxu0 %v987
        %2015 = vmatpush1.xpose.msra.mxu0 %v986
        %2016 = vmatprep.subr.mxu0 %v995
        %2017 = vmatpush1.xpose.msra.mxu0 %v994
        %2018 = vmatprep.subr.mxu0 %v1003
        %2019 = vmatpush1.xpose.msra.mxu0 %v1002
        %2020 = vmatprep.subr.mxu0 %v1011
        %2021 = vmatpush1.xpose.msra.mxu0 %v1010
        %2022 = vmatprep.subr.mxu0 %v1019
        %2023 = vmatpush1.xpose.msra.mxu0 %v1018
        %2024 = vmatprep.subr.mxu0 %v1027
        %2025 = vmatpush1.xpose.msra.mxu0 %v1026
        %2026 = vmatprep.subr.mxu0 %v1035
        %2027 = vmatpush1.xpose.msra.mxu0 %v1034
        %2028 = vmatprep.subr.mxu0 %v1043
        %2029 = vmatpush1.xpose.msra.mxu0 %v1042
        %2030 = vmatprep.subr.mxu0 %v1051
        %2031 = vmatpush1.xpose.msra.mxu0 %v1050
        %2032 = vmatprep.subr.mxu0 %v1059
        %2033 = vmatpush1.xpose.msra.mxu0 %v1058
        %2034 = vmatprep.subr.mxu0 %v1067
        %2035 = vmatpush1.xpose.msra.mxu0 %v1066
        %2036 = vmatprep.subr.mxu0 %v1075
        %2037 = vmatpush1.xpose.msra.mxu0 %v1074
        %2038 = vmatprep.subr.mxu0 %v1083
        %2039 = vmatpush1.xpose.msra.mxu0 %v1082
        %2040 = vmatprep.subr.mxu0 %v1091
        %2041 = vmatpush1.xpose.msra.mxu0 %v1090
        %2042 = vmatprep.subr.mxu0 %v1099
        %2043 = vmatpush1.xpose.msra.mxu0 %v1098
        %2044 = vmatprep.subr.mxu0 %v1107
        %2045 = vmatpush1.xpose.msra.mxu0 %v1106
        %2046 = vmatprep.subr.mxu0 %v1115
        %2047 = vmatpush1.xpose.msra.mxu0 %v1114
        %2048 = vmatprep.subr.mxu0 %v1123
        %2049 = vmatpush1.xpose.msra.mxu0 %v1122
        %2050 = vmatprep.subr.mxu0 %v1131
        %2051 = vmatpush1.xpose.msra.mxu0 %v1130
        %2052 = vmatprep.subr.mxu0 %v1139
        %2053 = vmatpush1.xpose.msra.mxu0 %v1138
        %2054 = vmatprep.mubr.f32.mxu0 %v1395
        %2055 = vmatmul.mubr.f32.gmra.mrb[0].mxu0 %v1387
        %v2056 = vpop.f32.mrb[0].mxu0
        %v2057 = vadd.f32 0.0, %v2056
        %v2058 = vpop.f32.mrb[0].mxu0
        %v2059 = vadd.f32 0.0, %v2058
        %2060 = vdwg.mxu0
        %2061 = vmatprep.subr.mxu0 %v893
        %2062 = vmatpush1.xpose.msra.mxu0 %v892
        %2063 = vmatprep.subr.mxu0 %v901
        %2064 = vmatpush1.xpose.msra.mxu0 %v900
        %2065 = vmatprep.subr.mxu0 %v909
        %2066 = vmatpush1.xpose.msra.mxu0 %v908
        %2067 = vmatprep.subr.mxu0 %v917
        %2068 = vmatpush1.xpose.msra.mxu0 %v916
        %2069 = vmatprep.subr.mxu0 %v925
        %2070 = vmatpush1.xpose.msra.mxu0 %v924
        %2071 = vmatprep.subr.mxu0 %v933
        %2072 = vmatpush1.xpose.msra.mxu0 %v932
        %2073 = vmatprep.subr.mxu0 %v941
        %2074 = vmatpush1.xpose.msra.mxu0 %v940
        %2075 = vmatprep.subr.mxu0 %v949
        %2076 = vmatpush1.xpose.msra.mxu0 %v948
        %2077 = vmatprep.subr.mxu0 %v957
        %2078 = vmatpush1.xpose.msra.mxu0 %v956
        %2079 = vmatprep.subr.mxu0 %v965
        %2080 = vmatpush1.xpose.msra.mxu0 %v964
        %2081 = vmatprep.subr.mxu0 %v973
        %2082 = vmatpush1.xpose.msra.mxu0 %v972
        %2083 = vmatprep.subr.mxu0 %v981
        %2084 = vmatpush1.xpose.msra.mxu0 %v980
        %2085 = vmatprep.subr.mxu0 %v989
        %2086 = vmatpush1.xpose.msra.mxu0 %v988
        %2087 = vmatprep.subr.mxu0 %v997
        %2088 = vmatpush1.xpose.msra.mxu0 %v996
        %2089 = vmatprep.subr.mxu0 %v1005
        %2090 = vmatpush1.xpose.msra.mxu0 %v1004
        %2091 = vmatprep.subr.mxu0 %v1013
        %2092 = vmatpush1.xpose.msra.mxu0 %v1012
        %2093 = vmatprep.subr.mxu0 %v1021
        %2094 = vmatpush1.xpose.msra.mxu0 %v1020
        %2095 = vmatprep.subr.mxu0 %v1029
        %2096 = vmatpush1.xpose.msra.mxu0 %v1028
        %2097 = vmatprep.subr.mxu0 %v1037
        %2098 = vmatpush1.xpose.msra.mxu0 %v1036
        %2099 = vmatprep.subr.mxu0 %v1045
        %2100 = vmatpush1.xpose.msra.mxu0 %v1044
        %2101 = vmatprep.subr.mxu0 %v1053
        %2102 = vmatpush1.xpose.msra.mxu0 %v1052
        %2103 = vmatprep.subr.mxu0 %v1061
        %2104 = vmatpush1.xpose.msra.mxu0 %v1060
        %2105 = vmatprep.subr.mxu0 %v1069
        %2106 = vmatpush1.xpose.msra.mxu0 %v1068
        %2107 = vmatprep.subr.mxu0 %v1077
        %2108 = vmatpush1.xpose.msra.mxu0 %v1076
        %2109 = vmatprep.subr.mxu0 %v1085
        %2110 = vmatpush1.xpose.msra.mxu0 %v1084
        %2111 = vmatprep.subr.mxu0 %v1093
        %2112 = vmatpush1.xpose.msra.mxu0 %v1092
        %2113 = vmatprep.subr.mxu0 %v1101
        %2114 = vmatpush1.xpose.msra.mxu0 %v1100
        %2115 = vmatprep.subr.mxu0 %v1109
        %2116 = vmatpush1.xpose.msra.mxu0 %v1108
        %2117 = vmatprep.subr.mxu0 %v1117
        %2118 = vmatpush1.xpose.msra.mxu0 %v1116
        %2119 = vmatprep.subr.mxu0 %v1125
        %2120 = vmatpush1.xpose.msra.mxu0 %v1124
        %2121 = vmatprep.subr.mxu0 %v1133
        %2122 = vmatpush1.xpose.msra.mxu0 %v1132
        %2123 = vmatprep.subr.mxu0 %v1141
        %2124 = vmatpush1.xpose.msra.mxu0 %v1140
        %2125 = vmatprep.mubr.f32.mxu0 %v1396
        %2126 = vmatmul.mubr.f32.gmra.mrb[0].mxu0 %v1394
        %v2127 = vpop.f32.mrb[0].mxu0
        %v2128 = vadd.f32 %v2057, %v2127
        %v2129 = vpop.f32.mrb[0].mxu0
        %v2130 = vadd.f32 %v2059, %v2129
        %2131 = vdwg.mxu0
        %2132 = vmatprep.subr.mxu0 %v895
        %2133 = vmatpush1.xpose.msra.mxu0 %v894
        %2134 = vmatprep.subr.mxu0 %v903
        %2135 = vmatpush1.xpose.msra.mxu0 %v902
        %2136 = vmatprep.subr.mxu0 %v911
        %2137 = vmatpush1.xpose.msra.mxu0 %v910
        %2138 = vmatprep.subr.mxu0 %v919
        %2139 = vmatpush1.xpose.msra.mxu0 %v918
        %2140 = vmatprep.subr.mxu0 %v927
        %2141 = vmatpush1.xpose.msra.mxu0 %v926
        %2142 = vmatprep.subr.mxu0 %v935
        %2143 = vmatpush1.xpose.msra.mxu0 %v934
        %2144 = vmatprep.subr.mxu0 %v943
        %2145 = vmatpush1.xpose.msra.mxu0 %v942
        %2146 = vmatprep.subr.mxu0 %v951
        %2147 = vmatpush1.xpose.msra.mxu0 %v950
        %2148 = vmatprep.subr.mxu0 %v959
        %2149 = vmatpush1.xpose.msra.mxu0 %v958
        %2150 = vmatprep.subr.mxu0 %v967
        %2151 = vmatpush1.xpose.msra.mxu0 %v966
        %2152 = vmatprep.subr.mxu0 %v975
        %2153 = vmatpush1.xpose.msra.mxu0 %v974
        %2154 = vmatprep.subr.mxu0 %v983
        %2155 = vmatpush1.xpose.msra.mxu0 %v982
        %2156 = vmatprep.subr.mxu0 %v991
        %2157 = vmatpush1.xpose.msra.mxu0 %v990
        %2158 = vmatprep.subr.mxu0 %v999
        %2159 = vmatpush1.xpose.msra.mxu0 %v998
        %2160 = vmatprep.subr.mxu0 %v1007
        %2161 = vmatpush1.xpose.msra.mxu0 %v1006
        %2162 = vmatprep.subr.mxu0 %v1015
        %2163 = vmatpush1.xpose.msra.mxu0 %v1014
        %2164 = vmatprep.subr.mxu0 %v1023
        %2165 = vmatpush1.xpose.msra.mxu0 %v1022
        %2166 = vmatprep.subr.mxu0 %v1031
        %2167 = vmatpush1.xpose.msra.mxu0 %v1030
        %2168 = vmatprep.subr.mxu0 %v1039
        %2169 = vmatpush1.xpose.msra.mxu0 %v1038
        %2170 = vmatprep.subr.mxu0 %v1047
        %2171 = vmatpush1.xpose.msra.mxu0 %v1046
        %2172 = vmatprep.subr.mxu0 %v1055
        %2173 = vmatpush1.xpose.msra.mxu0 %v1054
        %2174 = vmatprep.subr.mxu0 %v1063
        %2175 = vmatpush1.xpose.msra.mxu0 %v1062
        %2176 = vmatprep.subr.mxu0 %v1071
        %2177 = vmatpush1.xpose.msra.mxu0 %v1070
        %2178 = vmatprep.subr.mxu0 %v1079
        %2179 = vmatpush1.xpose.msra.mxu0 %v1078
        %2180 = vmatprep.subr.mxu0 %v1087
        %2181 = vmatpush1.xpose.msra.mxu0 %v1086
        %2182 = vmatprep.subr.mxu0 %v1095
        %2183 = vmatpush1.xpose.msra.mxu0 %v1094
        %2184 = vmatprep.subr.mxu0 %v1103
        %2185 = vmatpush1.xpose.msra.mxu0 %v1102
        %2186 = vmatprep.subr.mxu0 %v1111
        %2187 = vmatpush1.xpose.msra.mxu0 %v1110
        %2188 = vmatprep.subr.mxu0 %v1119
        %2189 = vmatpush1.xpose.msra.mxu0 %v1118
        %2190 = vmatprep.subr.mxu0 %v1127
        %2191 = vmatpush1.xpose.msra.mxu0 %v1126
        %2192 = vmatprep.subr.mxu0 %v1135
        %2193 = vmatpush1.xpose.msra.mxu0 %v1134
        %2194 = vmatprep.subr.mxu0 %v1143
        %2195 = vmatpush1.xpose.msra.mxu0 %v1142
        %2196 = vmatprep.mubr.f32.mxu0 %v1412
        %2197 = vmatmul.mubr.f32.gmra.mrb[0].mxu0 %v1404
        %v2198 = vpop.f32.mrb[0].mxu0
        %v2199 = vadd.f32 %v2128, %v2198
        %v2200 = vpop.f32.mrb[0].mxu0
        %v2201 = vadd.f32 %v2130, %v2200
        %2202 = vdwg.mxu0
        %2203 = vmatprep.subr.mxu0 %v897
        %2204 = vmatpush1.xpose.msra.mxu0 %v896
        %2205 = vmatprep.subr.mxu0 %v905
        %2206 = vmatpush1.xpose.msra.mxu0 %v904
        %2207 = vmatprep.subr.mxu0 %v913
        %2208 = vmatpush1.xpose.msra.mxu0 %v912
        %2209 = vmatprep.subr.mxu0 %v921
        %2210 = vmatpush1.xpose.msra.mxu0 %v920
        %2211 = vmatprep.subr.mxu0 %v929
        %2212 = vmatpush1.xpose.msra.mxu0 %v928
        %2213 = vmatprep.subr.mxu0 %v937
        %2214 = vmatpush1.xpose.msra.mxu0 %v936
        %2215 = vmatprep.subr.mxu0 %v945
        %2216 = vmatpush1.xpose.msra.mxu0 %v944
        %2217 = vmatprep.subr.mxu0 %v953
        %2218 = vmatpush1.xpose.msra.mxu0 %v952
        %2219 = vmatprep.subr.mxu0 %v961
        %2220 = vmatpush1.xpose.msra.mxu0 %v960
        %2221 = vmatprep.subr.mxu0 %v969
        %2222 = vmatpush1.xpose.msra.mxu0 %v968
        %2223 = vmatprep.subr.mxu0 %v977
        %2224 = vmatpush1.xpose.msra.mxu0 %v976
        %2225 = vmatprep.subr.mxu0 %v985
        %2226 = vmatpush1.xpose.msra.mxu0 %v984
        %2227 = vmatprep.subr.mxu0 %v993
        %2228 = vmatpush1.xpose.msra.mxu0 %v992
        %2229 = vmatprep.subr.mxu0 %v1001
        %2230 = vmatpush1.xpose.msra.mxu0 %v1000
        %2231 = vmatprep.subr.mxu0 %v1009
        %2232 = vmatpush1.xpose.msra.mxu0 %v1008
        %2233 = vmatprep.subr.mxu0 %v1017
        %2234 = vmatpush1.xpose.msra.mxu0 %v1016
        %2235 = vmatprep.subr.mxu0 %v1025
        %2236 = vmatpush1.xpose.msra.mxu0 %v1024
        %2237 = vmatprep.subr.mxu0 %v1033
        %2238 = vmatpush1.xpose.msra.mxu0 %v1032
        %2239 = vmatprep.subr.mxu0 %v1041
        %2240 = vmatpush1.xpose.msra.mxu0 %v1040
        %2241 = vmatprep.subr.mxu0 %v1049
        %2242 = vmatpush1.xpose.msra.mxu0 %v1048
        %2243 = vmatprep.subr.mxu0 %v1057
        %2244 = vmatpush1.xpose.msra.mxu0 %v1056
        %2245 = vmatprep.subr.mxu0 %v1065
        %2246 = vmatpush1.xpose.msra.mxu0 %v1064
        %2247 = vmatprep.subr.mxu0 %v1073
        %2248 = vmatpush1.xpose.msra.mxu0 %v1072
        %2249 = vmatprep.subr.mxu0 %v1081
        %2250 = vmatpush1.xpose.msra.mxu0 %v1080
        %2251 = vmatprep.subr.mxu0 %v1089
        %2252 = vmatpush1.xpose.msra.mxu0 %v1088
        %2253 = vmatprep.subr.mxu0 %v1097
        %2254 = vmatpush1.xpose.msra.mxu0 %v1096
        %2255 = vmatprep.subr.mxu0 %v1105
        %2256 = vmatpush1.xpose.msra.mxu0 %v1104
        %2257 = vmatprep.subr.mxu0 %v1113
        %2258 = vmatpush1.xpose.msra.mxu0 %v1112
        %2259 = vmatprep.subr.mxu0 %v1121
        %2260 = vmatpush1.xpose.msra.mxu0 %v1120
        %2261 = vmatprep.subr.mxu0 %v1129
        %2262 = vmatpush1.xpose.msra.mxu0 %v1128
        %2263 = vmatprep.subr.mxu0 %v1137
        %2264 = vmatpush1.xpose.msra.mxu0 %v1136
        %2265 = vmatprep.subr.mxu0 %v1145
        %2266 = vmatpush1.xpose.msra.mxu0 %v1144
        %2267 = vmatprep.mubr.f32.mxu0 %v1413
        %2268 = vmatmul.mubr.f32.gmra.mrb[0].mxu0 %v1411
        %v2269 = vpop.f32.mrb[0].mxu0
        %v2270 = vadd.f32 %v2199, %v2269
        %v2271 = vpop.f32.mrb[0].mxu0
        %v2272 = vadd.f32 %v2201, %v2271
        %2273 = vdwg.mxu0
        %2274 = vmatprep.subr.mxu0 %v1147
        %2275 = vmatpush1.xpose.msra.mxu0 %v1146
        %2276 = vmatprep.subr.mxu0 %v1155
        %2277 = vmatpush1.xpose.msra.mxu0 %v1154
        %2278 = vmatprep.subr.mxu0 %v1163
        %2279 = vmatpush1.xpose.msra.mxu0 %v1162
        %2280 = vmatprep.subr.mxu0 %v1171
        %2281 = vmatpush1.xpose.msra.mxu0 %v1170
        %2282 = vmatprep.subr.mxu0 %v1179
        %2283 = vmatpush1.xpose.msra.mxu0 %v1178
        %2284 = vmatprep.subr.mxu0 %v1187
        %2285 = vmatpush1.xpose.msra.mxu0 %v1186
        %2286 = vmatprep.subr.mxu0 %v1195
        %2287 = vmatpush1.xpose.msra.mxu0 %v1194
        %2288 = vmatprep.subr.mxu0 %v1203
        %2289 = vmatpush1.xpose.msra.mxu0 %v1202
        %2290 = vmatprep.subr.mxu0 %v1211
        %2291 = vmatpush1.xpose.msra.mxu0 %v1210
        %2292 = vmatprep.subr.mxu0 %v1219
        %2293 = vmatpush1.xpose.msra.mxu0 %v1218
        %2294 = vmatprep.subr.mxu0 %v1227
        %2295 = vmatpush1.xpose.msra.mxu0 %v1226
        %2296 = vmatprep.subr.mxu0 %v1235
        %2297 = vmatpush1.xpose.msra.mxu0 %v1234
        %2298 = vmatprep.subr.mxu0 %v1243
        %2299 = vmatpush1.xpose.msra.mxu0 %v1242
        %2300 = vmatprep.subr.mxu0 %v1251
        %2301 = vmatpush1.xpose.msra.mxu0 %v1250
        %2302 = vmatprep.subr.mxu0 %v1259
        %2303 = vmatpush1.xpose.msra.mxu0 %v1258
        %2304 = vmatprep.subr.mxu0 %v1267
        %2305 = vmatpush1.xpose.msra.mxu0 %v1266
        %2306 = vmatprep.subr.mxu0 %v1275
        %2307 = vmatpush1.xpose.msra.mxu0 %v1274
        %2308 = vmatprep.subr.mxu0 %v1283
        %2309 = vmatpush1.xpose.msra.mxu0 %v1282
        %2310 = vmatprep.subr.mxu0 %v1291
        %2311 = vmatpush1.xpose.msra.mxu0 %v1290
        %2312 = vmatprep.subr.mxu0 %v1299
        %2313 = vmatpush1.xpose.msra.mxu0 %v1298
        %2314 = vmatprep.subr.mxu0 %v1307
        %2315 = vmatpush1.xpose.msra.mxu0 %v1306
        %2316 = vmatprep.subr.mxu0 %v1315
        %2317 = vmatpush1.xpose.msra.mxu0 %v1314
        %2318 = vmatprep.subr.mxu0 %v1323
        %2319 = vmatpush1.xpose.msra.mxu0 %v1322
        %2320 = vmatprep.subr.mxu0 %v1331
        %2321 = vmatpush1.xpose.msra.mxu0 %v1330
        %2322 = vmatprep.subr.mxu0 %v1339
        %2323 = vmatpush1.xpose.msra.mxu0 %v1338
        %2324 = vmatprep.subr.mxu0 %v1347
        %2325 = vmatpush1.xpose.msra.mxu0 %v1346
        %2326 = vmatprep.subr.mxu0 %v1355
        %2327 = vmatpush1.xpose.msra.mxu0 %v1354
        %2328 = vmatprep.subr.mxu0 %v1363
        %2329 = vmatpush1.xpose.msra.mxu0 %v1362
        %2330 = vmatprep.subr.mxu0 %v1371
        %2331 = vmatpush1.xpose.msra.mxu0 %v1370
        %2332 = vmatprep.subr.mxu0 0.0
        %2333 = vmatpush1.xpose.msra.mxu0 0.0
        %2334 = vmatprep.subr.mxu0 0.0
        %2335 = vmatpush1.xpose.msra.mxu0 0.0
        %2336 = vmatprep.subr.mxu0 0.0
        %2337 = vmatpush1.xpose.msra.mxu0 0.0
        %2338 = vmatprep.mubr.f32.mxu0 %v1395
        %2339 = vmatmul.mubr.f32.gmra.mrb[0].mxu0 %v1387
        %v2340 = vpop.f32.mrb[0].mxu0
        %v2341 = vadd.f32 0.0, %v2340
        %v2342 = vpop.f32.mrb[0].mxu0
        %v2343 = vadd.f32 0.0, %v2342
        %2344 = vdwg.mxu0
        %2345 = vmatprep.subr.mxu0 %v1149
        %2346 = vmatpush1.xpose.msra.mxu0 %v1148
        %2347 = vmatprep.subr.mxu0 %v1157
        %2348 = vmatpush1.xpose.msra.mxu0 %v1156
        %2349 = vmatprep.subr.mxu0 %v1165
        %2350 = vmatpush1.xpose.msra.mxu0 %v1164
        %2351 = vmatprep.subr.mxu0 %v1173
        %2352 = vmatpush1.xpose.msra.mxu0 %v1172
        %2353 = vmatprep.subr.mxu0 %v1181
        %2354 = vmatpush1.xpose.msra.mxu0 %v1180
        %2355 = vmatprep.subr.mxu0 %v1189
        %2356 = vmatpush1.xpose.msra.mxu0 %v1188
        %2357 = vmatprep.subr.mxu0 %v1197
        %2358 = vmatpush1.xpose.msra.mxu0 %v1196
        %2359 = vmatprep.subr.mxu0 %v1205
        %2360 = vmatpush1.xpose.msra.mxu0 %v1204
        %2361 = vmatprep.subr.mxu0 %v1213
        %2362 = vmatpush1.xpose.msra.mxu0 %v1212
        %2363 = vmatprep.subr.mxu0 %v1221
        %2364 = vmatpush1.xpose.msra.mxu0 %v1220
        %2365 = vmatprep.subr.mxu0 %v1229
        %2366 = vmatpush1.xpose.msra.mxu0 %v1228
        %2367 = vmatprep.subr.mxu0 %v1237
        %2368 = vmatpush1.xpose.msra.mxu0 %v1236
        %2369 = vmatprep.subr.mxu0 %v1245
        %2370 = vmatpush1.xpose.msra.mxu0 %v1244
        %2371 = vmatprep.subr.mxu0 %v1253
        %2372 = vmatpush1.xpose.msra.mxu0 %v1252
        %2373 = vmatprep.subr.mxu0 %v1261
        %2374 = vmatpush1.xpose.msra.mxu0 %v1260
        %2375 = vmatprep.subr.mxu0 %v1269
        %2376 = vmatpush1.xpose.msra.mxu0 %v1268
        %2377 = vmatprep.subr.mxu0 %v1277
        %2378 = vmatpush1.xpose.msra.mxu0 %v1276
        %2379 = vmatprep.subr.mxu0 %v1285
        %2380 = vmatpush1.xpose.msra.mxu0 %v1284
        %2381 = vmatprep.subr.mxu0 %v1293
        %2382 = vmatpush1.xpose.msra.mxu0 %v1292
        %2383 = vmatprep.subr.mxu0 %v1301
        %2384 = vmatpush1.xpose.msra.mxu0 %v1300
        %2385 = vmatprep.subr.mxu0 %v1309
        %2386 = vmatpush1.xpose.msra.mxu0 %v1308
        %2387 = vmatprep.subr.mxu0 %v1317
        %2388 = vmatpush1.xpose.msra.mxu0 %v1316
        %2389 = vmatprep.subr.mxu0 %v1325
        %2390 = vmatpush1.xpose.msra.mxu0 %v1324
        %2391 = vmatprep.subr.mxu0 %v1333
        %2392 = vmatpush1.xpose.msra.mxu0 %v1332
        %2393 = vmatprep.subr.mxu0 %v1341
        %2394 = vmatpush1.xpose.msra.mxu0 %v1340
        %2395 = vmatprep.subr.mxu0 %v1349
        %2396 = vmatpush1.xpose.msra.mxu0 %v1348
        %2397 = vmatprep.subr.mxu0 %v1357
        %2398 = vmatpush1.xpose.msra.mxu0 %v1356
        %2399 = vmatprep.subr.mxu0 %v1365
        %2400 = vmatpush1.xpose.msra.mxu0 %v1364
        %2401 = vmatprep.subr.mxu0 %v1373
        %2402 = vmatpush1.xpose.msra.mxu0 %v1372
        %2403 = vmatprep.subr.mxu0 0.0
        %2404 = vmatpush1.xpose.msra.mxu0 0.0
        %2405 = vmatprep.subr.mxu0 0.0
        %2406 = vmatpush1.xpose.msra.mxu0 0.0
        %2407 = vmatprep.subr.mxu0 0.0
        %2408 = vmatpush1.xpose.msra.mxu0 0.0
        %2409 = vmatprep.mubr.f32.mxu0 %v1396
        %2410 = vmatmul.mubr.f32.gmra.mrb[0].mxu0 %v1394
        %v2411 = vpop.f32.mrb[0].mxu0
        %v2412 = vadd.f32 %v2341, %v2411
        %v2413 = vpop.f32.mrb[0].mxu0
        %v2414 = vadd.f32 %v2343, %v2413
        %2415 = vdwg.mxu0
        %2416 = vmatprep.subr.mxu0 %v1151
        %2417 = vmatpush1.xpose.msra.mxu0 %v1150
        %2418 = vmatprep.subr.mxu0 %v1159
        %2419 = vmatpush1.xpose.msra.mxu0 %v1158
        %2420 = vmatprep.subr.mxu0 %v1167
        %2421 = vmatpush1.xpose.msra.mxu0 %v1166
        %2422 = vmatprep.subr.mxu0 %v1175
        %2423 = vmatpush1.xpose.msra.mxu0 %v1174
        %2424 = vmatprep.subr.mxu0 %v1183
        %2425 = vmatpush1.xpose.msra.mxu0 %v1182
        %2426 = vmatprep.subr.mxu0 %v1191
        %2427 = vmatpush1.xpose.msra.mxu0 %v1190
        %2428 = vmatprep.subr.mxu0 %v1199
        %2429 = vmatpush1.xpose.msra.mxu0 %v1198
        %2430 = vmatprep.subr.mxu0 %v1207
        %2431 = vmatpush1.xpose.msra.mxu0 %v1206
        %2432 = vmatprep.subr.mxu0 %v1215
        %2433 = vmatpush1.xpose.msra.mxu0 %v1214
        %2434 = vmatprep.subr.mxu0 %v1223
        %2435 = vmatpush1.xpose.msra.mxu0 %v1222
        %2436 = vmatprep.subr.mxu0 %v1231
        %2437 = vmatpush1.xpose.msra.mxu0 %v1230
        %2438 = vmatprep.subr.mxu0 %v1239
        %2439 = vmatpush1.xpose.msra.mxu0 %v1238
        %2440 = vmatprep.subr.mxu0 %v1247
        %2441 = vmatpush1.xpose.msra.mxu0 %v1246
        %2442 = vmatprep.subr.mxu0 %v1255
        %2443 = vmatpush1.xpose.msra.mxu0 %v1254
        %2444 = vmatprep.subr.mxu0 %v1263
        %2445 = vmatpush1.xpose.msra.mxu0 %v1262
        %2446 = vmatprep.subr.mxu0 %v1271
        %2447 = vmatpush1.xpose.msra.mxu0 %v1270
        %2448 = vmatprep.subr.mxu0 %v1279
        %2449 = vmatpush1.xpose.msra.mxu0 %v1278
        %2450 = vmatprep.subr.mxu0 %v1287
        %2451 = vmatpush1.xpose.msra.mxu0 %v1286
        %2452 = vmatprep.subr.mxu0 %v1295
        %2453 = vmatpush1.xpose.msra.mxu0 %v1294
        %2454 = vmatprep.subr.mxu0 %v1303
        %2455 = vmatpush1.xpose.msra.mxu0 %v1302
        %2456 = vmatprep.subr.mxu0 %v1311
        %2457 = vmatpush1.xpose.msra.mxu0 %v1310
        %2458 = vmatprep.subr.mxu0 %v1319
        %2459 = vmatpush1.xpose.msra.mxu0 %v1318
        %2460 = vmatprep.subr.mxu0 %v1327
        %2461 = vmatpush1.xpose.msra.mxu0 %v1326
        %2462 = vmatprep.subr.mxu0 %v1335
        %2463 = vmatpush1.xpose.msra.mxu0 %v1334
        %2464 = vmatprep.subr.mxu0 %v1343
        %2465 = vmatpush1.xpose.msra.mxu0 %v1342
        %2466 = vmatprep.subr.mxu0 %v1351
        %2467 = vmatpush1.xpose.msra.mxu0 %v1350
        %2468 = vmatprep.subr.mxu0 %v1359
        %2469 = vmatpush1.xpose.msra.mxu0 %v1358
        %2470 = vmatprep.subr.mxu0 %v1367
        %2471 = vmatpush1.xpose.msra.mxu0 %v1366
        %2472 = vmatprep.subr.mxu0 %v1375
        %2473 = vmatpush1.xpose.msra.mxu0 %v1374
        %2474 = vmatprep.subr.mxu0 0.0
        %2475 = vmatpush1.xpose.msra.mxu0 0.0
        %2476 = vmatprep.subr.mxu0 0.0
        %2477 = vmatpush1.xpose.msra.mxu0 0.0
        %2478 = vmatprep.subr.mxu0 0.0
        %2479 = vmatpush1.xpose.msra.mxu0 0.0
        %2480 = vmatprep.mubr.f32.mxu0 %v1412
        %2481 = vmatmul.mubr.f32.gmra.mrb[0].mxu0 %v1404
        %v2482 = vpop.f32.mrb[0].mxu0
        %v2483 = vadd.f32 %v2412, %v2482
        %v2484 = vpop.f32.mrb[0].mxu0
        %v2485 = vadd.f32 %v2414, %v2484
        %2486 = vdwg.mxu0
        %2487 = vmatprep.subr.mxu0 %v1153
        %2488 = vmatpush1.xpose.msra.mxu0 %v1152
        %2489 = vmatprep.subr.mxu0 %v1161
        %2490 = vmatpush1.xpose.msra.mxu0 %v1160
        %2491 = vmatprep.subr.mxu0 %v1169
        %2492 = vmatpush1.xpose.msra.mxu0 %v1168
        %2493 = vmatprep.subr.mxu0 %v1177
        %2494 = vmatpush1.xpose.msra.mxu0 %v1176
        %2495 = vmatprep.subr.mxu0 %v1185
        %2496 = vmatpush1.xpose.msra.mxu0 %v1184
        %2497 = vmatprep.subr.mxu0 %v1193
        %2498 = vmatpush1.xpose.msra.mxu0 %v1192
        %2499 = vmatprep.subr.mxu0 %v1201
        %2500 = vmatpush1.xpose.msra.mxu0 %v1200
        %2501 = vmatprep.subr.mxu0 %v1209
        %2502 = vmatpush1.xpose.msra.mxu0 %v1208
        %2503 = vmatprep.subr.mxu0 %v1217
        %2504 = vmatpush1.xpose.msra.mxu0 %v1216
        %2505 = vmatprep.subr.mxu0 %v1225
        %2506 = vmatpush1.xpose.msra.mxu0 %v1224
        %2507 = vmatprep.subr.mxu0 %v1233
        %2508 = vmatpush1.xpose.msra.mxu0 %v1232
        %2509 = vmatprep.subr.mxu0 %v1241
        %2510 = vmatpush1.xpose.msra.mxu0 %v1240
        %2511 = vmatprep.subr.mxu0 %v1249
        %2512 = vmatpush1.xpose.msra.mxu0 %v1248
        %2513 = vmatprep.subr.mxu0 %v1257
        %2514 = vmatpush1.xpose.msra.mxu0 %v1256
        %2515 = vmatprep.subr.mxu0 %v1265
        %2516 = vmatpush1.xpose.msra.mxu0 %v1264
        %2517 = vmatprep.subr.mxu0 %v1273
        %2518 = vmatpush1.xpose.msra.mxu0 %v1272
        %2519 = vmatprep.subr.mxu0 %v1281
        %2520 = vmatpush1.xpose.msra.mxu0 %v1280
        %2521 = vmatprep.subr.mxu0 %v1289
        %2522 = vmatpush1.xpose.msra.mxu0 %v1288
        %2523 = vmatprep.subr.mxu0 %v1297
        %2524 = vmatpush1.xpose.msra.mxu0 %v1296
        %2525 = vmatprep.subr.mxu0 %v1305
        %2526 = vmatpush1.xpose.msra.mxu0 %v1304
        %2527 = vmatprep.subr.mxu0 %v1313
        %2528 = vmatpush1.xpose.msra.mxu0 %v1312
        %2529 = vmatprep.subr.mxu0 %v1321
        %2530 = vmatpush1.xpose.msra.mxu0 %v1320
        %2531 = vmatprep.subr.mxu0 %v1329
        %2532 = vmatpush1.xpose.msra.mxu0 %v1328
        %2533 = vmatprep.subr.mxu0 %v1337
        %2534 = vmatpush1.xpose.msra.mxu0 %v1336
        %2535 = vmatprep.subr.mxu0 %v1345
        %2536 = vmatpush1.xpose.msra.mxu0 %v1344
        %2537 = vmatprep.subr.mxu0 %v1353
        %2538 = vmatpush1.xpose.msra.mxu0 %v1352
        %2539 = vmatprep.subr.mxu0 %v1361
        %2540 = vmatpush1.xpose.msra.mxu0 %v1360
        %2541 = vmatprep.subr.mxu0 %v1369
        %2542 = vmatpush1.xpose.msra.mxu0 %v1368
        %2543 = vmatprep.subr.mxu0 %v1377
        %2544 = vmatpush1.xpose.msra.mxu0 %v1376
        %2545 = vmatprep.subr.mxu0 0.0
        %2546 = vmatpush1.xpose.msra.mxu0 0.0
        %2547 = vmatprep.subr.mxu0 0.0
        %2548 = vmatpush1.xpose.msra.mxu0 0.0
        %2549 = vmatprep.subr.mxu0 0.0
        %2550 = vmatpush1.xpose.msra.mxu0 0.0
        %2551 = vmatprep.mubr.f32.mxu0 %v1413
        %2552 = vmatmul.mubr.f32.gmra.mrb[0].mxu0 %v1411
        %v2553 = vpop.f32.mrb[0].mxu0
        %v2554 = vadd.f32 %v2483, %v2553
        %v2555 = vpop.f32.mrb[0].mxu0
        %v2556 = vadd.f32 %v2485, %v2555
        %2557 = vdwg.mxu0
        %v2566 = vcombine.low %v1702, %v1704
        %v2567 = vcombine.low %v1986, %v1988
        %v2569 = vunpack.c.l.s4 1983009808
        %v2570 = vunpack.c.0.s8 %v2569
        %v2571 = vlaneseq
        %v2572 = vshrl.u32 %v2571, 7
        %v2573 = vsub.s32 %v2570, %v2572
        %v2574 = vrot.slane %v2566, %v2573
        %v2576 = vunpack.c.l.s4 1983009808
        %v2577 = vunpack.c.0.s8 %v2576
        %v2578 = vlaneseq
        %v2579 = vshrl.u32 %v2578, 7
        %v2580 = vsub.s32 %v2577, %v2579
        %v2581 = vrot.slane %v2567, %v2580
        %v2582 = vcombine.low %v2574, %v2581
        %v2583 = vcombine.low %v2270, %v2272
        %v2584 = vcombine.low %v2554, %v2556
        %v2586 = vunpack.c.l.s4 1983009808
        %v2587 = vunpack.c.0.s8 %v2586
        %v2588 = vlaneseq
        %v2589 = vshrl.u32 %v2588, 7
        %v2590 = vsub.s32 %v2587, %v2589
        %v2591 = vrot.slane %v2583, %v2590
        %v2593 = vunpack.c.l.s4 1983009808
        %v2594 = vunpack.c.0.s8 %v2593
        %v2595 = vlaneseq
        %v2596 = vshrl.u32 %v2595, 7
        %v2597 = vsub.s32 %v2594, %v2596
        %v2598 = vrot.slane %v2584, %v2597
        %v2599 = vcombine.low %v2591, %v2598
        %v2602 = vadd.f32 %v374, %v2582
        %v2603 = vadd.f32 %v375, %v2599
        %2604 = vst [vmem:[#allocation2] sm:$0xff] %v2602
        %vm2605 = vcmask 1041408
        %vm2606 = vcmask 1043458
        %vm2607 = vmor %vm2606, %vm2605
        %vm2608 = vcmask 1045508
        %vm2609 = vmor %vm2608, %vm2607
        %vm2610 = vcmask 850950
        %vm2611 = vmor %vm2610, %vm2609
        %2612 = vst.msk [vmem:[#allocation2 + $0x8] sm:$0xff] %vm2611, %v2603
        %p2613 = scmp.eq.s32.totalorder %s25, 3
        // Predicated region
        $region73: #{gram_discriminator_forward.3} parent=47 // pred_check
          %p2614 = pneg %p2613
        $region74: #{gram_discriminator_forward.3} parent=47 // pred_check_branch
          %2616 = sbr.rel (%p2614) target = $region76
        $region75: #{gram_discriminator_forward.3} parent=47 // pred_region
          %v2617 = vld [vmem:[#allocation2] sm:$0xff]
          %v2618 = vld [vmem:[#allocation2 + $0x8] sm:$0xff]
          %v2619 = vld [vmem:[#allocation6] sm:$0xff]
          %v2621 = vlaneseq
          %v2622 = vshrl.u32 %v2621, 7
          %v2623 = vsub.s32 0, %v2622
          %v2624 = vrot.slane %v2619, %v2623
          %v2625 = vlaneseq
          %v2626 = vshrl.u32 %v2625, 7
          %v2627 = vsub.s32 1, %v2626
          %v2628 = vrot.slane %v2619, %v2627
          %v2629 = vlaneseq
          %v2630 = vshrl.u32 %v2629, 7
          %v2631 = vsub.s32 2, %v2630
          %v2632 = vrot.slane %v2619, %v2631
          %v2633 = vlaneseq
          %v2634 = vshrl.u32 %v2633, 7
          %v2635 = vsub.s32 3, %v2634
          %v2636 = vrot.slane %v2619, %v2635
          %v2637 = vlaneseq
          %v2638 = vshrl.u32 %v2637, 7
          %v2639 = vsub.s32 4, %v2638
          %v2640 = vrot.slane %v2619, %v2639
          %v2641 = vlaneseq
          %v2642 = vshrl.u32 %v2641, 7
          %v2643 = vsub.s32 5, %v2642
          %v2644 = vrot.slane %v2619, %v2643
          %v2645 = vlaneseq
          %v2646 = vshrl.u32 %v2645, 7
          %v2647 = vsub.s32 6, %v2646
          %v2648 = vrot.slane %v2619, %v2647
          %v2649 = vlaneseq
          %v2650 = vshrl.u32 %v2649, 7
          %v2651 = vsub.s32 7, %v2650
          %v2652 = vrot.slane %v2619, %v2651
          %v2653 = vcombine.low %v2624, %v2628
          %v2654 = vcombine.low %v2632, %v2636
          %v2656 = vunpack.c.l.s4 1983009808
          %v2657 = vunpack.c.0.s8 %v2656
          %v2658 = vlaneseq
          %v2659 = vshrl.u32 %v2658, 7
          %v2660 = vsub.s32 %v2657, %v2659
          %v2661 = vrot.slane %v2653, %v2660
          %v2663 = vunpack.c.l.s4 1983009808
          %v2664 = vunpack.c.0.s8 %v2663
          %v2665 = vlaneseq
          %v2666 = vshrl.u32 %v2665, 7
          %v2667 = vsub.s32 %v2664, %v2666
          %v2668 = vrot.slane %v2654, %v2667
          %v2669 = vcombine.low %v2661, %v2668
          %v2670 = vcombine.low %v2640, %v2644
          %v2671 = vcombine.low %v2648, %v2652
          %v2673 = vunpack.c.l.s4 1983009808
          %v2674 = vunpack.c.0.s8 %v2673
          %v2675 = vlaneseq
          %v2676 = vshrl.u32 %v2675, 7
          %v2677 = vsub.s32 %v2674, %v2676
          %v2678 = vrot.slane %v2670, %v2677
          %v2680 = vunpack.c.l.s4 1983009808
          %v2681 = vunpack.c.0.s8 %v2680
          %v2682 = vlaneseq
          %v2683 = vshrl.u32 %v2682, 7
          %v2684 = vsub.s32 %v2681, %v2683
          %v2685 = vrot.slane %v2671, %v2684
          %v2686 = vcombine.low %v2678, %v2685
          %v2689 = vadd.f32 %v2617, %v2669
          %v2690 = vadd.f32 %v2618, %v2686
          %v2691 = vmax.f32 %v2689, 0.0
          %v2692 = vmax.f32 %v2690, 0.0
          %v2693 = vld [vmem:[#allocation8] sm:$0xff]
          %v2694 = vld [vmem:[#allocation8 + $0x8] sm:$0xff]
          %v2695 = vld [vmem:[#allocation8 + $0x10] sm:$0xff]
          %v2696 = vld [vmem:[#allocation8 + $0x18] sm:$0xff]
          %v2697 = vld [vmem:[#allocation8 + $0x20] sm:$0xff]
          %v2698 = vld [vmem:[#allocation8 + $0x28] sm:$0xff]
          %v2699 = vld [vmem:[#allocation8 + $0x30] sm:$0xff]
          %v2700 = vld [vmem:[#allocation8 + $0x38] sm:$0xff]
          %v2701 = vld [vmem:[#allocation8 + $0x40] sm:$0xff]
          %v2702 = vld [vmem:[#allocation8 + $0x48] sm:$0xff]
          %v2703 = vld [vmem:[#allocation8 + $0x50] sm:$0xff]
          %v2704 = vld [vmem:[#allocation8 + $0x58] sm:$0xff]
          %v2705 = vld [vmem:[#allocation8 + $0x60] sm:$0xff]
          %v2706 = vld [vmem:[#allocation8 + $0x68] sm:$0xff]
          %v2707 = vld [vmem:[#allocation8 + $0x70] sm:$0xff]
          %v2708 = vld [vmem:[#allocation8 + $0x78] sm:$0xff]
          %v2709 = vld [vmem:[#allocation8 + $0x80] sm:$0xff]
          %v2710 = vld [vmem:[#allocation8 + $0x88] sm:$0xff]
          %v2711 = vld [vmem:[#allocation8 + $0x90] sm:$0xff]
          %v2712 = vld [vmem:[#allocation8 + $0x98] sm:$0xff]
          %v2713 = vld [vmem:[#allocation8 + $0xa0] sm:$0xff]
          %v2714 = vld [vmem:[#allocation8 + $0xa8] sm:$0xff]
          %v2715 = vld [vmem:[#allocation8 + $0xb0] sm:$0xff]
          %v2716 = vld [vmem:[#allocation8 + $0xb8] sm:$0xff]
          %v2717 = vld [vmem:[#allocation8 + $0xc0] sm:$0xff]
          %v2718 = vld [vmem:[#allocation8 + $0xc8] sm:$0xff]
          %v2719 = vld [vmem:[#allocation8 + $0xd0] sm:$0xff]
          %v2720 = vld [vmem:[#allocation8 + $0xd8] sm:$0xff]
          %v2721 = vld [vmem:[#allocation8 + $0xe0] sm:$0xff]
          %v2722 = vld [vmem:[#allocation8 + $0xe8] sm:$0xff]
          %v2723 = vld [vmem:[#allocation8 + $0xf0] sm:$0xff]
          %v2724 = vld [vmem:[#allocation8 + $0xf8] sm:$0xff]
          %v2725 = vld [vmem:[#allocation8 + $0x100] sm:$0xff]
          %v2726 = vld [vmem:[#allocation8 + $0x108] sm:$0xff]
          %v2727 = vld [vmem:[#allocation8 + $0x110] sm:$0xff]
          %v2728 = vld [vmem:[#allocation8 + $0x118] sm:$0xff]
          %v2729 = vld [vmem:[#allocation8 + $0x120] sm:$0xff]
          %v2730 = vld [vmem:[#allocation8 + $0x128] sm:$0xff]
          %v2731 = vld [vmem:[#allocation8 + $0x130] sm:$0xff]
          %v2732 = vld [vmem:[#allocation8 + $0x138] sm:$0xff]
          %v2733 = vld [vmem:[#allocation8 + $0x140] sm:$0xff]
          %v2734 = vld [vmem:[#allocation8 + $0x148] sm:$0xff]
          %v2735 = vld [vmem:[#allocation8 + $0x150] sm:$0xff]
          %v2736 = vld [vmem:[#allocation8 + $0x158] sm:$0xff]
          %v2737 = vld [vmem:[#allocation8 + $0x160] sm:$0xff]
          %v2738 = vld [vmem:[#allocation8 + $0x168] sm:$0xff]
          %v2739 = vld [vmem:[#allocation8 + $0x170] sm:$0xff]
          %v2740 = vld [vmem:[#allocation8 + $0x178] sm:$0xff]
          %v2741 = vld [vmem:[#allocation8 + $0x180] sm:$0xff]
          %v2742 = vld [vmem:[#allocation8 + $0x188] sm:$0xff]
          %v2743 = vld [vmem:[#allocation8 + $0x190] sm:$0xff]
          %v2744 = vld [vmem:[#allocation8 + $0x198] sm:$0xff]
          %v2745 = vld [vmem:[#allocation8 + $0x1a0] sm:$0xff]
          %v2746 = vld [vmem:[#allocation8 + $0x1a8] sm:$0xff]
          %v2747 = vld [vmem:[#allocation8 + $0x1b0] sm:$0xff]
          %v2748 = vld [vmem:[#allocation8 + $0x1b8] sm:$0xff]
          %v2749 = vld [vmem:[#allocation8 + $0x1c0] sm:$0xff]
          %v2750 = vld [vmem:[#allocation8 + $0x1c8] sm:$0xff]
          %v2751 = vld [vmem:[#allocation8 + $0x1d0] sm:$0xff]
          %v2752 = vld [vmem:[#allocation8 + $0x1d8] sm:$0xff]
          %v2753 = vld [vmem:[#allocation8 + $0x1e0] sm:$0xff]
          %v2754 = vld [vmem:[#allocation8 + $0x1e8] sm:$0xff]
          %v2755 = vld [vmem:[#allocation8 + $0x1f0] sm:$0xff]
          %v2756 = vld [vmem:[#allocation8 + $0x1f8] sm:$0xff]
          %v2757 = vld [vmem:[#allocation8 + $0x200] sm:$0xff]
          %v2758 = vld [vmem:[#allocation8 + $0x208] sm:$0xff]
          %v2759 = vld [vmem:[#allocation8 + $0x210] sm:$0xff]
          %v2760 = vld [vmem:[#allocation8 + $0x218] sm:$0xff]
          %v2761 = vld [vmem:[#allocation8 + $0x220] sm:$0xff]
          %v2762 = vld [vmem:[#allocation8 + $0x228] sm:$0xff]
          %v2763 = vld [vmem:[#allocation8 + $0x230] sm:$0xff]
          %v2764 = vld [vmem:[#allocation8 + $0x238] sm:$0xff]
          %v2765 = vld [vmem:[#allocation8 + $0x240] sm:$0xff]
          %v2766 = vld [vmem:[#allocation8 + $0x248] sm:$0xff]
          %v2767 = vld [vmem:[#allocation8 + $0x250] sm:$0xff]
          %v2768 = vld [vmem:[#allocation8 + $0x258] sm:$0xff]
          %v2769 = vld [vmem:[#allocation8 + $0x260] sm:$0xff]
          %v2770 = vld [vmem:[#allocation8 + $0x268] sm:$0xff]
          %v2771 = vld [vmem:[#allocation8 + $0x270] sm:$0xff]
          %v2772 = vld [vmem:[#allocation8 + $0x278] sm:$0xff]
          %v2773 = vld [vmem:[#allocation8 + $0x280] sm:$0xff]
          %v2774 = vld [vmem:[#allocation8 + $0x288] sm:$0xff]
          %v2775 = vld [vmem:[#allocation8 + $0x290] sm:$0xff]
          %v2776 = vld [vmem:[#allocation8 + $0x298] sm:$0xff]
          %v2777 = vld [vmem:[#allocation8 + $0x2a0] sm:$0xff]
          %v2778 = vld [vmem:[#allocation8 + $0x2a8] sm:$0xff]
          %v2779 = vld [vmem:[#allocation8 + $0x2b0] sm:$0xff]
          %v2780 = vld [vmem:[#allocation8 + $0x2b8] sm:$0xff]
          %v2781 = vld [vmem:[#allocation8 + $0x2c0] sm:$0xff]
          %v2782 = vld [vmem:[#allocation8 + $0x2c8] sm:$0xff]
          %v2783 = vld [vmem:[#allocation8 + $0x2d0] sm:$0xff]
          %v2784 = vld [vmem:[#allocation8 + $0x2d8] sm:$0xff]
          %v2785 = vld [vmem:[#allocation8 + $0x2e0] sm:$0xff]
          %v2786 = vld [vmem:[#allocation8 + $0x2e8] sm:$0xff]
          %v2787 = vld [vmem:[#allocation8 + $0x2f0] sm:$0xff]
          %v2788 = vld [vmem:[#allocation8 + $0x2f8] sm:$0xff]
          %v2789 = vld [vmem:[#allocation8 + $0x300] sm:$0xf]
          %v2790 = vld [vmem:[#allocation8 + $0x308] sm:$0xf]
          %v2791 = vld [vmem:[#allocation8 + $0x310] sm:$0xf]
          %v2792 = vld [vmem:[#allocation8 + $0x318] sm:$0xf]
          %v2793 = vld [vmem:[#allocation8 + $0x320] sm:$0xf]
          %v2794 = vld [vmem:[#allocation8 + $0x328] sm:$0xf]
          %v2795 = vld [vmem:[#allocation8 + $0x330] sm:$0xf]
          %v2796 = vld [vmem:[#allocation8 + $0x338] sm:$0xf]
          %v2797 = vld [vmem:[#allocation9] sm:$0x1]
          %v2799 = vlaneseq
          %v2800 = vshrl.u32 %v2799, 7
          %v2801 = vsub.s32 0, %v2800
          %v2802 = vrot.slane %v2797, %v2801
          %v2806 = vcombine.high %v2691, %v2691
          %v2808 = vunpack.c.l.s4 1983009808
          %v2809 = vunpack.c.0.s8 %v2808
          %v2810 = vlaneseq
          %v2811 = vshrl.u32 %v2810, 7
          %v2812 = vsub.s32 %v2809, %v2811
          %v2813 = vrot.slane %v2691, %v2812
          %v2815 = vunpack.c.l.s4 1983009808
          %v2816 = vunpack.c.0.s8 %v2815
          %v2817 = vlaneseq
          %v2818 = vshrl.u32 %v2817, 7
          %v2819 = vsub.s32 %v2816, %v2818
          %v2820 = vrot.slane %v2806, %v2819
          %v2821 = vcombine.high %v2813, %v2813
          %v2822 = vcombine.high %v2820, %v2820
          %v2823 = vcombine.high %v2692, %v2692
          %v2825 = vunpack.c.l.s4 1983009808
          %v2826 = vunpack.c.0.s8 %v2825
          %v2827 = vlaneseq
          %v2828 = vshrl.u32 %v2827, 7
          %v2829 = vsub.s32 %v2826, %v2828
          %v2830 = vrot.slane %v2692, %v2829
          %v2832 = vunpack.c.l.s4 1983009808
          %v2833 = vunpack.c.0.s8 %v2832
          %v2834 = vlaneseq
          %v2835 = vshrl.u32 %v2834, 7
          %v2836 = vsub.s32 %v2833, %v2835
          %v2837 = vrot.slane %v2823, %v2836
          %v2838 = vcombine.high %v2830, %v2830
          %v2839 = vcombine.high %v2837, %v2837
          %vm2847 = vcmask 850944
          %v2848 = vsel %vm2847, %v2839, 0
          %v2851 = vsel %vm2847, %v2700, 0
          %v2854 = vsel %vm2847, %v2708, 0
          %v2857 = vsel %vm2847, %v2716, 0
          %v2860 = vsel %vm2847, %v2724, 0
          %v2863 = vsel %vm2847, %v2732, 0
          %v2866 = vsel %vm2847, %v2740, 0
          %v2869 = vsel %vm2847, %v2748, 0
          %v2872 = vsel %vm2847, %v2756, 0
          %v2875 = vsel %vm2847, %v2764, 0
          %v2878 = vsel %vm2847, %v2772, 0
          %v2881 = vsel %vm2847, %v2780, 0
          %v2884 = vsel %vm2847, %v2788, 0
          %v2887 = vsel %vm2847, %v2796, 0
          %2889 = vmatprep.subr.mxu0 %v2694
          %2890 = vmatpush1.xpose.msra.mxu0 %v2693
          %2891 = vmatprep.subr.mxu0 %v2702
          %2892 = vmatpush1.xpose.msra.mxu0 %v2701
          %2893 = vmatprep.subr.mxu0 %v2710
          %2894 = vmatpush1.xpose.msra.mxu0 %v2709
          %2895 = vmatprep.subr.mxu0 %v2718
          %2896 = vmatpush1.xpose.msra.mxu0 %v2717
          %2897 = vmatprep.subr.mxu0 %v2726
          %2898 = vmatpush1.xpose.msra.mxu0 %v2725
          %2899 = vmatprep.subr.mxu0 %v2734
          %2900 = vmatpush1.xpose.msra.mxu0 %v2733
          %2901 = vmatprep.subr.mxu0 %v2742
          %2902 = vmatpush1.xpose.msra.mxu0 %v2741
          %2903 = vmatprep.subr.mxu0 %v2750
          %2904 = vmatpush1.xpose.msra.mxu0 %v2749
          %2905 = vmatprep.subr.mxu0 %v2758
          %2906 = vmatpush1.xpose.msra.mxu0 %v2757
          %2907 = vmatprep.subr.mxu0 %v2766
          %2908 = vmatpush1.xpose.msra.mxu0 %v2765
          %2909 = vmatprep.subr.mxu0 %v2774
          %2910 = vmatpush1.xpose.msra.mxu0 %v2773
          %2911 = vmatprep.subr.mxu0 %v2782
          %2912 = vmatpush1.xpose.msra.mxu0 %v2781
          %2913 = vmatprep.subr.mxu0 %v2790
          %2914 = vmatpush1.xpose.msra.mxu0 %v2789
          %2915 = vmatprep.subr.mxu0 0.0
          %2916 = vmatpush1.xpose.msra.mxu0 0.0
          %2917 = vmatprep.subr.mxu0 0.0
          %2918 = vmatpush1.xpose.msra.mxu0 0.0
          %2919 = vmatprep.subr.mxu0 0.0
          %2920 = vmatpush1.xpose.msra.mxu0 0.0
          %2921 = vmatprep.subr.mxu0 0.0
          %2922 = vmatpush1.xpose.msra.mxu0 0.0
          %2923 = vmatprep.subr.mxu0 0.0
          %2924 = vmatpush1.xpose.msra.mxu0 0.0
          %2925 = vmatprep.subr.mxu0 0.0
          %2926 = vmatpush1.xpose.msra.mxu0 0.0
          %2927 = vmatprep.subr.mxu0 0.0
          %2928 = vmatpush1.xpose.msra.mxu0 0.0
          %2929 = vmatprep.subr.mxu0 0.0
          %2930 = vmatpush1.xpose.msra.mxu0 0.0
          %2931 = vmatprep.subr.mxu0 0.0
          %2932 = vmatpush1.xpose.msra.mxu0 0.0
          %2933 = vmatprep.subr.mxu0 0.0
          %2934 = vmatpush1.xpose.msra.mxu0 0.0
          %2935 = vmatprep.subr.mxu0 0.0
          %2936 = vmatpush1.xpose.msra.mxu0 0.0
          %2937 = vmatprep.subr.mxu0 0.0
          %2938 = vmatpush1.xpose.msra.mxu0 0.0
          %2939 = vmatprep.subr.mxu0 0.0
          %2940 = vmatpush1.xpose.msra.mxu0 0.0
          %2941 = vmatprep.subr.mxu0 0.0
          %2942 = vmatpush1.xpose.msra.mxu0 0.0
          %2943 = vmatprep.subr.mxu0 0.0
          %2944 = vmatpush1.xpose.msra.mxu0 0.0
          %2945 = vmatprep.subr.mxu0 0.0
          %2946 = vmatpush1.xpose.msra.mxu0 0.0
          %2947 = vmatprep.subr.mxu0 0.0
          %2948 = vmatpush1.xpose.msra.mxu0 0.0
          %2949 = vmatprep.subr.mxu0 0.0
          %2950 = vmatpush1.xpose.msra.mxu0 0.0
          %2951 = vmatprep.subr.mxu0 0.0
          %2952 = vmatpush1.xpose.msra.mxu0 0.0
          %2953 = vmatprep.mubr.f32.mxu0 %v2821
          %2954 = vmatmul.mubr.f32.gmra.mrb[0].mxu0 %v2813
          %v2955 = vpop.f32.mrb[0].mxu0
          %v2956 = vadd.f32 %v2802, %v2955
          %v2957 = vpop.f32.mrb[0].mxu0
          %2958 = vdwg.mxu0
          %2959 = vmatprep.subr.mxu0 %v2696
          %2960 = vmatpush1.xpose.msra.mxu0 %v2695
          %2961 = vmatprep.subr.mxu0 %v2704
          %2962 = vmatpush1.xpose.msra.mxu0 %v2703
          %2963 = vmatprep.subr.mxu0 %v2712
          %2964 = vmatpush1.xpose.msra.mxu0 %v2711
          %2965 = vmatprep.subr.mxu0 %v2720
          %2966 = vmatpush1.xpose.msra.mxu0 %v2719
          %2967 = vmatprep.subr.mxu0 %v2728
          %2968 = vmatpush1.xpose.msra.mxu0 %v2727
          %2969 = vmatprep.subr.mxu0 %v2736
          %2970 = vmatpush1.xpose.msra.mxu0 %v2735
          %2971 = vmatprep.subr.mxu0 %v2744
          %2972 = vmatpush1.xpose.msra.mxu0 %v2743
          %2973 = vmatprep.subr.mxu0 %v2752
          %2974 = vmatpush1.xpose.msra.mxu0 %v2751
          %2975 = vmatprep.subr.mxu0 %v2760
          %2976 = vmatpush1.xpose.msra.mxu0 %v2759
          %2977 = vmatprep.subr.mxu0 %v2768
          %2978 = vmatpush1.xpose.msra.mxu0 %v2767
          %2979 = vmatprep.subr.mxu0 %v2776
          %2980 = vmatpush1.xpose.msra.mxu0 %v2775
          %2981 = vmatprep.subr.mxu0 %v2784
          %2982 = vmatpush1.xpose.msra.mxu0 %v2783
          %2983 = vmatprep.subr.mxu0 %v2792
          %2984 = vmatpush1.xpose.msra.mxu0 %v2791
          %2985 = vmatprep.subr.mxu0 0.0
          %2986 = vmatpush1.xpose.msra.mxu0 0.0
          %2987 = vmatprep.subr.mxu0 0.0
          %2988 = vmatpush1.xpose.msra.mxu0 0.0
          %2989 = vmatprep.subr.mxu0 0.0
          %2990 = vmatpush1.xpose.msra.mxu0 0.0
          %2991 = vmatprep.subr.mxu0 0.0
          %2992 = vmatpush1.xpose.msra.mxu0 0.0
          %2993 = vmatprep.subr.mxu0 0.0
          %2994 = vmatpush1.xpose.msra.mxu0 0.0
          %2995 = vmatprep.subr.mxu0 0.0
          %2996 = vmatpush1.xpose.msra.mxu0 0.0
          %2997 = vmatprep.subr.mxu0 0.0
          %2998 = vmatpush1.xpose.msra.mxu0 0.0
          %2999 = vmatprep.subr.mxu0 0.0
          %3000 = vmatpush1.xpose.msra.mxu0 0.0
          %3001 = vmatprep.subr.mxu0 0.0
          %3002 = vmatpush1.xpose.msra.mxu0 0.0
          %3003 = vmatprep.subr.mxu0 0.0
          %3004 = vmatpush1.xpose.msra.mxu0 0.0
          %3005 = vmatprep.subr.mxu0 0.0
          %3006 = vmatpush1.xpose.msra.mxu0 0.0
          %3007 = vmatprep.subr.mxu0 0.0
          %3008 = vmatpush1.xpose.msra.mxu0 0.0
          %3009 = vmatprep.subr.mxu0 0.0
          %3010 = vmatpush1.xpose.msra.mxu0 0.0
          %3011 = vmatprep.subr.mxu0 0.0
          %3012 = vmatpush1.xpose.msra.mxu0 0.0
          %3013 = vmatprep.subr.mxu0 0.0
          %3014 = vmatpush1.xpose.msra.mxu0 0.0
          %3015 = vmatprep.subr.mxu0 0.0
          %3016 = vmatpush1.xpose.msra.mxu0 0.0
          %3017 = vmatprep.subr.mxu0 0.0
          %3018 = vmatpush1.xpose.msra.mxu0 0.0
          %3019 = vmatprep.subr.mxu0 0.0
          %3020 = vmatpush1.xpose.msra.mxu0 0.0
          %3021 = vmatprep.subr.mxu0 0.0
          %3022 = vmatpush1.xpose.msra.mxu0 0.0
          %3023 = vmatprep.mubr.f32.mxu0 %v2822
          %3024 = vmatmul.mubr.f32.gmra.mrb[0].mxu0 %v2820
          %v3025 = vpop.f32.mrb[0].mxu0
          %v3026 = vadd.f32 %v2956, %v3025
          %v3027 = vpop.f32.mrb[0].mxu0
          %3028 = vdwg.mxu0
          %3029 = vmatprep.subr.mxu0 %v2698
          %3030 = vmatpush1.xpose.msra.mxu0 %v2697
          %3031 = vmatprep.subr.mxu0 %v2706
          %3032 = vmatpush1.xpose.msra.mxu0 %v2705
          %3033 = vmatprep.subr.mxu0 %v2714
          %3034 = vmatpush1.xpose.msra.mxu0 %v2713
          %3035 = vmatprep.subr.mxu0 %v2722
          %3036 = vmatpush1.xpose.msra.mxu0 %v2721
          %3037 = vmatprep.subr.mxu0 %v2730
          %3038 = vmatpush1.xpose.msra.mxu0 %v2729
          %3039 = vmatprep.subr.mxu0 %v2738
          %3040 = vmatpush1.xpose.msra.mxu0 %v2737
          %3041 = vmatprep.subr.mxu0 %v2746
          %3042 = vmatpush1.xpose.msra.mxu0 %v2745
          %3043 = vmatprep.subr.mxu0 %v2754
          %3044 = vmatpush1.xpose.msra.mxu0 %v2753
          %3045 = vmatprep.subr.mxu0 %v2762
          %3046 = vmatpush1.xpose.msra.mxu0 %v2761
          %3047 = vmatprep.subr.mxu0 %v2770
          %3048 = vmatpush1.xpose.msra.mxu0 %v2769
          %3049 = vmatprep.subr.mxu0 %v2778
          %3050 = vmatpush1.xpose.msra.mxu0 %v2777
          %3051 = vmatprep.subr.mxu0 %v2786
          %3052 = vmatpush1.xpose.msra.mxu0 %v2785
          %3053 = vmatprep.subr.mxu0 %v2794
          %3054 = vmatpush1.xpose.msra.mxu0 %v2793
          %3055 = vmatprep.subr.mxu0 0.0
          %3056 = vmatpush1.xpose.msra.mxu0 0.0
          %3057 = vmatprep.subr.mxu0 0.0
          %3058 = vmatpush1.xpose.msra.mxu0 0.0
          %3059 = vmatprep.subr.mxu0 0.0
          %3060 = vmatpush1.xpose.msra.mxu0 0.0
          %3061 = vmatprep.subr.mxu0 0.0
          %3062 = vmatpush1.xpose.msra.mxu0 0.0
          %3063 = vmatprep.subr.mxu0 0.0
          %3064 = vmatpush1.xpose.msra.mxu0 0.0
          %3065 = vmatprep.subr.mxu0 0.0
          %3066 = vmatpush1.xpose.msra.mxu0 0.0
          %3067 = vmatprep.subr.mxu0 0.0
          %3068 = vmatpush1.xpose.msra.mxu0 0.0
          %3069 = vmatprep.subr.mxu0 0.0
          %3070 = vmatpush1.xpose.msra.mxu0 0.0
          %3071 = vmatprep.subr.mxu0 0.0
          %3072 = vmatpush1.xpose.msra.mxu0 0.0
          %3073 = vmatprep.subr.mxu0 0.0
          %3074 = vmatpush1.xpose.msra.mxu0 0.0
          %3075 = vmatprep.subr.mxu0 0.0
          %3076 = vmatpush1.xpose.msra.mxu0 0.0
          %3077 = vmatprep.subr.mxu0 0.0
          %3078 = vmatpush1.xpose.msra.mxu0 0.0
          %3079 = vmatprep.subr.mxu0 0.0
          %3080 = vmatpush1.xpose.msra.mxu0 0.0
          %3081 = vmatprep.subr.mxu0 0.0
          %3082 = vmatpush1.xpose.msra.mxu0 0.0
          %3083 = vmatprep.subr.mxu0 0.0
          %3084 = vmatpush1.xpose.msra.mxu0 0.0
          %3085 = vmatprep.subr.mxu0 0.0
          %3086 = vmatpush1.xpose.msra.mxu0 0.0
          %3087 = vmatprep.subr.mxu0 0.0
          %3088 = vmatpush1.xpose.msra.mxu0 0.0
          %3089 = vmatprep.subr.mxu0 0.0
          %3090 = vmatpush1.xpose.msra.mxu0 0.0
          %3091 = vmatprep.subr.mxu0 0.0
          %3092 = vmatpush1.xpose.msra.mxu0 0.0
          %3093 = vmatprep.mubr.f32.mxu0 %v2838
          %3094 = vmatmul.mubr.f32.gmra.mrb[0].mxu0 %v2830
          %v3095 = vpop.f32.mrb[0].mxu0
          %v3096 = vadd.f32 %v3026, %v3095
          %v3097 = vpop.f32.mrb[0].mxu0
          %3098 = vdwg.mxu0
          %3099 = vmatprep.subr.mxu0 %v2851
          %3100 = vmatpush1.xpose.msra.mxu0 %v2699
          %3101 = vmatprep.subr.mxu0 %v2854
          %3102 = vmatpush1.xpose.msra.mxu0 %v2707
          %3103 = vmatprep.subr.mxu0 %v2857
          %3104 = vmatpush1.xpose.msra.mxu0 %v2715
          %3105 = vmatprep.subr.mxu0 %v2860
          %3106 = vmatpush1.xpose.msra.mxu0 %v2723
          %3107 = vmatprep.subr.mxu0 %v2863
          %3108 = vmatpush1.xpose.msra.mxu0 %v2731
          %3109 = vmatprep.subr.mxu0 %v2866
          %3110 = vmatpush1.xpose.msra.mxu0 %v2739
          %3111 = vmatprep.subr.mxu0 %v2869
          %3112 = vmatpush1.xpose.msra.mxu0 %v2747
          %3113 = vmatprep.subr.mxu0 %v2872
          %3114 = vmatpush1.xpose.msra.mxu0 %v2755
          %3115 = vmatprep.subr.mxu0 %v2875
          %3116 = vmatpush1.xpose.msra.mxu0 %v2763
          %3117 = vmatprep.subr.mxu0 %v2878
          %3118 = vmatpush1.xpose.msra.mxu0 %v2771
          %3119 = vmatprep.subr.mxu0 %v2881
          %3120 = vmatpush1.xpose.msra.mxu0 %v2779
          %3121 = vmatprep.subr.mxu0 %v2884
          %3122 = vmatpush1.xpose.msra.mxu0 %v2787
          %3123 = vmatprep.subr.mxu0 %v2887
          %3124 = vmatpush1.xpose.msra.mxu0 %v2795
          %3125 = vmatprep.subr.mxu0 0.0
          %3126 = vmatpush1.xpose.msra.mxu0 0.0
          %3127 = vmatprep.subr.mxu0 0.0
          %3128 = vmatpush1.xpose.msra.mxu0 0.0
          %3129 = vmatprep.subr.mxu0 0.0
          %3130 = vmatpush1.xpose.msra.mxu0 0.0
          %3131 = vmatprep.subr.mxu0 0.0
          %3132 = vmatpush1.xpose.msra.mxu0 0.0
          %3133 = vmatprep.subr.mxu0 0.0
          %3134 = vmatpush1.xpose.msra.mxu0 0.0
          %3135 = vmatprep.subr.mxu0 0.0
          %3136 = vmatpush1.xpose.msra.mxu0 0.0
          %3137 = vmatprep.subr.mxu0 0.0
          %3138 = vmatpush1.xpose.msra.mxu0 0.0
          %3139 = vmatprep.subr.mxu0 0.0
          %3140 = vmatpush1.xpose.msra.mxu0 0.0
          %3141 = vmatprep.subr.mxu0 0.0
          %3142 = vmatpush1.xpose.msra.mxu0 0.0
          %3143 = vmatprep.subr.mxu0 0.0
          %3144 = vmatpush1.xpose.msra.mxu0 0.0
          %3145 = vmatprep.subr.mxu0 0.0
          %3146 = vmatpush1.xpose.msra.mxu0 0.0
          %3147 = vmatprep.subr.mxu0 0.0
          %3148 = vmatpush1.xpose.msra.mxu0 0.0
          %3149 = vmatprep.subr.mxu0 0.0
          %3150 = vmatpush1.xpose.msra.mxu0 0.0
          %3151 = vmatprep.subr.mxu0 0.0
          %3152 = vmatpush1.xpose.msra.mxu0 0.0
          %3153 = vmatprep.subr.mxu0 0.0
          %3154 = vmatpush1.xpose.msra.mxu0 0.0
          %3155 = vmatprep.subr.mxu0 0.0
          %3156 = vmatpush1.xpose.msra.mxu0 0.0
          %3157 = vmatprep.subr.mxu0 0.0
          %3158 = vmatpush1.xpose.msra.mxu0 0.0
          %3159 = vmatprep.subr.mxu0 0.0
          %3160 = vmatpush1.xpose.msra.mxu0 0.0
          %3161 = vmatprep.subr.mxu0 0.0
          %3162 = vmatpush1.xpose.msra.mxu0 0.0
          %3163 = vmatprep.mubr.f32.mxu0 %v2848
          %3164 = vmatmul.mubr.f32.gmra.mrb[0].mxu0 %v2837
          %v3165 = vpop.f32.mrb[0].mxu0
          %v3166 = vadd.f32 %v3096, %v3165
          %v3167 = vpop.f32.mrb[0].mxu0
          %3168 = vdwg.mxu0
          %v3169 = vmax.f32 %v3166, 0.0
          %v3170 = vld [vmem:[#allocation11] sm:$0x1]
          %v3172 = vlaneseq
          %v3173 = vshrl.u32 %v3172, 7
          %v3174 = vsub.s32 0, %v3173
          %v3175 = vrot.slane %v3170, %v3174
          %v3177 = vmul.f32 %v3169, %v3175
          %vm3178 = vcmask 812032
          %v3179 = vsel %vm3178, %v3177, 0.0
          %3180 = vadd.xlane.f32.xlu0 %v3179
          %v3181 = vpop.xlane.xlu0 %3180
          %v3182 = vld [vmem:[#allocation3] sm:$0x1]
          %v3184 = vlaneseq
          %v3185 = vshrl.u32 %v3184, 7
          %v3186 = vsub.s32 0, %v3185
          %v3187 = vrot.slane %v3182, %v3186
          %v3189 = vadd.f32 %v3181, %v3187
          %vm3190 = vcmask 1024
          %3191 = vst.msk [vmem:[%s7] sm:$0x3] %vm3190, %v3189
        $region76: #{gram_discriminator_forward.3} parent=47 // pred_fallthru
          _
        // Predicated region
        $region77: #{gram_discriminator_forward.3} parent=47 // pred_check
          %p3192 = pneg %p195
        $region78: #{gram_discriminator_forward.3} parent=47 // pred_check_branch
          %3194 = sbr.rel (%p3192) target = $region80
        $region79: #{gram_discriminator_forward.3} parent=47 // pred_region
          _
        $region80: #{gram_discriminator_forward.3} parent=47 // pred_fallthru
          _
        // Predicated region
        $region81: #{gram_discriminator_forward.3} parent=47 // pred_check
          %p3195 = pneg %p195
        $region82: #{gram_discriminator_forward.3} parent=47 // pred_check_branch
          %3197 = sbr.rel (%p3195) target = $region84
        $region83: #{gram_discriminator_forward.3} parent=47 // pred_region
          _
        $region84: #{gram_discriminator_forward.3} parent=47 // pred_fallthru
          _
      $region48: #{gram_discriminator_forward.3} parent=5 // pred_fallthru
        _
      %p3198 = scmp.le.s32.totalorder 2, %s20
      // Predicated region
      $region85: #{gram_discriminator_forward.3} parent=5 // pred_check
        %p3199 = pneg %p3198
      $region86: #{gram_discriminator_forward.3} parent=5 // pred_check_branch
        %3201 = sbr.rel (%p3199) target = $region88
      $region87: #{gram_discriminator_forward.3} parent=5 // pred_region
        %s3202 = ssub.s32 %s20, 2
      $region88: #{gram_discriminator_forward.3} parent=5 // pred_fallthru
        _
    $region6: #{gram_discriminator_forward.3} parent=1 // loop_footer
      %s24 = sadd.s32 1, %s20
    $region7: #{gram_discriminator_forward.3} parent=1 // loop_footer_branch
      %19 = sbr.rel target = $region3
    $region8: #{gram_discriminator_forward.3} parent=1 // loop_exit
      _
    %3203 = vsyncpa [#allocation5], 1
    %s3204 = scalar_lea.sflag [#allocation5], 1
    %3205 = vsyncpa %s3204, 1
    %3206 = vsyncpa [#allocation7], 1
    %3207 = vsyncpa [#allocation10], 1

</llo_original>
